<compile_context>
chip_gen: v5e
topology: v5e:2x2
jax: 0.10.0
libtpu: 0.0.40
codegen_flags: <defaults>
</compile_context>

<pallas_src>
import math

import jax
import jax.numpy as jnp
from jax import lax
from jax.experimental import pallas as pl
from jax.experimental.pallas import tpu as pltpu

# Shapes fixed by the module definition (bias_Y is (96,90), bias_P is (96,80),
# weight_Y is (90,90), J_tr_de_P = J_tr_en[:, 90:170]).
T = 96             # time steps (rows)
D_IN = 170         # M_nn_input
D_Y = 90           # M_nn_output ("Y" width)
D_P = 80           # "P" width (columns 90:170)
HIDDEN = (64, 64)  # M_nn_hidden (small synthetic choice); M_linear = 0 (ReLU)
LANE = 128         # lane-dense padding target
GROUP = 8          # rows per aligned (8,128) store / u load

_VMEM = pl.BlockSpec(memory_space=pltpu.MemorySpace.VMEM)


def _pad2(a, rows, cols, dtype=jnp.float32):
    r, c = a.shape
    return jnp.pad(a, ((0, rows - r), (0, cols - c))).astype(dtype)


def _row_pad(v, cols):
    v = jnp.asarray(v, jnp.float32).reshape(1, -1)
    return jnp.pad(v, ((0, 0), (0, cols - v.shape[1])))


# ----------------------------------------------------------------------------
# Fused kernel: recurrent MLP + objective.
# ----------------------------------------------------------------------------
def make_fused_kernel(n_mats, Tn):
    assert Tn % (2 * GROUP) == 0, "row count must be a multiple of 16"
    n_groups = Tn // GROUP
    f32 = jnp.float32
    bf16 = jnp.bfloat16

    def kernel(*refs):
        it = iter(refs)
        # ---- inputs -------------------------------------------------------
        y0_ref = next(it)            # (1, LANE)    f32  initial Y state (padded)
        p_rec_ref = next(it)         # (Tn, LANE)   bf16 shifted exogenous rows
        p_obj_ref = next(it)         # (Tn, LANE)   f32  unshifted P (for objective)
        w1y_ref = next(it)           # (LANE, LANE) bf16 layer-0 weight, recurrent rows
        w1p_ref = next(it)           # (LANE, LANE) bf16 layer-0 weight, exogenous rows
        w_rest = [next(it) for _ in range(n_mats - 1)]   # (LANE, LANE) bf16 each
        b_refs = [next(it) for _ in range(n_mats)]       # (1, LANE) f32 each
        dwY_ref = next(it); bY_ref = next(it)            # (1, LANE)
        dwP_ref = next(it); bP_ref = next(it)            # (1, LANE)
        dowYu_ref = next(it); dowYl_ref = next(it)       # (1, LANE)
        dowPu_ref = next(it); dowPl_ref = next(it)       # (1, LANE)
        dsumY_ref = next(it); dsumP_ref = next(it)       # (1, LANE)
        price_ref = next(it)                             # (Tn, LANE)
        uppY_ref = next(it); lowY_ref = next(it)         # (Tn, LANE)
        uppP_ref = next(it); lowP_ref = next(it)         # (Tn, LANE)
        # ---- outputs (lane-dense, sliced in the wrapper) -------------------
        oYu_ref = next(it); oYl_ref = next(it)           # (Tn, LANE)
        oP1_ref = next(it); oPu_ref = next(it); oPl_ref = next(it)  # (Tn, LANE)
        # ---- scratch ------------------------------------------------------
        y_scr = next(it)             # (Tn, LANE)  recurrent outputs (lane-dense)
        u_scr = next(it)             # (Tn, LANE)  hoisted layer-0 contribution

        # Hoisted non-recurrent half of MLP layer 0 (+ bias): one batched MXU
        # matmul.  p_rec is shifted so u_scr[i] feeds the step writing Y row i.
        u_scr[...] = (jnp.dot(p_rec_ref[...], w1p_ref[...],
                              preferred_element_type=f32) + b_refs[0][...])

        # P-side objective is independent of the recurrence: hoisted into the
        # prologue basic block so its VPU work hides under MXU-wait bubbles.
        # All weight matrices are diagonal BY CONSTRUCTION (asserted in
        # prepare_params), so the matmuls collapse to elementwise multiplies.
        P_hy = p_obj_ref[...] * dwP_ref[...] + bP_ref[...]
        oP1_ref[...] = P_hy * price_ref[...]
        oPu_ref[...] = (jnp.maximum(P_hy * dowPu_ref[...] - uppP_ref[...], 0.0)
                        * dsumP_ref[...])
        oPl_ref[...] = (jnp.maximum(P_hy * dowPl_ref[...] + lowP_ref[...], 0.0)
                        * dsumP_ref[...])

        def mlp_step(prev, u_row):
            # layer 0: recurrent half only; exogenous half (+bias) is u_row.
            h = jnp.dot(prev.astype(bf16), w1y_ref[...],
                        preferred_element_type=f32) + u_row
            if n_mats > 1:
                h = jnp.maximum(h, 0.0)          # M_linear == 0 -> ReLU
            for li in range(1, n_mats):
                h = jnp.dot(h.astype(bf16), w_rest[li - 1][...],
                            preferred_element_type=f32) + b_refs[li][...]
                if li < n_mats - 1:
                    h = jnp.maximum(h, 0.0)
            return h

        def run_group(row0, prev):
            # 8 steps producing Y rows row0..row0+7: one aligned (8,128) u
            # load, one aligned unmasked (8,128) store.
            u_tile = u_scr[pl.ds(row0, GROUP), :]
            rows = []
            for k in range(GROUP):
                prev = mlp_step(prev, u_tile[k:k + 1, :])
                rows.append(prev)
            y_scr[pl.ds(row0, GROUP), :] = jnp.concatenate(rows, axis=0)
            return prev

        # ---- group 0: row 0 = initial state, rows 1..7 = first 7 steps -----
        prev = y0_ref[...]
        u_tile0 = u_scr[0:GROUP, :]
        rows0 = [prev]
        for k in range(1, GROUP):
            prev = mlp_step(prev, u_tile0[k:k + 1, :])
            rows0.append(prev)
        y_scr[0:GROUP, :] = jnp.concatenate(rows0, axis=0)

        # ---- group 1 stays in the prologue basic block (deeper unroll) -----
        prev = run_group(GROUP, prev)

        # ---- groups 2..n_groups-1: two groups (16 steps) per fori body -----
        def body(t, prev):
            base = pl.multiple_of((t + 1) * (2 * GROUP), 2 * GROUP)
            prev = run_group(base, prev)
            prev = run_group(base + GROUP, prev)
            return prev

        _ = lax.fori_loop(0, (n_groups - 2) // 2, body, prev)

        # ---- Y-side objective: lane-dense VPU elementwise epilogue ---------
        Y_hy = y_scr[...] * dwY_ref[...] + bY_ref[...]
        oYu_ref[...] = (jnp.maximum(Y_hy * dowYu_ref[...] - uppY_ref[...], 0.0)
                        * dsumY_ref[...])
        oYl_ref[...] = (jnp.maximum(Y_hy * dowYl_ref[...] + lowY_ref[...], 0.0)
                        * dsumY_ref[...])

    return kernel


# ----------------------------------------------------------------------------
# One-time parameter preprocessing (with structural asserts).
# ----------------------------------------------------------------------------
def _assert_diag(name, W):
    off = float(jnp.max(jnp.abs(W - jnp.diag(jnp.diagonal(W)))))
    if off != 0.0:
        raise ValueError(f"{name} is not diagonal (max off-diag {off}); "
                         "dense-matmul fallback required")


def _assert_row_const(name, B):
    dev = float(jnp.max(jnp.abs(B - B[0:1, :])))
    if dev != 0.0:
        raise ValueError(f"{name} rows are not identical; dense fallback required")


def prepare_params(params):
    """Pad MLP weights to 128 lanes (bf16) and extract diagonals / bias rows."""
    for nm in ("weight_Y", "weight_P", "obj_weight_Y_upp", "obj_weight_Y_low",
               "obj_weight_P_upp", "obj_weight_P_low",
               "sum_Y_weight", "sum_P_weight"):
        _assert_diag(nm, params[nm])
    _assert_row_const("bias_Y", params["bias_Y"])
    _assert_row_const("bias_P", params["bias_P"])

    mlp_w, mlp_b = params["mlp_w"], params["mlp_b"]
    w1 = mlp_w[0]
    return dict(
        n_mats=len(mlp_w),
        w1y=_pad2(w1[:D_Y, :], LANE, LANE, jnp.bfloat16),   # recurrent rows of layer 0
        w1p=_pad2(w1[D_Y:, :], LANE, LANE, jnp.bfloat16),   # exogenous rows of layer 0
        w_rest=[_pad2(w, LANE, LANE, jnp.bfloat16) for w in mlp_w[1:]],
        b_pad=[_row_pad(b, LANE) for b in mlp_b],
        dwY=_row_pad(jnp.diagonal(params["weight_Y"]), LANE),
        bY=_row_pad(params["bias_Y"][0], LANE),
        dwP=_row_pad(jnp.diagonal(params["weight_P"]), LANE),
        bP=_row_pad(params["bias_P"][0], LANE),
        dowYu=_row_pad(jnp.diagonal(params["obj_weight_Y_upp"]), LANE),
        dowYl=_row_pad(jnp.diagonal(params["obj_weight_Y_low"]), LANE),
        dowPu=_row_pad(jnp.diagonal(params["obj_weight_P_upp"]), LANE),
        dowPl=_row_pad(jnp.diagonal(params["obj_weight_P_low"]), LANE),
        dsumY=_row_pad(jnp.diagonal(params["sum_Y_weight"]), LANE),
        dsumP=_row_pad(jnp.diagonal(params["sum_P_weight"]), LANE),
    )


# ----------------------------------------------------------------------------
# Full forward (= Ori_NN_obj_layer.forward), single fused pallas_call.
# ----------------------------------------------------------------------------
def ori_nn_obj_layer_forward(prep, J_tr_en, P_price, Upp_Y, Low_Y, Upp_P, Low_P):
    J = J_tr_en.astype(jnp.float32)
    Tn = J.shape[0]
    n_mats = prep["n_mats"]

    def pad_cols(x, width=LANE):
        x = x.astype(jnp.float32)
        return jnp.pad(x, ((0, 0), (0, width - x.shape[1])))

    # Lane-dense (128-wide) packed inputs.
    y0_pad = jnp.zeros((1, LANE), jnp.float32).at[0, :D_Y].set(J[0, :D_Y])
    p = J[:, D_Y:D_IN]                                           # (Tn, 80)
    p_obj = pad_cols(p)                                          # unshifted (objective)
    p_rec = jnp.concatenate([jnp.zeros((1, D_P), jnp.float32), p[:-1]], axis=0)
    p_rec = pad_cols(p_rec).astype(jnp.bfloat16)                 # shifted (recurrence)

    inputs = (y0_pad, p_rec, p_obj, prep["w1y"], prep["w1p"],
              *prep["w_rest"], *prep["b_pad"],
              prep["dwY"], prep["bY"], prep["dwP"], prep["bP"],
              prep["dowYu"], prep["dowYl"], prep["dowPu"], prep["dowPl"],
              prep["dsumY"], prep["dsumP"],
              pad_cols(P_price), pad_cols(Upp_Y), pad_cols(Low_Y),
              pad_cols(Upp_P), pad_cols(Low_P))

    out_shapes = tuple(jax.ShapeDtypeStruct((Tn, LANE), jnp.float32)
                       for _ in range(5))

    outs = pl.pallas_call(
        make_fused_kernel(n_mats, Tn),
        out_shape=out_shapes,
        in_specs=[_VMEM] * len(inputs),
        out_specs=[_VMEM] * len(out_shapes),
        scratch_shapes=[pltpu.VMEM((Tn, LANE), jnp.float32),   # y_scr
                        pltpu.VMEM((Tn, LANE), jnp.float32)],  # u_scr
    )(*inputs)

    oYu, oYl, oP1, oPu, oPl = outs
    return (oYu[:, :D_Y], oYl[:, :D_Y],
            oP1[:, :D_P], oPu[:, :D_P], oPl[:, :D_P])


# ----------------------------------------------------------------------------
# Pure-JAX reference (mirrors the PyTorch module literally; full matrices).
# ----------------------------------------------------------------------------
def _hdot(a, b):
    return jnp.dot(a, b, precision=lax.Precision.HIGHEST,
                   preferred_element_type=jnp.float32)


def reference_forward(params, J_tr_en, P_price, Upp_Y, Low_Y, Upp_P, Low_P):
    J_tr_en = J_tr_en.astype(jnp.float32)
    u = J_tr_en[:-1]

    def mlp(x):
        h = x
        n = len(params["mlp_w"])
        for li in range(n):
            h = _hdot(h, params["mlp_w"][li]) + params["mlp_b"][li]
            if li < n - 1:
                h = jnp.maximum(h, 0.0)
        return h

    prev = u[0:1, :D_Y]
    rows = [prev]
    for j in range(u.shape[0]):
        inp = jnp.concatenate([prev, u[j:j + 1, D_Y:]], axis=1)
        prev = mlp(inp)
        rows.append(prev)
    Y = jnp.concatenate(rows, axis=0)                    # (T, 90)
    P = J_tr_en[:, D_Y:D_IN]                             # (T, 80)

    Y_hy = _hdot(Y, params["weight_Y"]) + params["bias_Y"]
    P_hy = _hdot(P, params["weight_P"]) + params["bias_P"]

    oYu = _hdot(jnp.maximum(_hdot(Y_hy, params["obj_weight_Y_upp"]) - Upp_Y, 0.0),
                params["sum_Y_weight"])
    oYl = _hdot(jnp.maximum(_hdot(Y_hy, params["obj_weight_Y_low"]) + Low_Y, 0.0),
                params["sum_Y_weight"])
    oP1 = P_hy * P_price
    oPu = _hdot(jnp.maximum(_hdot(P_hy, params["obj_weight_P_upp"]) - Upp_P, 0.0),
                params["sum_P_weight"])
    oPl = _hdot(jnp.maximum(_hdot(P_hy, params["obj_weight_P_low"]) + Low_P, 0.0),
                params["sum_P_weight"])
    return oYu, oYl, oP1, oPu, oPl


# ----------------------------------------------------------------------------
# Deterministic parameter construction (synthetic, mirrors __init__ shapes)
# ----------------------------------------------------------------------------
def make_params(key):
    dims = (D_IN,) + HIDDEN + (D_Y,)
    mlp_w, mlp_b = [], []
    for li in range(len(dims) - 1):
        key, kw, kb = jax.random.split(key, 3)
        bound = 1.0 / math.sqrt(dims[li])
        mlp_w.append(jax.random.uniform(kw, (dims[li], dims[li + 1]),
                                        jnp.float32, -bound, bound))
        mlp_b.append(jax.random.uniform(kb, (1, dims[li + 1]),
                                        jnp.float32, -bound, bound))

    SS_Y_min = jnp.linspace(0.0, 1.0, D_Y, dtype=jnp.float32)
    SS_Y_max = SS_Y_min + jnp.linspace(0.5, 1.5, D_Y, dtype=jnp.float32)
    SS_P_min = jnp.linspace(-0.5, 0.5, D_P, dtype=jnp.float32)
    SS_P_max = SS_P_min + jnp.linspace(1.0, 2.0, D_P, dtype=jnp.float32)
    wei_Y, wei_P = 0.7, 1.3

    params = dict(
        mlp_w=mlp_w, mlp_b=mlp_b,
        weight_Y=jnp.diag(SS_Y_max - SS_Y_min),
        bias_Y=jnp.broadcast_to(SS_Y_min, (T, D_Y)) + jnp.zeros((T, D_Y), jnp.float32),
        weight_P=jnp.diag(SS_P_max - SS_P_min),
        bias_P=jnp.broadcast_to(SS_P_min, (T, D_P)) + jnp.zeros((T, D_P), jnp.float32),
        obj_weight_Y_upp=wei_Y * jnp.eye(D_Y, dtype=jnp.float32),
        obj_weight_Y_low=-wei_Y * jnp.eye(D_Y, dtype=jnp.float32),
        obj_weight_P_upp=wei_P * jnp.eye(D_P, dtype=jnp.float32),
        obj_weight_P_low=-wei_P * jnp.eye(D_P, dtype=jnp.float32),
        sum_Y_weight=jnp.eye(D_Y, dtype=jnp.float32),
        sum_P_weight=jnp.eye(D_P, dtype=jnp.float32),
    )
    return params
    # (The unused nn.Linear modules linear_Y / linear_P / sum_Y / sum_P are not
    #  needed: the original forward() only uses the raw weight/bias tensors.)


if __name__ == "__main__":
    key = jax.random.PRNGKey(0)
    kp, k0, k1, k2, k3, k4, k5 = jax.random.split(key, 7)

    params = make_params(kp)
    prep = prepare_params(params)

    J_tr_en = jax.random.normal(k0, (T, D_IN), jnp.float32)
    P_price = jax.random.uniform(k1, (T, D_P), jnp.float32, 0.5, 1.5)
    Upp_Y = jax.random.normal(k2, (T, D_Y), jnp.float32) * 0.3 + 0.8
    Low_Y = jax.random.normal(k3, (T, D_Y), jnp.float32) * 0.3 - 0.8
    Upp_P = jax.random.normal(k4, (T, D_P), jnp.float32) * 0.3 + 0.8
    Low_P = jax.random.normal(k5, (T, D_P), jnp.float32) * 0.3 - 0.8

    outs = ori_nn_obj_layer_forward(prep, J_tr_en, P_price,
                                    Upp_Y, Low_Y, Upp_P, Low_P)
    outs = jax.block_until_ready(outs)

    refs = reference_forward(params, J_tr_en, P_price, Upp_Y, Low_Y, Upp_P, Low_P)
    names = ("Obj_Y_upp", "Obj_Y_low", "Obj_P_1", "Obj_P_2upp", "Obj_P_2low")
    for name, o, r in zip(names, outs, refs):
        assert o.shape == r.shape, (name, o.shape, r.shape)
        assert jnp.allclose(o, r, rtol=1e-2, atol=1e-2), name

    print("KERNEL_OK")
</pallas_src>

<mosaic_0001>
module attributes {stable_mosaic.version = 11 : i64} {
  func.func @kernel(%arg0: memref<1x128xf32, #tpu.memory_space<vmem>>, %arg1: memref<96x128xbf16, #tpu.memory_space<vmem>>, %arg2: memref<96x128xf32, #tpu.memory_space<vmem>>, %arg3: memref<128x128xbf16, #tpu.memory_space<vmem>>, %arg4: memref<128x128xbf16, #tpu.memory_space<vmem>>, %arg5: memref<128x128xbf16, #tpu.memory_space<vmem>>, %arg6: memref<128x128xbf16, #tpu.memory_space<vmem>>, %arg7: memref<1x128xf32, #tpu.memory_space<vmem>>, %arg8: memref<1x128xf32, #tpu.memory_space<vmem>>, %arg9: memref<1x128xf32, #tpu.memory_space<vmem>>, %arg10: memref<1x128xf32, #tpu.memory_space<vmem>>, %arg11: memref<1x128xf32, #tpu.memory_space<vmem>>, %arg12: memref<1x128xf32, #tpu.memory_space<vmem>>, %arg13: memref<1x128xf32, #tpu.memory_space<vmem>>, %arg14: memref<1x128xf32, #tpu.memory_space<vmem>>, %arg15: memref<1x128xf32, #tpu.memory_space<vmem>>, %arg16: memref<1x128xf32, #tpu.memory_space<vmem>>, %arg17: memref<1x128xf32, #tpu.memory_space<vmem>>, %arg18: memref<1x128xf32, #tpu.memory_space<vmem>>, %arg19: memref<1x128xf32, #tpu.memory_space<vmem>>, %arg20: memref<96x128xf32, #tpu.memory_space<vmem>>, %arg21: memref<96x128xf32, #tpu.memory_space<vmem>>, %arg22: memref<96x128xf32, #tpu.memory_space<vmem>>, %arg23: memref<96x128xf32, #tpu.memory_space<vmem>>, %arg24: memref<96x128xf32, #tpu.memory_space<vmem>>, %arg25: memref<96x128xf32, #tpu.memory_space<vmem>>, %arg26: memref<96x128xf32, #tpu.memory_space<vmem>>, %arg27: memref<96x128xf32, #tpu.memory_space<vmem>>, %arg28: memref<96x128xf32, #tpu.memory_space<vmem>>, %arg29: memref<96x128xf32, #tpu.memory_space<vmem>>, %arg30: memref<96x128xf32, #tpu.memory_space<vmem>>, %arg31: memref<96x128xf32, #tpu.memory_space<vmem>>) attributes {dimension_semantics = [], scalar_prefetch = 0 : i64, scratch_operands = 2 : i64, tpu.core_type = #tpu.core_type<tc>} {
    %c0 = arith.constant 0 : index
    %c0_0 = arith.constant 0 : index
    %0 = vector.load %arg1[%c0, %c0_0] : memref<96x128xbf16, #tpu.memory_space<vmem>>, vector<96x128xbf16>
    %c0_1 = arith.constant 0 : index
    %c0_2 = arith.constant 0 : index
    %1 = vector.load %arg4[%c0_1, %c0_2] : memref<128x128xbf16, #tpu.memory_space<vmem>>, vector<128x128xbf16>
    %cst = arith.constant dense<0.000000e+00> : vector<96x128xf32>
    %2 = tpu.matmul %0, %1, %cst {dimension_numbers = #tpu.dot_dimension_numbers<[1], [0], [0], [1], [0, 0, 1, 1], [], []>} : vector<96x128xbf16>, vector<128x128xbf16>, vector<96x128xf32> -> vector<96x128xf32>
    %c0_3 = arith.constant 0 : index
    %c0_4 = arith.constant 0 : index
    %3 = vector.load %arg7[%c0_3, %c0_4] : memref<1x128xf32, #tpu.memory_space<vmem>>, vector<1x128xf32>
    %4 = vector.broadcast %3 : vector<1x128xf32> to vector<96x128xf32>
    %5 = arith.addf %2, %4 : vector<96x128xf32>
    %c0_5 = arith.constant 0 : index
    %c0_6 = arith.constant 0 : index
    %6 = vector.load %arg31[%c0_5, %c0_6] : memref<96x128xf32, #tpu.memory_space<vmem>>, vector<96x128xf32>
    tpu.vector_store %arg31[%c0_5, %c0_6], %5 {strides = array<i32>} : memref<96x128xf32, #tpu.memory_space<vmem>>, vector<96x128xf32>,
    %c0_7 = arith.constant 0 : index
    %c0_8 = arith.constant 0 : index
    %7 = vector.load %arg2[%c0_7, %c0_8] : memref<96x128xf32, #tpu.memory_space<vmem>>, vector<96x128xf32>
    %c0_9 = arith.constant 0 : index
    %c0_10 = arith.constant 0 : index
    %8 = vector.load %arg12[%c0_9, %c0_10] : memref<1x128xf32, #tpu.memory_space<vmem>>, vector<1x128xf32>
    %9 = vector.broadcast %8 : vector<1x128xf32> to vector<96x128xf32>
    %10 = arith.mulf %7, %9 : vector<96x128xf32>
    %c0_11 = arith.constant 0 : index
    %c0_12 = arith.constant 0 : index
    %11 = vector.load %arg13[%c0_11, %c0_12] : memref<1x128xf32, #tpu.memory_space<vmem>>, vector<1x128xf32>
    %12 = vector.broadcast %11 : vector<1x128xf32> to vector<96x128xf32>
    %13 = arith.addf %10, %12 : vector<96x128xf32>
    %c0_13 = arith.constant 0 : index
    %c0_14 = arith.constant 0 : index
    %14 = vector.load %arg20[%c0_13, %c0_14] : memref<96x128xf32, #tpu.memory_space<vmem>>, vector<96x128xf32>
    %15 = arith.mulf %13, %14 : vector<96x128xf32>
    %c0_15 = arith.constant 0 : index
    %c0_16 = arith.constant 0 : index
    %16 = vector.load %arg27[%c0_15, %c0_16] : memref<96x128xf32, #tpu.memory_space<vmem>>, vector<96x128xf32>
    tpu.vector_store %arg27[%c0_15, %c0_16], %15 {strides = array<i32>} : memref<96x128xf32, #tpu.memory_space<vmem>>, vector<96x128xf32>,
    %c0_17 = arith.constant 0 : index
    %c0_18 = arith.constant 0 : index
    %17 = vector.load %arg16[%c0_17, %c0_18] : memref<1x128xf32, #tpu.memory_space<vmem>>, vector<1x128xf32>
    %18 = vector.broadcast %17 : vector<1x128xf32> to vector<96x128xf32>
    %19 = arith.mulf %13, %18 : vector<96x128xf32>
    %c0_19 = arith.constant 0 : index
    %c0_20 = arith.constant 0 : index
    %20 = vector.load %arg23[%c0_19, %c0_20] : memref<96x128xf32, #tpu.memory_space<vmem>>, vector<96x128xf32>
    %21 = arith.subf %19, %20 : vector<96x128xf32>
    %cst_21 = arith.constant 0.000000e+00 : f32
    %22 = vector.broadcast %cst_21 : f32 to vector<96x128xf32>
    %23 = arith.maximumf %21, %22 : vector<96x128xf32>
    %c0_22 = arith.constant 0 : index
    %c0_23 = arith.constant 0 : index
    %24 = vector.load %arg19[%c0_22, %c0_23] : memref<1x128xf32, #tpu.memory_space<vmem>>, vector<1x128xf32>
    %25 = vector.broadcast %24 : vector<1x128xf32> to vector<96x128xf32>
    %26 = arith.mulf %23, %25 : vector<96x128xf32>
    %c0_24 = arith.constant 0 : index
    %c0_25 = arith.constant 0 : index
    %27 = vector.load %arg28[%c0_24, %c0_25] : memref<96x128xf32, #tpu.memory_space<vmem>>, vector<96x128xf32>
    tpu.vector_store %arg28[%c0_24, %c0_25], %26 {strides = array<i32>} : memref<96x128xf32, #tpu.memory_space<vmem>>, vector<96x128xf32>,
    %c0_26 = arith.constant 0 : index
    %c0_27 = arith.constant 0 : index
    %28 = vector.load %arg17[%c0_26, %c0_27] : memref<1x128xf32, #tpu.memory_space<vmem>>, vector<1x128xf32>
    %29 = vector.broadcast %28 : vector<1x128xf32> to vector<96x128xf32>
    %30 = arith.mulf %13, %29 : vector<96x128xf32>
    %c0_28 = arith.constant 0 : index
    %c0_29 = arith.constant 0 : index
    %31 = vector.load %arg24[%c0_28, %c0_29] : memref<96x128xf32, #tpu.memory_space<vmem>>, vector<96x128xf32>
    %32 = arith.addf %30, %31 : vector<96x128xf32>
    %cst_30 = arith.constant 0.000000e+00 : f32
    %33 = vector.broadcast %cst_30 : f32 to vector<96x128xf32>
    %34 = arith.maximumf %32, %33 : vector<96x128xf32>
    %c0_31 = arith.constant 0 : index
    %c0_32 = arith.constant 0 : index
    %35 = vector.load %arg19[%c0_31, %c0_32] : memref<1x128xf32, #tpu.memory_space<vmem>>, vector<1x128xf32>
    %36 = vector.broadcast %35 : vector<1x128xf32> to vector<96x128xf32>
    %37 = arith.mulf %34, %36 : vector<96x128xf32>
    %c0_33 = arith.constant 0 : index
    %c0_34 = arith.constant 0 : index
    %38 = vector.load %arg29[%c0_33, %c0_34] : memref<96x128xf32, #tpu.memory_space<vmem>>, vector<96x128xf32>
    tpu.vector_store %arg29[%c0_33, %c0_34], %37 {strides = array<i32>} : memref<96x128xf32, #tpu.memory_space<vmem>>, vector<96x128xf32>,
    %c0_35 = arith.constant 0 : index
    %c0_36 = arith.constant 0 : index
    %39 = vector.load %arg0[%c0_35, %c0_36] : memref<1x128xf32, #tpu.memory_space<vmem>>, vector<1x128xf32>
    %c0_37 = arith.constant 0 : index
    %c0_38 = arith.constant 0 : index
    %40 = vector.load %arg31[%c0_37, %c0_38] : memref<96x128xf32, #tpu.memory_space<vmem>>, vector<8x128xf32>
    %41 = vector.extract_strided_slice %40 {offsets = [1, 0], sizes = [1, 128], strides = [1, 1]} : vector<8x128xf32> to vector<1x128xf32>
    %42 = arith.truncf %39 : vector<1x128xf32> to vector<1x128xbf16>
    %c0_39 = arith.constant 0 : index
    %c0_40 = arith.constant 0 : index
    %43 = vector.load %arg3[%c0_39, %c0_40] : memref<128x128xbf16, #tpu.memory_space<vmem>>, vector<128x128xbf16>
    %cst_41 = arith.constant dense<0.000000e+00> : vector<1x128xf32>
    %44 = tpu.matmul %42, %43, %cst_41 {dimension_numbers = #tpu.dot_dimension_numbers<[1], [0], [0], [1], [0, 0, 1, 1], [], []>} : vector<1x128xbf16>, vector<128x128xbf16>, vector<1x128xf32> -> vector<1x128xf32>
    %45 = arith.addf %44, %41 : vector<1x128xf32>
    %cst_42 = arith.constant 0.000000e+00 : f32
    %46 = vector.broadcast %cst_42 : f32 to vector<1x128xf32>
    %47 = arith.maximumf %45, %46 : vector<1x128xf32>
    %48 = arith.truncf %47 : vector<1x128xf32> to vector<1x128xbf16>
    %c0_43 = arith.constant 0 : index
    %c0_44 = arith.constant 0 : index
    %49 = vector.load %arg5[%c0_43, %c0_44] : memref<128x128xbf16, #tpu.memory_space<vmem>>, vector<128x128xbf16>
    %cst_45 = arith.constant dense<0.000000e+00> : vector<1x128xf32>
    %50 = tpu.matmul %48, %49, %cst_45 {dimension_numbers = #tpu.dot_dimension_numbers<[1], [0], [0], [1], [0, 0, 1, 1], [], []>} : vector<1x128xbf16>, vector<128x128xbf16>, vector<1x128xf32> -> vector<1x128xf32>
    %c0_46 = arith.constant 0 : index
    %c0_47 = arith.constant 0 : index
    %51 = vector.load %arg8[%c0_46, %c0_47] : memref<1x128xf32, #tpu.memory_space<vmem>>, vector<1x128xf32>
    %52 = arith.addf %50, %51 : vector<1x128xf32>
    %cst_48 = arith.constant 0.000000e+00 : f32
    %53 = vector.broadcast %cst_48 : f32 to vector<1x128xf32>
    %54 = arith.maximumf %52, %53 : vector<1x128xf32>
    %55 = arith.truncf %54 : vector<1x128xf32> to vector<1x128xbf16>
    %c0_49 = arith.constant 0 : index
    %c0_50 = arith.constant 0 : index
    %56 = vector.load %arg6[%c0_49, %c0_50] : memref<128x128xbf16, #tpu.memory_space<vmem>>, vector<128x128xbf16>
    %cst_51 = arith.constant dense<0.000000e+00> : vector<1x128xf32>
    %57 = tpu.matmul %55, %56, %cst_51 {dimension_numbers = #tpu.dot_dimension_numbers<[1], [0], [0], [1], [0, 0, 1, 1], [], []>} : vector<1x128xbf16>, vector<128x128xbf16>, vector<1x128xf32> -> vector<1x128xf32>
    %c0_52 = arith.constant 0 : index
    %c0_53 = arith.constant 0 : index
    %58 = vector.load %arg9[%c0_52, %c0_53] : memref<1x128xf32, #tpu.memory_space<vmem>>, vector<1x128xf32>
    %59 = arith.addf %57, %58 : vector<1x128xf32>
    %60 = vector.extract_strided_slice %40 {offsets = [2, 0], sizes = [1, 128], strides = [1, 1]} : vector<8x128xf32> to vector<1x128xf32>
    %61 = arith.truncf %59 : vector<1x128xf32> to vector<1x128xbf16>
    %c0_54 = arith.constant 0 : index
    %c0_55 = arith.constant 0 : index
    %62 = vector.load %arg3[%c0_54, %c0_55] : memref<128x128xbf16, #tpu.memory_space<vmem>>, vector<128x128xbf16>
    %cst_56 = arith.constant dense<0.000000e+00> : vector<1x128xf32>
    %63 = tpu.matmul %61, %62, %cst_56 {dimension_numbers = #tpu.dot_dimension_numbers<[1], [0], [0], [1], [0, 0, 1, 1], [], []>} : vector<1x128xbf16>, vector<128x128xbf16>, vector<1x128xf32> -> vector<1x128xf32>
    %64 = arith.addf %63, %60 : vector<1x128xf32>
    %cst_57 = arith.constant 0.000000e+00 : f32
    %65 = vector.broadcast %cst_57 : f32 to vector<1x128xf32>
    %66 = arith.maximumf %64, %65 : vector<1x128xf32>
    %67 = arith.truncf %66 : vector<1x128xf32> to vector<1x128xbf16>
    %c0_58 = arith.constant 0 : index
    %c0_59 = arith.constant 0 : index
    %68 = vector.load %arg5[%c0_58, %c0_59] : memref<128x128xbf16, #tpu.memory_space<vmem>>, vector<128x128xbf16>
    %cst_60 = arith.constant dense<0.000000e+00> : vector<1x128xf32>
    %69 = tpu.matmul %67, %68, %cst_60 {dimension_numbers = #tpu.dot_dimension_numbers<[1], [0], [0], [1], [0, 0, 1, 1], [], []>} : vector<1x128xbf16>, vector<128x128xbf16>, vector<1x128xf32> -> vector<1x128xf32>
    %c0_61 = arith.constant 0 : index
    %c0_62 = arith.constant 0 : index
    %70 = vector.load %arg8[%c0_61, %c0_62] : memref<1x128xf32, #tpu.memory_space<vmem>>, vector<1x128xf32>
    %71 = arith.addf %69, %70 : vector<1x128xf32>
    %cst_63 = arith.constant 0.000000e+00 : f32
    %72 = vector.broadcast %cst_63 : f32 to vector<1x128xf32>
    %73 = arith.maximumf %71, %72 : vector<1x128xf32>
    %74 = arith.truncf %73 : vector<1x128xf32> to vector<1x128xbf16>
    %c0_64 = arith.constant 0 : index
    %c0_65 = arith.constant 0 : index
    %75 = vector.load %arg6[%c0_64, %c0_65] : memref<128x128xbf16, #tpu.memory_space<vmem>>, vector<128x128xbf16>
    %cst_66 = arith.constant dense<0.000000e+00> : vector<1x128xf32>
    %76 = tpu.matmul %74, %75, %cst_66 {dimension_numbers = #tpu.dot_dimension_numbers<[1], [0], [0], [1], [0, 0, 1, 1], [], []>} : vector<1x128xbf16>, vector<128x128xbf16>, vector<1x128xf32> -> vector<1x128xf32>
    %c0_67 = arith.constant 0 : index
    %c0_68 = arith.constant 0 : index
    %77 = vector.load %arg9[%c0_67, %c0_68] : memref<1x128xf32, #tpu.memory_space<vmem>>, vector<1x128xf32>
    %78 = arith.addf %76, %77 : vector<1x128xf32>
    %79 = vector.extract_strided_slice %40 {offsets = [3, 0], sizes = [1, 128], strides = [1, 1]} : vector<8x128xf32> to vector<1x128xf32>
    %80 = arith.truncf %78 : vector<1x128xf32> to vector<1x128xbf16>
    %c0_69 = arith.constant 0 : index
    %c0_70 = arith.constant 0 : index
    %81 = vector.load %arg3[%c0_69, %c0_70] : memref<128x128xbf16, #tpu.memory_space<vmem>>, vector<128x128xbf16>
    %cst_71 = arith.constant dense<0.000000e+00> : vector<1x128xf32>
    %82 = tpu.matmul %80, %81, %cst_71 {dimension_numbers = #tpu.dot_dimension_numbers<[1], [0], [0], [1], [0, 0, 1, 1], [], []>} : vector<1x128xbf16>, vector<128x128xbf16>, vector<1x128xf32> -> vector<1x128xf32>
    %83 = arith.addf %82, %79 : vector<1x128xf32>
    %cst_72 = arith.constant 0.000000e+00 : f32
    %84 = vector.broadcast %cst_72 : f32 to vector<1x128xf32>
    %85 = arith.maximumf %83, %84 : vector<1x128xf32>
    %86 = arith.truncf %85 : vector<1x128xf32> to vector<1x128xbf16>
    %c0_73 = arith.constant 0 : index
    %c0_74 = arith.constant 0 : index
    %87 = vector.load %arg5[%c0_73, %c0_74] : memref<128x128xbf16, #tpu.memory_space<vmem>>, vector<128x128xbf16>
    %cst_75 = arith.constant dense<0.000000e+00> : vector<1x128xf32>
    %88 = tpu.matmul %86, %87, %cst_75 {dimension_numbers = #tpu.dot_dimension_numbers<[1], [0], [0], [1], [0, 0, 1, 1], [], []>} : vector<1x128xbf16>, vector<128x128xbf16>, vector<1x128xf32> -> vector<1x128xf32>
    %c0_76 = arith.constant 0 : index
    %c0_77 = arith.constant 0 : index
    %89 = vector.load %arg8[%c0_76, %c0_77] : memref<1x128xf32, #tpu.memory_space<vmem>>, vector<1x128xf32>
    %90 = arith.addf %88, %89 : vector<1x128xf32>
    %cst_78 = arith.constant 0.000000e+00 : f32
    %91 = vector.broadcast %cst_78 : f32 to vector<1x128xf32>
    %92 = arith.maximumf %90, %91 : vector<1x128xf32>
    %93 = arith.truncf %92 : vector<1x128xf32> to vector<1x128xbf16>
    %c0_79 = arith.constant 0 : index
    %c0_80 = arith.constant 0 : index
    %94 = vector.load %arg6[%c0_79, %c0_80] : memref<128x128xbf16, #tpu.memory_space<vmem>>, vector<128x128xbf16>
    %cst_81 = arith.constant dense<0.000000e+00> : vector<1x128xf32>
    %95 = tpu.matmul %93, %94, %cst_81 {dimension_numbers = #tpu.dot_dimension_numbers<[1], [0], [0], [1], [0, 0, 1, 1], [], []>} : vector<1x128xbf16>, vector<128x128xbf16>, vector<1x128xf32> -> vector<1x128xf32>
    %c0_82 = arith.constant 0 : index
    %c0_83 = arith.constant 0 : index
    %96 = vector.load %arg9[%c0_82, %c0_83] : memref<1x128xf32, #tpu.memory_space<vmem>>, vector<1x128xf32>
    %97 = arith.addf %95, %96 : vector<1x128xf32>
    %98 = vector.extract_strided_slice %40 {offsets = [4, 0], sizes = [1, 128], strides = [1, 1]} : vector<8x128xf32> to vector<1x128xf32>
    %99 = arith.truncf %97 : vector<1x128xf32> to vector<1x128xbf16>
    %c0_84 = arith.constant 0 : index
    %c0_85 = arith.constant 0 : index
    %100 = vector.load %arg3[%c0_84, %c0_85] : memref<128x128xbf16, #tpu.memory_space<vmem>>, vector<128x128xbf16>
    %cst_86 = arith.constant dense<0.000000e+00> : vector<1x128xf32>
    %101 = tpu.matmul %99, %100, %cst_86 {dimension_numbers = #tpu.dot_dimension_numbers<[1], [0], [0], [1], [0, 0, 1, 1], [], []>} : vector<1x128xbf16>, vector<128x128xbf16>, vector<1x128xf32> -> vector<1x128xf32>
    %102 = arith.addf %101, %98 : vector<1x128xf32>
    %cst_87 = arith.constant 0.000000e+00 : f32
    %103 = vector.broadcast %cst_87 : f32 to vector<1x128xf32>
    %104 = arith.maximumf %102, %103 : vector<1x128xf32>
    %105 = arith.truncf %104 : vector<1x128xf32> to vector<1x128xbf16>
    %c0_88 = arith.constant 0 : index
    %c0_89 = arith.constant 0 : index
    %106 = vector.load %arg5[%c0_88, %c0_89] : memref<128x128xbf16, #tpu.memory_space<vmem>>, vector<128x128xbf16>
    %cst_90 = arith.constant dense<0.000000e+00> : vector<1x128xf32>
    %107 = tpu.matmul %105, %106, %cst_90 {dimension_numbers = #tpu.dot_dimension_numbers<[1], [0], [0], [1], [0, 0, 1, 1], [], []>} : vector<1x128xbf16>, vector<128x128xbf16>, vector<1x128xf32> -> vector<1x128xf32>
    %c0_91 = arith.constant 0 : index
    %c0_92 = arith.constant 0 : index
    %108 = vector.load %arg8[%c0_91, %c0_92] : memref<1x128xf32, #tpu.memory_space<vmem>>, vector<1x128xf32>
    %109 = arith.addf %107, %108 : vector<1x128xf32>
    %cst_93 = arith.constant 0.000000e+00 : f32
    %110 = vector.broadcast %cst_93 : f32 to vector<1x128xf32>
    %111 = arith.maximumf %109, %110 : vector<1x128xf32>
    %112 = arith.truncf %111 : vector<1x128xf32> to vector<1x128xbf16>
    %c0_94 = arith.constant 0 : index
    %c0_95 = arith.constant 0 : index
    %113 = vector.load %arg6[%c0_94, %c0_95] : memref<128x128xbf16, #tpu.memory_space<vmem>>, vector<128x128xbf16>
    %cst_96 = arith.constant dense<0.000000e+00> : vector<1x128xf32>
    %114 = tpu.matmul %112, %113, %cst_96 {dimension_numbers = #tpu.dot_dimension_numbers<[1], [0], [0], [1], [0, 0, 1, 1], [], []>} : vector<1x128xbf16>, vector<128x128xbf16>, vector<1x128xf32> -> vector<1x128xf32>
    %c0_97 = arith.constant 0 : index
    %c0_98 = arith.constant 0 : index
    %115 = vector.load %arg9[%c0_97, %c0_98] : memref<1x128xf32, #tpu.memory_space<vmem>>, vector<1x128xf32>
    %116 = arith.addf %114, %115 : vector<1x128xf32>
    %117 = vector.extract_strided_slice %40 {offsets = [5, 0], sizes = [1, 128], strides = [1, 1]} : vector<8x128xf32> to vector<1x128xf32>
    %118 = arith.truncf %116 : vector<1x128xf32> to vector<1x128xbf16>
    %c0_99 = arith.constant 0 : index
    %c0_100 = arith.constant 0 : index
    %119 = vector.load %arg3[%c0_99, %c0_100] : memref<128x128xbf16, #tpu.memory_space<vmem>>, vector<128x128xbf16>
    %cst_101 = arith.constant dense<0.000000e+00> : vector<1x128xf32>
    %120 = tpu.matmul %118, %119, %cst_101 {dimension_numbers = #tpu.dot_dimension_numbers<[1], [0], [0], [1], [0, 0, 1, 1], [], []>} : vector<1x128xbf16>, vector<128x128xbf16>, vector<1x128xf32> -> vector<1x128xf32>
    %121 = arith.addf %120, %117 : vector<1x128xf32>
    %cst_102 = arith.constant 0.000000e+00 : f32
    %122 = vector.broadcast %cst_102 : f32 to vector<1x128xf32>
    %123 = arith.maximumf %121, %122 : vector<1x128xf32>
    %124 = arith.truncf %123 : vector<1x128xf32> to vector<1x128xbf16>
    %c0_103 = arith.constant 0 : index
    %c0_104 = arith.constant 0 : index
    %125 = vector.load %arg5[%c0_103, %c0_104] : memref<128x128xbf16, #tpu.memory_space<vmem>>, vector<128x128xbf16>
    %cst_105 = arith.constant dense<0.000000e+00> : vector<1x128xf32>
    %126 = tpu.matmul %124, %125, %cst_105 {dimension_numbers = #tpu.dot_dimension_numbers<[1], [0], [0], [1], [0, 0, 1, 1], [], []>} : vector<1x128xbf16>, vector<128x128xbf16>, vector<1x128xf32> -> vector<1x128xf32>
    %c0_106 = arith.constant 0 : index
    %c0_107 = arith.constant 0 : index
    %127 = vector.load %arg8[%c0_106, %c0_107] : memref<1x128xf32, #tpu.memory_space<vmem>>, vector<1x128xf32>
    %128 = arith.addf %126, %127 : vector<1x128xf32>
    %cst_108 = arith.constant 0.000000e+00 : f32
    %129 = vector.broadcast %cst_108 : f32 to vector<1x128xf32>
    %130 = arith.maximumf %128, %129 : vector<1x128xf32>
    %131 = arith.truncf %130 : vector<1x128xf32> to vector<1x128xbf16>
    %c0_109 = arith.constant 0 : index
    %c0_110 = arith.constant 0 : index
    %132 = vector.load %arg6[%c0_109, %c0_110] : memref<128x128xbf16, #tpu.memory_space<vmem>>, vector<128x128xbf16>
    %cst_111 = arith.constant dense<0.000000e+00> : vector<1x128xf32>
    %133 = tpu.matmul %131, %132, %cst_111 {dimension_numbers = #tpu.dot_dimension_numbers<[1], [0], [0], [1], [0, 0, 1, 1], [], []>} : vector<1x128xbf16>, vector<128x128xbf16>, vector<1x128xf32> -> vector<1x128xf32>
    %c0_112 = arith.constant 0 : index
    %c0_113 = arith.constant 0 : index
    %134 = vector.load %arg9[%c0_112, %c0_113] : memref<1x128xf32, #tpu.memory_space<vmem>>, vector<1x128xf32>
    %135 = arith.addf %133, %134 : vector<1x128xf32>
    %136 = vector.extract_strided_slice %40 {offsets = [6, 0], sizes = [1, 128], strides = [1, 1]} : vector<8x128xf32> to vector<1x128xf32>
    %137 = arith.truncf %135 : vector<1x128xf32> to vector<1x128xbf16>
    %c0_114 = arith.constant 0 : index
    %c0_115 = arith.constant 0 : index
    %138 = vector.load %arg3[%c0_114, %c0_115] : memref<128x128xbf16, #tpu.memory_space<vmem>>, vector<128x128xbf16>
    %cst_116 = arith.constant dense<0.000000e+00> : vector<1x128xf32>
    %139 = tpu.matmul %137, %138, %cst_116 {dimension_numbers = #tpu.dot_dimension_numbers<[1], [0], [0], [1], [0, 0, 1, 1], [], []>} : vector<1x128xbf16>, vector<128x128xbf16>, vector<1x128xf32> -> vector<1x128xf32>
    %140 = arith.addf %139, %136 : vector<1x128xf32>
    %cst_117 = arith.constant 0.000000e+00 : f32
    %141 = vector.broadcast %cst_117 : f32 to vector<1x128xf32>
    %142 = arith.maximumf %140, %141 : vector<1x128xf32>
    %143 = arith.truncf %142 : vector<1x128xf32> to vector<1x128xbf16>
    %c0_118 = arith.constant 0 : index
    %c0_119 = arith.constant 0 : index
    %144 = vector.load %arg5[%c0_118, %c0_119] : memref<128x128xbf16, #tpu.memory_space<vmem>>, vector<128x128xbf16>
    %cst_120 = arith.constant dense<0.000000e+00> : vector<1x128xf32>
    %145 = tpu.matmul %143, %144, %cst_120 {dimension_numbers = #tpu.dot_dimension_numbers<[1], [0], [0], [1], [0, 0, 1, 1], [], []>} : vector<1x128xbf16>, vector<128x128xbf16>, vector<1x128xf32> -> vector<1x128xf32>
    %c0_121 = arith.constant 0 : index
    %c0_122 = arith.constant 0 : index
    %146 = vector.load %arg8[%c0_121, %c0_122] : memref<1x128xf32, #tpu.memory_space<vmem>>, vector<1x128xf32>
    %147 = arith.addf %145, %146 : vector<1x128xf32>
    %cst_123 = arith.constant 0.000000e+00 : f32
    %148 = vector.broadcast %cst_123 : f32 to vector<1x128xf32>
    %149 = arith.maximumf %147, %148 : vector<1x128xf32>
    %150 = arith.truncf %149 : vector<1x128xf32> to vector<1x128xbf16>
    %c0_124 = arith.constant 0 : index
    %c0_125 = arith.constant 0 : index
    %151 = vector.load %arg6[%c0_124, %c0_125] : memref<128x128xbf16, #tpu.memory_space<vmem>>, vector<128x128xbf16>
    %cst_126 = arith.constant dense<0.000000e+00> : vector<1x128xf32>
    %152 = tpu.matmul %150, %151, %cst_126 {dimension_numbers = #tpu.dot_dimension_numbers<[1], [0], [0], [1], [0, 0, 1, 1], [], []>} : vector<1x128xbf16>, vector<128x128xbf16>, vector<1x128xf32> -> vector<1x128xf32>
    %c0_127 = arith.constant 0 : index
    %c0_128 = arith.constant 0 : index
    %153 = vector.load %arg9[%c0_127, %c0_128] : memref<1x128xf32, #tpu.memory_space<vmem>>, vector<1x128xf32>
    %154 = arith.addf %152, %153 : vector<1x128xf32>
    %155 = vector.extract_strided_slice %40 {offsets = [7, 0], sizes = [1, 128], strides = [1, 1]} : vector<8x128xf32> to vector<1x128xf32>
    %156 = arith.truncf %154 : vector<1x128xf32> to vector<1x128xbf16>
    %c0_129 = arith.constant 0 : index
    %c0_130 = arith.constant 0 : index
    %157 = vector.load %arg3[%c0_129, %c0_130] : memref<128x128xbf16, #tpu.memory_space<vmem>>, vector<128x128xbf16>
    %cst_131 = arith.constant dense<0.000000e+00> : vector<1x128xf32>
    %158 = tpu.matmul %156, %157, %cst_131 {dimension_numbers = #tpu.dot_dimension_numbers<[1], [0], [0], [1], [0, 0, 1, 1], [], []>} : vector<1x128xbf16>, vector<128x128xbf16>, vector<1x128xf32> -> vector<1x128xf32>
    %159 = arith.addf %158, %155 : vector<1x128xf32>
    %cst_132 = arith.constant 0.000000e+00 : f32
    %160 = vector.broadcast %cst_132 : f32 to vector<1x128xf32>
    %161 = arith.maximumf %159, %160 : vector<1x128xf32>
    %162 = arith.truncf %161 : vector<1x128xf32> to vector<1x128xbf16>
    %c0_133 = arith.constant 0 : index
    %c0_134 = arith.constant 0 : index
    %163 = vector.load %arg5[%c0_133, %c0_134] : memref<128x128xbf16, #tpu.memory_space<vmem>>, vector<128x128xbf16>
    %cst_135 = arith.constant dense<0.000000e+00> : vector<1x128xf32>
    %164 = tpu.matmul %162, %163, %cst_135 {dimension_numbers = #tpu.dot_dimension_numbers<[1], [0], [0], [1], [0, 0, 1, 1], [], []>} : vector<1x128xbf16>, vector<128x128xbf16>, vector<1x128xf32> -> vector<1x128xf32>
    %c0_136 = arith.constant 0 : index
    %c0_137 = arith.constant 0 : index
    %165 = vector.load %arg8[%c0_136, %c0_137] : memref<1x128xf32, #tpu.memory_space<vmem>>, vector<1x128xf32>
    %166 = arith.addf %164, %165 : vector<1x128xf32>
    %cst_138 = arith.constant 0.000000e+00 : f32
    %167 = vector.broadcast %cst_138 : f32 to vector<1x128xf32>
    %168 = arith.maximumf %166, %167 : vector<1x128xf32>
    %169 = arith.truncf %168 : vector<1x128xf32> to vector<1x128xbf16>
    %c0_139 = arith.constant 0 : index
    %c0_140 = arith.constant 0 : index
    %170 = vector.load %arg6[%c0_139, %c0_140] : memref<128x128xbf16, #tpu.memory_space<vmem>>, vector<128x128xbf16>
    %cst_141 = arith.constant dense<0.000000e+00> : vector<1x128xf32>
    %171 = tpu.matmul %169, %170, %cst_141 {dimension_numbers = #tpu.dot_dimension_numbers<[1], [0], [0], [1], [0, 0, 1, 1], [], []>} : vector<1x128xbf16>, vector<128x128xbf16>, vector<1x128xf32> -> vector<1x128xf32>
    %c0_142 = arith.constant 0 : index
    %c0_143 = arith.constant 0 : index
    %172 = vector.load %arg9[%c0_142, %c0_143] : memref<1x128xf32, #tpu.memory_space<vmem>>, vector<1x128xf32>
    %173 = arith.addf %171, %172 : vector<1x128xf32>
    %174 = tpu.concatenate %39, %59, %78, %97, %116, %135, %154, %173 in 0 : vector<1x128xf32>, vector<1x128xf32>, vector<1x128xf32>, vector<1x128xf32>, vector<1x128xf32>, vector<1x128xf32>, vector<1x128xf32>, vector<1x128xf32> -> vector<8x128xf32>
    %c0_144 = arith.constant 0 : index
    %c0_145 = arith.constant 0 : index
    %175 = vector.load %arg30[%c0_144, %c0_145] : memref<96x128xf32, #tpu.memory_space<vmem>>, vector<8x128xf32>
    tpu.vector_store %arg30[%c0_144, %c0_145], %174 {strides = array<i32>} : memref<96x128xf32, #tpu.memory_space<vmem>>, vector<8x128xf32>,
    %c8 = arith.constant 8 : index
    %c0_146 = arith.constant 0 : index
    %176 = vector.load %arg31[%c8, %c0_146] : memref<96x128xf32, #tpu.memory_space<vmem>>, vector<8x128xf32>
    %177 = vector.extract_strided_slice %176 {offsets = [0, 0], sizes = [1, 128], strides = [1, 1]} : vector<8x128xf32> to vector<1x128xf32>
    %178 = arith.truncf %173 : vector<1x128xf32> to vector<1x128xbf16>
    %c0_147 = arith.constant 0 : index
    %c0_148 = arith.constant 0 : index
    %179 = vector.load %arg3[%c0_147, %c0_148] : memref<128x128xbf16, #tpu.memory_space<vmem>>, vector<128x128xbf16>
    %cst_149 = arith.constant dense<0.000000e+00> : vector<1x128xf32>
    %180 = tpu.matmul %178, %179, %cst_149 {dimension_numbers = #tpu.dot_dimension_numbers<[1], [0], [0], [1], [0, 0, 1, 1], [], []>} : vector<1x128xbf16>, vector<128x128xbf16>, vector<1x128xf32> -> vector<1x128xf32>
    %181 = arith.addf %180, %177 : vector<1x128xf32>
    %cst_150 = arith.constant 0.000000e+00 : f32
    %182 = vector.broadcast %cst_150 : f32 to vector<1x128xf32>
    %183 = arith.maximumf %181, %182 : vector<1x128xf32>
    %184 = arith.truncf %183 : vector<1x128xf32> to vector<1x128xbf16>
    %c0_151 = arith.constant 0 : index
    %c0_152 = arith.constant 0 : index
    %185 = vector.load %arg5[%c0_151, %c0_152] : memref<128x128xbf16, #tpu.memory_space<vmem>>, vector<128x128xbf16>
    %cst_153 = arith.constant dense<0.000000e+00> : vector<1x128xf32>
    %186 = tpu.matmul %184, %185, %cst_153 {dimension_numbers = #tpu.dot_dimension_numbers<[1], [0], [0], [1], [0, 0, 1, 1], [], []>} : vector<1x128xbf16>, vector<128x128xbf16>, vector<1x128xf32> -> vector<1x128xf32>
    %c0_154 = arith.constant 0 : index
    %c0_155 = arith.constant 0 : index
    %187 = vector.load %arg8[%c0_154, %c0_155] : memref<1x128xf32, #tpu.memory_space<vmem>>, vector<1x128xf32>
    %188 = arith.addf %186, %187 : vector<1x128xf32>
    %cst_156 = arith.constant 0.000000e+00 : f32
    %189 = vector.broadcast %cst_156 : f32 to vector<1x128xf32>
    %190 = arith.maximumf %188, %189 : vector<1x128xf32>
    %191 = arith.truncf %190 : vector<1x128xf32> to vector<1x128xbf16>
    %c0_157 = arith.constant 0 : index
    %c0_158 = arith.constant 0 : index
    %192 = vector.load %arg6[%c0_157, %c0_158] : memref<128x128xbf16, #tpu.memory_space<vmem>>, vector<128x128xbf16>
    %cst_159 = arith.constant dense<0.000000e+00> : vector<1x128xf32>
    %193 = tpu.matmul %191, %192, %cst_159 {dimension_numbers = #tpu.dot_dimension_numbers<[1], [0], [0], [1], [0, 0, 1, 1], [], []>} : vector<1x128xbf16>, vector<128x128xbf16>, vector<1x128xf32> -> vector<1x128xf32>
    %c0_160 = arith.constant 0 : index
    %c0_161 = arith.constant 0 : index
    %194 = vector.load %arg9[%c0_160, %c0_161] : memref<1x128xf32, #tpu.memory_space<vmem>>, vector<1x128xf32>
    %195 = arith.addf %193, %194 : vector<1x128xf32>
    %196 = vector.extract_strided_slice %176 {offsets = [1, 0], sizes = [1, 128], strides = [1, 1]} : vector<8x128xf32> to vector<1x128xf32>
    %197 = arith.truncf %195 : vector<1x128xf32> to vector<1x128xbf16>
    %c0_162 = arith.constant 0 : index
    %c0_163 = arith.constant 0 : index
    %198 = vector.load %arg3[%c0_162, %c0_163] : memref<128x128xbf16, #tpu.memory_space<vmem>>, vector<128x128xbf16>
    %cst_164 = arith.constant dense<0.000000e+00> : vector<1x128xf32>
    %199 = tpu.matmul %197, %198, %cst_164 {dimension_numbers = #tpu.dot_dimension_numbers<[1], [0], [0], [1], [0, 0, 1, 1], [], []>} : vector<1x128xbf16>, vector<128x128xbf16>, vector<1x128xf32> -> vector<1x128xf32>
    %200 = arith.addf %199, %196 : vector<1x128xf32>
    %cst_165 = arith.constant 0.000000e+00 : f32
    %201 = vector.broadcast %cst_165 : f32 to vector<1x128xf32>
    %202 = arith.maximumf %200, %201 : vector<1x128xf32>
    %203 = arith.truncf %202 : vector<1x128xf32> to vector<1x128xbf16>
    %c0_166 = arith.constant 0 : index
    %c0_167 = arith.constant 0 : index
    %204 = vector.load %arg5[%c0_166, %c0_167] : memref<128x128xbf16, #tpu.memory_space<vmem>>, vector<128x128xbf16>
    %cst_168 = arith.constant dense<0.000000e+00> : vector<1x128xf32>
    %205 = tpu.matmul %203, %204, %cst_168 {dimension_numbers = #tpu.dot_dimension_numbers<[1], [0], [0], [1], [0, 0, 1, 1], [], []>} : vector<1x128xbf16>, vector<128x128xbf16>, vector<1x128xf32> -> vector<1x128xf32>
    %c0_169 = arith.constant 0 : index
    %c0_170 = arith.constant 0 : index
    %206 = vector.load %arg8[%c0_169, %c0_170] : memref<1x128xf32, #tpu.memory_space<vmem>>, vector<1x128xf32>
    %207 = arith.addf %205, %206 : vector<1x128xf32>
    %cst_171 = arith.constant 0.000000e+00 : f32
    %208 = vector.broadcast %cst_171 : f32 to vector<1x128xf32>
    %209 = arith.maximumf %207, %208 : vector<1x128xf32>
    %210 = arith.truncf %209 : vector<1x128xf32> to vector<1x128xbf16>
    %c0_172 = arith.constant 0 : index
    %c0_173 = arith.constant 0 : index
    %211 = vector.load %arg6[%c0_172, %c0_173] : memref<128x128xbf16, #tpu.memory_space<vmem>>, vector<128x128xbf16>
    %cst_174 = arith.constant dense<0.000000e+00> : vector<1x128xf32>
    %212 = tpu.matmul %210, %211, %cst_174 {dimension_numbers = #tpu.dot_dimension_numbers<[1], [0], [0], [1], [0, 0, 1, 1], [], []>} : vector<1x128xbf16>, vector<128x128xbf16>, vector<1x128xf32> -> vector<1x128xf32>
    %c0_175 = arith.constant 0 : index
    %c0_176 = arith.constant 0 : index
    %213 = vector.load %arg9[%c0_175, %c0_176] : memref<1x128xf32, #tpu.memory_space<vmem>>, vector<1x128xf32>
    %214 = arith.addf %212, %213 : vector<1x128xf32>
    %215 = vector.extract_strided_slice %176 {offsets = [2, 0], sizes = [1, 128], strides = [1, 1]} : vector<8x128xf32> to vector<1x128xf32>
    %216 = arith.truncf %214 : vector<1x128xf32> to vector<1x128xbf16>
    %c0_177 = arith.constant 0 : index
    %c0_178 = arith.constant 0 : index
    %217 = vector.load %arg3[%c0_177, %c0_178] : memref<128x128xbf16, #tpu.memory_space<vmem>>, vector<128x128xbf16>
    %cst_179 = arith.constant dense<0.000000e+00> : vector<1x128xf32>
    %218 = tpu.matmul %216, %217, %cst_179 {dimension_numbers = #tpu.dot_dimension_numbers<[1], [0], [0], [1], [0, 0, 1, 1], [], []>} : vector<1x128xbf16>, vector<128x128xbf16>, vector<1x128xf32> -> vector<1x128xf32>
    %219 = arith.addf %218, %215 : vector<1x128xf32>
    %cst_180 = arith.constant 0.000000e+00 : f32
    %220 = vector.broadcast %cst_180 : f32 to vector<1x128xf32>
    %221 = arith.maximumf %219, %220 : vector<1x128xf32>
    %222 = arith.truncf %221 : vector<1x128xf32> to vector<1x128xbf16>
    %c0_181 = arith.constant 0 : index
    %c0_182 = arith.constant 0 : index
    %223 = vector.load %arg5[%c0_181, %c0_182] : memref<128x128xbf16, #tpu.memory_space<vmem>>, vector<128x128xbf16>
    %cst_183 = arith.constant dense<0.000000e+00> : vector<1x128xf32>
    %224 = tpu.matmul %222, %223, %cst_183 {dimension_numbers = #tpu.dot_dimension_numbers<[1], [0], [0], [1], [0, 0, 1, 1], [], []>} : vector<1x128xbf16>, vector<128x128xbf16>, vector<1x128xf32> -> vector<1x128xf32>
    %c0_184 = arith.constant 0 : index
    %c0_185 = arith.constant 0 : index
    %225 = vector.load %arg8[%c0_184, %c0_185] : memref<1x128xf32, #tpu.memory_space<vmem>>, vector<1x128xf32>
    %226 = arith.addf %224, %225 : vector<1x128xf32>
    %cst_186 = arith.constant 0.000000e+00 : f32
    %227 = vector.broadcast %cst_186 : f32 to vector<1x128xf32>
    %228 = arith.maximumf %226, %227 : vector<1x128xf32>
    %229 = arith.truncf %228 : vector<1x128xf32> to vector<1x128xbf16>
    %c0_187 = arith.constant 0 : index
    %c0_188 = arith.constant 0 : index
    %230 = vector.load %arg6[%c0_187, %c0_188] : memref<128x128xbf16, #tpu.memory_space<vmem>>, vector<128x128xbf16>
    %cst_189 = arith.constant dense<0.000000e+00> : vector<1x128xf32>
    %231 = tpu.matmul %229, %230, %cst_189 {dimension_numbers = #tpu.dot_dimension_numbers<[1], [0], [0], [1], [0, 0, 1, 1], [], []>} : vector<1x128xbf16>, vector<128x128xbf16>, vector<1x128xf32> -> vector<1x128xf32>
    %c0_190 = arith.constant 0 : index
    %c0_191 = arith.constant 0 : index
    %232 = vector.load %arg9[%c0_190, %c0_191] : memref<1x128xf32, #tpu.memory_space<vmem>>, vector<1x128xf32>
    %233 = arith.addf %231, %232 : vector<1x128xf32>
    %234 = vector.extract_strided_slice %176 {offsets = [3, 0], sizes = [1, 128], strides = [1, 1]} : vector<8x128xf32> to vector<1x128xf32>
    %235 = arith.truncf %233 : vector<1x128xf32> to vector<1x128xbf16>
    %c0_192 = arith.constant 0 : index
    %c0_193 = arith.constant 0 : index
    %236 = vector.load %arg3[%c0_192, %c0_193] : memref<128x128xbf16, #tpu.memory_space<vmem>>, vector<128x128xbf16>
    %cst_194 = arith.constant dense<0.000000e+00> : vector<1x128xf32>
    %237 = tpu.matmul %235, %236, %cst_194 {dimension_numbers = #tpu.dot_dimension_numbers<[1], [0], [0], [1], [0, 0, 1, 1], [], []>} : vector<1x128xbf16>, vector<128x128xbf16>, vector<1x128xf32> -> vector<1x128xf32>
    %238 = arith.addf %237, %234 : vector<1x128xf32>
    %cst_195 = arith.constant 0.000000e+00 : f32
    %239 = vector.broadcast %cst_195 : f32 to vector<1x128xf32>
    %240 = arith.maximumf %238, %239 : vector<1x128xf32>
    %241 = arith.truncf %240 : vector<1x128xf32> to vector<1x128xbf16>
    %c0_196 = arith.constant 0 : index
    %c0_197 = arith.constant 0 : index
    %242 = vector.load %arg5[%c0_196, %c0_197] : memref<128x128xbf16, #tpu.memory_space<vmem>>, vector<128x128xbf16>
    %cst_198 = arith.constant dense<0.000000e+00> : vector<1x128xf32>
    %243 = tpu.matmul %241, %242, %cst_198 {dimension_numbers = #tpu.dot_dimension_numbers<[1], [0], [0], [1], [0, 0, 1, 1], [], []>} : vector<1x128xbf16>, vector<128x128xbf16>, vector<1x128xf32> -> vector<1x128xf32>
    %c0_199 = arith.constant 0 : index
    %c0_200 = arith.constant 0 : index
    %244 = vector.load %arg8[%c0_199, %c0_200] : memref<1x128xf32, #tpu.memory_space<vmem>>, vector<1x128xf32>
    %245 = arith.addf %243, %244 : vector<1x128xf32>
    %cst_201 = arith.constant 0.000000e+00 : f32
    %246 = vector.broadcast %cst_201 : f32 to vector<1x128xf32>
    %247 = arith.maximumf %245, %246 : vector<1x128xf32>
    %248 = arith.truncf %247 : vector<1x128xf32> to vector<1x128xbf16>
    %c0_202 = arith.constant 0 : index
    %c0_203 = arith.constant 0 : index
    %249 = vector.load %arg6[%c0_202, %c0_203] : memref<128x128xbf16, #tpu.memory_space<vmem>>, vector<128x128xbf16>
    %cst_204 = arith.constant dense<0.000000e+00> : vector<1x128xf32>
    %250 = tpu.matmul %248, %249, %cst_204 {dimension_numbers = #tpu.dot_dimension_numbers<[1], [0], [0], [1], [0, 0, 1, 1], [], []>} : vector<1x128xbf16>, vector<128x128xbf16>, vector<1x128xf32> -> vector<1x128xf32>
    %c0_205 = arith.constant 0 : index
    %c0_206 = arith.constant 0 : index
    %251 = vector.load %arg9[%c0_205, %c0_206] : memref<1x128xf32, #tpu.memory_space<vmem>>, vector<1x128xf32>
    %252 = arith.addf %250, %251 : vector<1x128xf32>
    %253 = vector.extract_strided_slice %176 {offsets = [4, 0], sizes = [1, 128], strides = [1, 1]} : vector<8x128xf32> to vector<1x128xf32>
    %254 = arith.truncf %252 : vector<1x128xf32> to vector<1x128xbf16>
    %c0_207 = arith.constant 0 : index
    %c0_208 = arith.constant 0 : index
    %255 = vector.load %arg3[%c0_207, %c0_208] : memref<128x128xbf16, #tpu.memory_space<vmem>>, vector<128x128xbf16>
    %cst_209 = arith.constant dense<0.000000e+00> : vector<1x128xf32>
    %256 = tpu.matmul %254, %255, %cst_209 {dimension_numbers = #tpu.dot_dimension_numbers<[1], [0], [0], [1], [0, 0, 1, 1], [], []>} : vector<1x128xbf16>, vector<128x128xbf16>, vector<1x128xf32> -> vector<1x128xf32>
    %257 = arith.addf %256, %253 : vector<1x128xf32>
    %cst_210 = arith.constant 0.000000e+00 : f32
    %258 = vector.broadcast %cst_210 : f32 to vector<1x128xf32>
    %259 = arith.maximumf %257, %258 : vector<1x128xf32>
    %260 = arith.truncf %259 : vector<1x128xf32> to vector<1x128xbf16>
    %c0_211 = arith.constant 0 : index
    %c0_212 = arith.constant 0 : index
    %261 = vector.load %arg5[%c0_211, %c0_212] : memref<128x128xbf16, #tpu.memory_space<vmem>>, vector<128x128xbf16>
    %cst_213 = arith.constant dense<0.000000e+00> : vector<1x128xf32>
    %262 = tpu.matmul %260, %261, %cst_213 {dimension_numbers = #tpu.dot_dimension_numbers<[1], [0], [0], [1], [0, 0, 1, 1], [], []>} : vector<1x128xbf16>, vector<128x128xbf16>, vector<1x128xf32> -> vector<1x128xf32>
    %c0_214 = arith.constant 0 : index
    %c0_215 = arith.constant 0 : index
    %263 = vector.load %arg8[%c0_214, %c0_215] : memref<1x128xf32, #tpu.memory_space<vmem>>, vector<1x128xf32>
    %264 = arith.addf %262, %263 : vector<1x128xf32>
    %cst_216 = arith.constant 0.000000e+00 : f32
    %265 = vector.broadcast %cst_216 : f32 to vector<1x128xf32>
    %266 = arith.maximumf %264, %265 : vector<1x128xf32>
    %267 = arith.truncf %266 : vector<1x128xf32> to vector<1x128xbf16>
    %c0_217 = arith.constant 0 : index
    %c0_218 = arith.constant 0 : index
    %268 = vector.load %arg6[%c0_217, %c0_218] : memref<128x128xbf16, #tpu.memory_space<vmem>>, vector<128x128xbf16>
    %cst_219 = arith.constant dense<0.000000e+00> : vector<1x128xf32>
    %269 = tpu.matmul %267, %268, %cst_219 {dimension_numbers = #tpu.dot_dimension_numbers<[1], [0], [0], [1], [0, 0, 1, 1], [], []>} : vector<1x128xbf16>, vector<128x128xbf16>, vector<1x128xf32> -> vector<1x128xf32>
    %c0_220 = arith.constant 0 : index
    %c0_221 = arith.constant 0 : index
    %270 = vector.load %arg9[%c0_220, %c0_221] : memref<1x128xf32, #tpu.memory_space<vmem>>, vector<1x128xf32>
    %271 = arith.addf %269, %270 : vector<1x128xf32>
    %272 = vector.extract_strided_slice %176 {offsets = [5, 0], sizes = [1, 128], strides = [1, 1]} : vector<8x128xf32> to vector<1x128xf32>
    %273 = arith.truncf %271 : vector<1x128xf32> to vector<1x128xbf16>
    %c0_222 = arith.constant 0 : index
    %c0_223 = arith.constant 0 : index
    %274 = vector.load %arg3[%c0_222, %c0_223] : memref<128x128xbf16, #tpu.memory_space<vmem>>, vector<128x128xbf16>
    %cst_224 = arith.constant dense<0.000000e+00> : vector<1x128xf32>
    %275 = tpu.matmul %273, %274, %cst_224 {dimension_numbers = #tpu.dot_dimension_numbers<[1], [0], [0], [1], [0, 0, 1, 1], [], []>} : vector<1x128xbf16>, vector<128x128xbf16>, vector<1x128xf32> -> vector<1x128xf32>
    %276 = arith.addf %275, %272 : vector<1x128xf32>
    %cst_225 = arith.constant 0.000000e+00 : f32
    %277 = vector.broadcast %cst_225 : f32 to vector<1x128xf32>
    %278 = arith.maximumf %276, %277 : vector<1x128xf32>
    %279 = arith.truncf %278 : vector<1x128xf32> to vector<1x128xbf16>
    %c0_226 = arith.constant 0 : index
    %c0_227 = arith.constant 0 : index
    %280 = vector.load %arg5[%c0_226, %c0_227] : memref<128x128xbf16, #tpu.memory_space<vmem>>, vector<128x128xbf16>
    %cst_228 = arith.constant dense<0.000000e+00> : vector<1x128xf32>
    %281 = tpu.matmul %279, %280, %cst_228 {dimension_numbers = #tpu.dot_dimension_numbers<[1], [0], [0], [1], [0, 0, 1, 1], [], []>} : vector<1x128xbf16>, vector<128x128xbf16>, vector<1x128xf32> -> vector<1x128xf32>
    %c0_229 = arith.constant 0 : index
    %c0_230 = arith.constant 0 : index
    %282 = vector.load %arg8[%c0_229, %c0_230] : memref<1x128xf32, #tpu.memory_space<vmem>>, vector<1x128xf32>
    %283 = arith.addf %281, %282 : vector<1x128xf32>
    %cst_231 = arith.constant 0.000000e+00 : f32
    %284 = vector.broadcast %cst_231 : f32 to vector<1x128xf32>
    %285 = arith.maximumf %283, %284 : vector<1x128xf32>
    %286 = arith.truncf %285 : vector<1x128xf32> to vector<1x128xbf16>
    %c0_232 = arith.constant 0 : index
    %c0_233 = arith.constant 0 : index
    %287 = vector.load %arg6[%c0_232, %c0_233] : memref<128x128xbf16, #tpu.memory_space<vmem>>, vector<128x128xbf16>
    %cst_234 = arith.constant dense<0.000000e+00> : vector<1x128xf32>
    %288 = tpu.matmul %286, %287, %cst_234 {dimension_numbers = #tpu.dot_dimension_numbers<[1], [0], [0], [1], [0, 0, 1, 1], [], []>} : vector<1x128xbf16>, vector<128x128xbf16>, vector<1x128xf32> -> vector<1x128xf32>
    %c0_235 = arith.constant 0 : index
    %c0_236 = arith.constant 0 : index
    %289 = vector.load %arg9[%c0_235, %c0_236] : memref<1x128xf32, #tpu.memory_space<vmem>>, vector<1x128xf32>
    %290 = arith.addf %288, %289 : vector<1x128xf32>
    %291 = vector.extract_strided_slice %176 {offsets = [6, 0], sizes = [1, 128], strides = [1, 1]} : vector<8x128xf32> to vector<1x128xf32>
    %292 = arith.truncf %290 : vector<1x128xf32> to vector<1x128xbf16>
    %c0_237 = arith.constant 0 : index
    %c0_238 = arith.constant 0 : index
    %293 = vector.load %arg3[%c0_237, %c0_238] : memref<128x128xbf16, #tpu.memory_space<vmem>>, vector<128x128xbf16>
    %cst_239 = arith.constant dense<0.000000e+00> : vector<1x128xf32>
    %294 = tpu.matmul %292, %293, %cst_239 {dimension_numbers = #tpu.dot_dimension_numbers<[1], [0], [0], [1], [0, 0, 1, 1], [], []>} : vector<1x128xbf16>, vector<128x128xbf16>, vector<1x128xf32> -> vector<1x128xf32>
    %295 = arith.addf %294, %291 : vector<1x128xf32>
    %cst_240 = arith.constant 0.000000e+00 : f32
    %296 = vector.broadcast %cst_240 : f32 to vector<1x128xf32>
    %297 = arith.maximumf %295, %296 : vector<1x128xf32>
    %298 = arith.truncf %297 : vector<1x128xf32> to vector<1x128xbf16>
    %c0_241 = arith.constant 0 : index
    %c0_242 = arith.constant 0 : index
    %299 = vector.load %arg5[%c0_241, %c0_242] : memref<128x128xbf16, #tpu.memory_space<vmem>>, vector<128x128xbf16>
    %cst_243 = arith.constant dense<0.000000e+00> : vector<1x128xf32>
    %300 = tpu.matmul %298, %299, %cst_243 {dimension_numbers = #tpu.dot_dimension_numbers<[1], [0], [0], [1], [0, 0, 1, 1], [], []>} : vector<1x128xbf16>, vector<128x128xbf16>, vector<1x128xf32> -> vector<1x128xf32>
    %c0_244 = arith.constant 0 : index
    %c0_245 = arith.constant 0 : index
    %301 = vector.load %arg8[%c0_244, %c0_245] : memref<1x128xf32, #tpu.memory_space<vmem>>, vector<1x128xf32>
    %302 = arith.addf %300, %301 : vector<1x128xf32>
    %cst_246 = arith.constant 0.000000e+00 : f32
    %303 = vector.broadcast %cst_246 : f32 to vector<1x128xf32>
    %304 = arith.maximumf %302, %303 : vector<1x128xf32>
    %305 = arith.truncf %304 : vector<1x128xf32> to vector<1x128xbf16>
    %c0_247 = arith.constant 0 : index
    %c0_248 = arith.constant 0 : index
    %306 = vector.load %arg6[%c0_247, %c0_248] : memref<128x128xbf16, #tpu.memory_space<vmem>>, vector<128x128xbf16>
    %cst_249 = arith.constant dense<0.000000e+00> : vector<1x128xf32>
    %307 = tpu.matmul %305, %306, %cst_249 {dimension_numbers = #tpu.dot_dimension_numbers<[1], [0], [0], [1], [0, 0, 1, 1], [], []>} : vector<1x128xbf16>, vector<128x128xbf16>, vector<1x128xf32> -> vector<1x128xf32>
    %c0_250 = arith.constant 0 : index
    %c0_251 = arith.constant 0 : index
    %308 = vector.load %arg9[%c0_250, %c0_251] : memref<1x128xf32, #tpu.memory_space<vmem>>, vector<1x128xf32>
    %309 = arith.addf %307, %308 : vector<1x128xf32>
    %310 = vector.extract_strided_slice %176 {offsets = [7, 0], sizes = [1, 128], strides = [1, 1]} : vector<8x128xf32> to vector<1x128xf32>
    %311 = arith.truncf %309 : vector<1x128xf32> to vector<1x128xbf16>
    %c0_252 = arith.constant 0 : index
    %c0_253 = arith.constant 0 : index
    %312 = vector.load %arg3[%c0_252, %c0_253] : memref<128x128xbf16, #tpu.memory_space<vmem>>, vector<128x128xbf16>
    %cst_254 = arith.constant dense<0.000000e+00> : vector<1x128xf32>
    %313 = tpu.matmul %311, %312, %cst_254 {dimension_numbers = #tpu.dot_dimension_numbers<[1], [0], [0], [1], [0, 0, 1, 1], [], []>} : vector<1x128xbf16>, vector<128x128xbf16>, vector<1x128xf32> -> vector<1x128xf32>
    %314 = arith.addf %313, %310 : vector<1x128xf32>
    %cst_255 = arith.constant 0.000000e+00 : f32
    %315 = vector.broadcast %cst_255 : f32 to vector<1x128xf32>
    %316 = arith.maximumf %314, %315 : vector<1x128xf32>
    %317 = arith.truncf %316 : vector<1x128xf32> to vector<1x128xbf16>
    %c0_256 = arith.constant 0 : index
    %c0_257 = arith.constant 0 : index
    %318 = vector.load %arg5[%c0_256, %c0_257] : memref<128x128xbf16, #tpu.memory_space<vmem>>, vector<128x128xbf16>
    %cst_258 = arith.constant dense<0.000000e+00> : vector<1x128xf32>
    %319 = tpu.matmul %317, %318, %cst_258 {dimension_numbers = #tpu.dot_dimension_numbers<[1], [0], [0], [1], [0, 0, 1, 1], [], []>} : vector<1x128xbf16>, vector<128x128xbf16>, vector<1x128xf32> -> vector<1x128xf32>
    %c0_259 = arith.constant 0 : index
    %c0_260 = arith.constant 0 : index
    %320 = vector.load %arg8[%c0_259, %c0_260] : memref<1x128xf32, #tpu.memory_space<vmem>>, vector<1x128xf32>
    %321 = arith.addf %319, %320 : vector<1x128xf32>
    %cst_261 = arith.constant 0.000000e+00 : f32
    %322 = vector.broadcast %cst_261 : f32 to vector<1x128xf32>
    %323 = arith.maximumf %321, %322 : vector<1x128xf32>
    %324 = arith.truncf %323 : vector<1x128xf32> to vector<1x128xbf16>
    %c0_262 = arith.constant 0 : index
    %c0_263 = arith.constant 0 : index
    %325 = vector.load %arg6[%c0_262, %c0_263] : memref<128x128xbf16, #tpu.memory_space<vmem>>, vector<128x128xbf16>
    %cst_264 = arith.constant dense<0.000000e+00> : vector<1x128xf32>
    %326 = tpu.matmul %324, %325, %cst_264 {dimension_numbers = #tpu.dot_dimension_numbers<[1], [0], [0], [1], [0, 0, 1, 1], [], []>} : vector<1x128xbf16>, vector<128x128xbf16>, vector<1x128xf32> -> vector<1x128xf32>
    %c0_265 = arith.constant 0 : index
    %c0_266 = arith.constant 0 : index
    %327 = vector.load %arg9[%c0_265, %c0_266] : memref<1x128xf32, #tpu.memory_space<vmem>>, vector<1x128xf32>
    %328 = arith.addf %326, %327 : vector<1x128xf32>
    %329 = tpu.concatenate %195, %214, %233, %252, %271, %290, %309, %328 in 0 : vector<1x128xf32>, vector<1x128xf32>, vector<1x128xf32>, vector<1x128xf32>, vector<1x128xf32>, vector<1x128xf32>, vector<1x128xf32>, vector<1x128xf32> -> vector<8x128xf32>
    %c8_267 = arith.constant 8 : index
    %c0_268 = arith.constant 0 : index
    %330 = vector.load %arg30[%c8_267, %c0_268] : memref<96x128xf32, #tpu.memory_space<vmem>>, vector<8x128xf32>
    tpu.vector_store %arg30[%c8_267, %c0_268], %329 {strides = array<i32>} : memref<96x128xf32, #tpu.memory_space<vmem>>, vector<8x128xf32>,
    %c0_i32 = arith.constant 0 : i32
    %c5_i32 = arith.constant 5 : i32
    %331 = arith.addi %c0_i32, %c5_i32 : i32
    %c1_i32 = arith.constant 1 : i32
    %332 = scf.for %arg32 = %c0_i32 to %331 step %c1_i32 iter_args(%arg33 = %328) -> (vector<1x128xf32>)  : i32 {
      %c1_i32_294 = arith.constant 1 : i32
      %362 = arith.addi %arg32, %c1_i32_294 : i32
      %c16_i32 = arith.constant 16 : i32
      %363 = arith.muli %362, %c16_i32 : i32
      %364 = tpu.assume_multiple %363, 16 : i32
      %365 = arith.index_cast %364 : i32 to index
      %c0_295 = arith.constant 0 : index
      %366 = vector.load %arg31[%365, %c0_295] : memref<96x128xf32, #tpu.memory_space<vmem>>, vector<8x128xf32>
      %367 = vector.extract_strided_slice %366 {offsets = [0, 0], sizes = [1, 128], strides = [1, 1]} : vector<8x128xf32> to vector<1x128xf32>
      %368 = arith.truncf %arg33 : vector<1x128xf32> to vector<1x128xbf16>
      %c0_296 = arith.constant 0 : index
      %c0_297 = arith.constant 0 : index
      %369 = vector.load %arg3[%c0_296, %c0_297] : memref<128x128xbf16, #tpu.memory_space<vmem>>, vector<128x128xbf16>
      %cst_298 = arith.constant dense<0.000000e+00> : vector<1x128xf32>
      %370 = tpu.matmul %368, %369, %cst_298 {dimension_numbers = #tpu.dot_dimension_numbers<[1], [0], [0], [1], [0, 0, 1, 1], [], []>} : vector<1x128xbf16>, vector<128x128xbf16>, vector<1x128xf32> -> vector<1x128xf32>
      %371 = arith.addf %370, %367 : vector<1x128xf32>
      %cst_299 = arith.constant 0.000000e+00 : f32
      %372 = vector.broadcast %cst_299 : f32 to vector<1x128xf32>
      %373 = arith.maximumf %371, %372 : vector<1x128xf32>
      %374 = arith.truncf %373 : vector<1x128xf32> to vector<1x128xbf16>
      %c0_300 = arith.constant 0 : index
      %c0_301 = arith.constant 0 : index
      %375 = vector.load %arg5[%c0_300, %c0_301] : memref<128x128xbf16, #tpu.memory_space<vmem>>, vector<128x128xbf16>
      %cst_302 = arith.constant dense<0.000000e+00> : vector<1x128xf32>
      %376 = tpu.matmul %374, %375, %cst_302 {dimension_numbers = #tpu.dot_dimension_numbers<[1], [0], [0], [1], [0, 0, 1, 1], [], []>} : vector<1x128xbf16>, vector<128x128xbf16>, vector<1x128xf32> -> vector<1x128xf32>
      %c0_303 = arith.constant 0 : index
      %c0_304 = arith.constant 0 : index
      %377 = vector.load %arg8[%c0_303, %c0_304] : memref<1x128xf32, #tpu.memory_space<vmem>>, vector<1x128xf32>
      %378 = arith.addf %376, %377 : vector<1x128xf32>
      %cst_305 = arith.constant 0.000000e+00 : f32
      %379 = vector.broadcast %cst_305 : f32 to vector<1x128xf32>
      %380 = arith.maximumf %378, %379 : vector<1x128xf32>
      %381 = arith.truncf %380 : vector<1x128xf32> to vector<1x128xbf16>
      %c0_306 = arith.constant 0 : index
      %c0_307 = arith.constant 0 : index
      %382 = vector.load %arg6[%c0_306, %c0_307] : memref<128x128xbf16, #tpu.memory_space<vmem>>, vector<128x128xbf16>
      %cst_308 = arith.constant dense<0.000000e+00> : vector<1x128xf32>
      %383 = tpu.matmul %381, %382, %cst_308 {dimension_numbers = #tpu.dot_dimension_numbers<[1], [0], [0], [1], [0, 0, 1, 1], [], []>} : vector<1x128xbf16>, vector<128x128xbf16>, vector<1x128xf32> -> vector<1x128xf32>
      %c0_309 = arith.constant 0 : index
      %c0_310 = arith.constant 0 : index
      %384 = vector.load %arg9[%c0_309, %c0_310] : memref<1x128xf32, #tpu.memory_space<vmem>>, vector<1x128xf32>
      %385 = arith.addf %383, %384 : vector<1x128xf32>
      %386 = vector.extract_strided_slice %366 {offsets = [1, 0], sizes = [1, 128], strides = [1, 1]} : vector<8x128xf32> to vector<1x128xf32>
      %387 = arith.truncf %385 : vector<1x128xf32> to vector<1x128xbf16>
      %c0_311 = arith.constant 0 : index
      %c0_312 = arith.constant 0 : index
      %388 = vector.load %arg3[%c0_311, %c0_312] : memref<128x128xbf16, #tpu.memory_space<vmem>>, vector<128x128xbf16>
      %cst_313 = arith.constant dense<0.000000e+00> : vector<1x128xf32>
      %389 = tpu.matmul %387, %388, %cst_313 {dimension_numbers = #tpu.dot_dimension_numbers<[1], [0], [0], [1], [0, 0, 1, 1], [], []>} : vector<1x128xbf16>, vector<128x128xbf16>, vector<1x128xf32> -> vector<1x128xf32>
      %390 = arith.addf %389, %386 : vector<1x128xf32>
      %cst_314 = arith.constant 0.000000e+00 : f32
      %391 = vector.broadcast %cst_314 : f32 to vector<1x128xf32>
      %392 = arith.maximumf %390, %391 : vector<1x128xf32>
      %393 = arith.truncf %392 : vector<1x128xf32> to vector<1x128xbf16>
      %c0_315 = arith.constant 0 : index
      %c0_316 = arith.constant 0 : index
      %394 = vector.load %arg5[%c0_315, %c0_316] : memref<128x128xbf16, #tpu.memory_space<vmem>>, vector<128x128xbf16>
      %cst_317 = arith.constant dense<0.000000e+00> : vector<1x128xf32>
      %395 = tpu.matmul %393, %394, %cst_317 {dimension_numbers = #tpu.dot_dimension_numbers<[1], [0], [0], [1], [0, 0, 1, 1], [], []>} : vector<1x128xbf16>, vector<128x128xbf16>, vector<1x128xf32> -> vector<1x128xf32>
      %c0_318 = arith.constant 0 : index
      %c0_319 = arith.constant 0 : index
      %396 = vector.load %arg8[%c0_318, %c0_319] : memref<1x128xf32, #tpu.memory_space<vmem>>, vector<1x128xf32>
      %397 = arith.addf %395, %396 : vector<1x128xf32>
      %cst_320 = arith.constant 0.000000e+00 : f32
      %398 = vector.broadcast %cst_320 : f32 to vector<1x128xf32>
      %399 = arith.maximumf %397, %398 : vector<1x128xf32>
      %400 = arith.truncf %399 : vector<1x128xf32> to vector<1x128xbf16>
      %c0_321 = arith.constant 0 : index
      %c0_322 = arith.constant 0 : index
      %401 = vector.load %arg6[%c0_321, %c0_322] : memref<128x128xbf16, #tpu.memory_space<vmem>>, vector<128x128xbf16>
      %cst_323 = arith.constant dense<0.000000e+00> : vector<1x128xf32>
      %402 = tpu.matmul %400, %401, %cst_323 {dimension_numbers = #tpu.dot_dimension_numbers<[1], [0], [0], [1], [0, 0, 1, 1], [], []>} : vector<1x128xbf16>, vector<128x128xbf16>, vector<1x128xf32> -> vector<1x128xf32>
      %c0_324 = arith.constant 0 : index
      %c0_325 = arith.constant 0 : index
      %403 = vector.load %arg9[%c0_324, %c0_325] : memref<1x128xf32, #tpu.memory_space<vmem>>, vector<1x128xf32>
      %404 = arith.addf %402, %403 : vector<1x128xf32>
      %405 = vector.extract_strided_slice %366 {offsets = [2, 0], sizes = [1, 128], strides = [1, 1]} : vector<8x128xf32> to vector<1x128xf32>
      %406 = arith.truncf %404 : vector<1x128xf32> to vector<1x128xbf16>
      %c0_326 = arith.constant 0 : index
      %c0_327 = arith.constant 0 : index
      %407 = vector.load %arg3[%c0_326, %c0_327] : memref<128x128xbf16, #tpu.memory_space<vmem>>, vector<128x128xbf16>
      %cst_328 = arith.constant dense<0.000000e+00> : vector<1x128xf32>
      %408 = tpu.matmul %406, %407, %cst_328 {dimension_numbers = #tpu.dot_dimension_numbers<[1], [0], [0], [1], [0, 0, 1, 1], [], []>} : vector<1x128xbf16>, vector<128x128xbf16>, vector<1x128xf32> -> vector<1x128xf32>
      %409 = arith.addf %408, %405 : vector<1x128xf32>
      %cst_329 = arith.constant 0.000000e+00 : f32
      %410 = vector.broadcast %cst_329 : f32 to vector<1x128xf32>
      %411 = arith.maximumf %409, %410 : vector<1x128xf32>
      %412 = arith.truncf %411 : vector<1x128xf32> to vector<1x128xbf16>
      %c0_330 = arith.constant 0 : index
      %c0_331 = arith.constant 0 : index
      %413 = vector.load %arg5[%c0_330, %c0_331] : memref<128x128xbf16, #tpu.memory_space<vmem>>, vector<128x128xbf16>
      %cst_332 = arith.constant dense<0.000000e+00> : vector<1x128xf32>
      %414 = tpu.matmul %412, %413, %cst_332 {dimension_numbers = #tpu.dot_dimension_numbers<[1], [0], [0], [1], [0, 0, 1, 1], [], []>} : vector<1x128xbf16>, vector<128x128xbf16>, vector<1x128xf32> -> vector<1x128xf32>
      %c0_333 = arith.constant 0 : index
      %c0_334 = arith.constant 0 : index
      %415 = vector.load %arg8[%c0_333, %c0_334] : memref<1x128xf32, #tpu.memory_space<vmem>>, vector<1x128xf32>
      %416 = arith.addf %414, %415 : vector<1x128xf32>
      %cst_335 = arith.constant 0.000000e+00 : f32
      %417 = vector.broadcast %cst_335 : f32 to vector<1x128xf32>
      %418 = arith.maximumf %416, %417 : vector<1x128xf32>
      %419 = arith.truncf %418 : vector<1x128xf32> to vector<1x128xbf16>
      %c0_336 = arith.constant 0 : index
      %c0_337 = arith.constant 0 : index
      %420 = vector.load %arg6[%c0_336, %c0_337] : memref<128x128xbf16, #tpu.memory_space<vmem>>, vector<128x128xbf16>
      %cst_338 = arith.constant dense<0.000000e+00> : vector<1x128xf32>
      %421 = tpu.matmul %419, %420, %cst_338 {dimension_numbers = #tpu.dot_dimension_numbers<[1], [0], [0], [1], [0, 0, 1, 1], [], []>} : vector<1x128xbf16>, vector<128x128xbf16>, vector<1x128xf32> -> vector<1x128xf32>
      %c0_339 = arith.constant 0 : index
      %c0_340 = arith.constant 0 : index
      %422 = vector.load %arg9[%c0_339, %c0_340] : memref<1x128xf32, #tpu.memory_space<vmem>>, vector<1x128xf32>
      %423 = arith.addf %421, %422 : vector<1x128xf32>
      %424 = vector.extract_strided_slice %366 {offsets = [3, 0], sizes = [1, 128], strides = [1, 1]} : vector<8x128xf32> to vector<1x128xf32>
      %425 = arith.truncf %423 : vector<1x128xf32> to vector<1x128xbf16>
      %c0_341 = arith.constant 0 : index
      %c0_342 = arith.constant 0 : index
      %426 = vector.load %arg3[%c0_341, %c0_342] : memref<128x128xbf16, #tpu.memory_space<vmem>>, vector<128x128xbf16>
      %cst_343 = arith.constant dense<0.000000e+00> : vector<1x128xf32>
      %427 = tpu.matmul %425, %426, %cst_343 {dimension_numbers = #tpu.dot_dimension_numbers<[1], [0], [0], [1], [0, 0, 1, 1], [], []>} : vector<1x128xbf16>, vector<128x128xbf16>, vector<1x128xf32> -> vector<1x128xf32>
      %428 = arith.addf %427, %424 : vector<1x128xf32>
      %cst_344 = arith.constant 0.000000e+00 : f32
      %429 = vector.broadcast %cst_344 : f32 to vector<1x128xf32>
      %430 = arith.maximumf %428, %429 : vector<1x128xf32>
      %431 = arith.truncf %430 : vector<1x128xf32> to vector<1x128xbf16>
      %c0_345 = arith.constant 0 : index
      %c0_346 = arith.constant 0 : index
      %432 = vector.load %arg5[%c0_345, %c0_346] : memref<128x128xbf16, #tpu.memory_space<vmem>>, vector<128x128xbf16>
      %cst_347 = arith.constant dense<0.000000e+00> : vector<1x128xf32>
      %433 = tpu.matmul %431, %432, %cst_347 {dimension_numbers = #tpu.dot_dimension_numbers<[1], [0], [0], [1], [0, 0, 1, 1], [], []>} : vector<1x128xbf16>, vector<128x128xbf16>, vector<1x128xf32> -> vector<1x128xf32>
      %c0_348 = arith.constant 0 : index
      %c0_349 = arith.constant 0 : index
      %434 = vector.load %arg8[%c0_348, %c0_349] : memref<1x128xf32, #tpu.memory_space<vmem>>, vector<1x128xf32>
      %435 = arith.addf %433, %434 : vector<1x128xf32>
      %cst_350 = arith.constant 0.000000e+00 : f32
      %436 = vector.broadcast %cst_350 : f32 to vector<1x128xf32>
      %437 = arith.maximumf %435, %436 : vector<1x128xf32>
      %438 = arith.truncf %437 : vector<1x128xf32> to vector<1x128xbf16>
      %c0_351 = arith.constant 0 : index
      %c0_352 = arith.constant 0 : index
      %439 = vector.load %arg6[%c0_351, %c0_352] : memref<128x128xbf16, #tpu.memory_space<vmem>>, vector<128x128xbf16>
      %cst_353 = arith.constant dense<0.000000e+00> : vector<1x128xf32>
      %440 = tpu.matmul %438, %439, %cst_353 {dimension_numbers = #tpu.dot_dimension_numbers<[1], [0], [0], [1], [0, 0, 1, 1], [], []>} : vector<1x128xbf16>, vector<128x128xbf16>, vector<1x128xf32> -> vector<1x128xf32>
      %c0_354 = arith.constant 0 : index
      %c0_355 = arith.constant 0 : index
      %441 = vector.load %arg9[%c0_354, %c0_355] : memref<1x128xf32, #tpu.memory_space<vmem>>, vector<1x128xf32>
      %442 = arith.addf %440, %441 : vector<1x128xf32>
      %443 = vector.extract_strided_slice %366 {offsets = [4, 0], sizes = [1, 128], strides = [1, 1]} : vector<8x128xf32> to vector<1x128xf32>
      %444 = arith.truncf %442 : vector<1x128xf32> to vector<1x128xbf16>
      %c0_356 = arith.constant 0 : index
      %c0_357 = arith.constant 0 : index
      %445 = vector.load %arg3[%c0_356, %c0_357] : memref<128x128xbf16, #tpu.memory_space<vmem>>, vector<128x128xbf16>
      %cst_358 = arith.constant dense<0.000000e+00> : vector<1x128xf32>
      %446 = tpu.matmul %444, %445, %cst_358 {dimension_numbers = #tpu.dot_dimension_numbers<[1], [0], [0], [1], [0, 0, 1, 1], [], []>} : vector<1x128xbf16>, vector<128x128xbf16>, vector<1x128xf32> -> vector<1x128xf32>
      %447 = arith.addf %446, %443 : vector<1x128xf32>
      %cst_359 = arith.constant 0.000000e+00 : f32
      %448 = vector.broadcast %cst_359 : f32 to vector<1x128xf32>
      %449 = arith.maximumf %447, %448 : vector<1x128xf32>
      %450 = arith.truncf %449 : vector<1x128xf32> to vector<1x128xbf16>
      %c0_360 = arith.constant 0 : index
      %c0_361 = arith.constant 0 : index
      %451 = vector.load %arg5[%c0_360, %c0_361] : memref<128x128xbf16, #tpu.memory_space<vmem>>, vector<128x128xbf16>
      %cst_362 = arith.constant dense<0.000000e+00> : vector<1x128xf32>
      %452 = tpu.matmul %450, %451, %cst_362 {dimension_numbers = #tpu.dot_dimension_numbers<[1], [0], [0], [1], [0, 0, 1, 1], [], []>} : vector<1x128xbf16>, vector<128x128xbf16>, vector<1x128xf32> -> vector<1x128xf32>
      %c0_363 = arith.constant 0 : index
      %c0_364 = arith.constant 0 : index
      %453 = vector.load %arg8[%c0_363, %c0_364] : memref<1x128xf32, #tpu.memory_space<vmem>>, vector<1x128xf32>
      %454 = arith.addf %452, %453 : vector<1x128xf32>
      %cst_365 = arith.constant 0.000000e+00 : f32
      %455 = vector.broadcast %cst_365 : f32 to vector<1x128xf32>
      %456 = arith.maximumf %454, %455 : vector<1x128xf32>
      %457 = arith.truncf %456 : vector<1x128xf32> to vector<1x128xbf16>
      %c0_366 = arith.constant 0 : index
      %c0_367 = arith.constant 0 : index
      %458 = vector.load %arg6[%c0_366, %c0_367] : memref<128x128xbf16, #tpu.memory_space<vmem>>, vector<128x128xbf16>
      %cst_368 = arith.constant dense<0.000000e+00> : vector<1x128xf32>
      %459 = tpu.matmul %457, %458, %cst_368 {dimension_numbers = #tpu.dot_dimension_numbers<[1], [0], [0], [1], [0, 0, 1, 1], [], []>} : vector<1x128xbf16>, vector<128x128xbf16>, vector<1x128xf32> -> vector<1x128xf32>
      %c0_369 = arith.constant 0 : index
      %c0_370 = arith.constant 0 : index
      %460 = vector.load %arg9[%c0_369, %c0_370] : memref<1x128xf32, #tpu.memory_space<vmem>>, vector<1x128xf32>
      %461 = arith.addf %459, %460 : vector<1x128xf32>
      %462 = vector.extract_strided_slice %366 {offsets = [5, 0], sizes = [1, 128], strides = [1, 1]} : vector<8x128xf32> to vector<1x128xf32>
      %463 = arith.truncf %461 : vector<1x128xf32> to vector<1x128xbf16>
      %c0_371 = arith.constant 0 : index
      %c0_372 = arith.constant 0 : index
      %464 = vector.load %arg3[%c0_371, %c0_372] : memref<128x128xbf16, #tpu.memory_space<vmem>>, vector<128x128xbf16>
      %cst_373 = arith.constant dense<0.000000e+00> : vector<1x128xf32>
      %465 = tpu.matmul %463, %464, %cst_373 {dimension_numbers = #tpu.dot_dimension_numbers<[1], [0], [0], [1], [0, 0, 1, 1], [], []>} : vector<1x128xbf16>, vector<128x128xbf16>, vector<1x128xf32> -> vector<1x128xf32>
      %466 = arith.addf %465, %462 : vector<1x128xf32>
      %cst_374 = arith.constant 0.000000e+00 : f32
      %467 = vector.broadcast %cst_374 : f32 to vector<1x128xf32>
      %468 = arith.maximumf %466, %467 : vector<1x128xf32>
      %469 = arith.truncf %468 : vector<1x128xf32> to vector<1x128xbf16>
      %c0_375 = arith.constant 0 : index
      %c0_376 = arith.constant 0 : index
      %470 = vector.load %arg5[%c0_375, %c0_376] : memref<128x128xbf16, #tpu.memory_space<vmem>>, vector<128x128xbf16>
      %cst_377 = arith.constant dense<0.000000e+00> : vector<1x128xf32>
      %471 = tpu.matmul %469, %470, %cst_377 {dimension_numbers = #tpu.dot_dimension_numbers<[1], [0], [0], [1], [0, 0, 1, 1], [], []>} : vector<1x128xbf16>, vector<128x128xbf16>, vector<1x128xf32> -> vector<1x128xf32>
      %c0_378 = arith.constant 0 : index
      %c0_379 = arith.constant 0 : index
      %472 = vector.load %arg8[%c0_378, %c0_379] : memref<1x128xf32, #tpu.memory_space<vmem>>, vector<1x128xf32>
      %473 = arith.addf %471, %472 : vector<1x128xf32>
      %cst_380 = arith.constant 0.000000e+00 : f32
      %474 = vector.broadcast %cst_380 : f32 to vector<1x128xf32>
      %475 = arith.maximumf %473, %474 : vector<1x128xf32>
      %476 = arith.truncf %475 : vector<1x128xf32> to vector<1x128xbf16>
      %c0_381 = arith.constant 0 : index
      %c0_382 = arith.constant 0 : index
      %477 = vector.load %arg6[%c0_381, %c0_382] : memref<128x128xbf16, #tpu.memory_space<vmem>>, vector<128x128xbf16>
      %cst_383 = arith.constant dense<0.000000e+00> : vector<1x128xf32>
      %478 = tpu.matmul %476, %477, %cst_383 {dimension_numbers = #tpu.dot_dimension_numbers<[1], [0], [0], [1], [0, 0, 1, 1], [], []>} : vector<1x128xbf16>, vector<128x128xbf16>, vector<1x128xf32> -> vector<1x128xf32>
      %c0_384 = arith.constant 0 : index
      %c0_385 = arith.constant 0 : index
      %479 = vector.load %arg9[%c0_384, %c0_385] : memref<1x128xf32, #tpu.memory_space<vmem>>, vector<1x128xf32>
      %480 = arith.addf %478, %479 : vector<1x128xf32>
      %481 = vector.extract_strided_slice %366 {offsets = [6, 0], sizes = [1, 128], strides = [1, 1]} : vector<8x128xf32> to vector<1x128xf32>
      %482 = arith.truncf %480 : vector<1x128xf32> to vector<1x128xbf16>
      %c0_386 = arith.constant 0 : index
      %c0_387 = arith.constant 0 : index
      %483 = vector.load %arg3[%c0_386, %c0_387] : memref<128x128xbf16, #tpu.memory_space<vmem>>, vector<128x128xbf16>
      %cst_388 = arith.constant dense<0.000000e+00> : vector<1x128xf32>
      %484 = tpu.matmul %482, %483, %cst_388 {dimension_numbers = #tpu.dot_dimension_numbers<[1], [0], [0], [1], [0, 0, 1, 1], [], []>} : vector<1x128xbf16>, vector<128x128xbf16>, vector<1x128xf32> -> vector<1x128xf32>
      %485 = arith.addf %484, %481 : vector<1x128xf32>
      %cst_389 = arith.constant 0.000000e+00 : f32
      %486 = vector.broadcast %cst_389 : f32 to vector<1x128xf32>
      %487 = arith.maximumf %485, %486 : vector<1x128xf32>
      %488 = arith.truncf %487 : vector<1x128xf32> to vector<1x128xbf16>
      %c0_390 = arith.constant 0 : index
      %c0_391 = arith.constant 0 : index
      %489 = vector.load %arg5[%c0_390, %c0_391] : memref<128x128xbf16, #tpu.memory_space<vmem>>, vector<128x128xbf16>
      %cst_392 = arith.constant dense<0.000000e+00> : vector<1x128xf32>
      %490 = tpu.matmul %488, %489, %cst_392 {dimension_numbers = #tpu.dot_dimension_numbers<[1], [0], [0], [1], [0, 0, 1, 1], [], []>} : vector<1x128xbf16>, vector<128x128xbf16>, vector<1x128xf32> -> vector<1x128xf32>
      %c0_393 = arith.constant 0 : index
      %c0_394 = arith.constant 0 : index
      %491 = vector.load %arg8[%c0_393, %c0_394] : memref<1x128xf32, #tpu.memory_space<vmem>>, vector<1x128xf32>
      %492 = arith.addf %490, %491 : vector<1x128xf32>
      %cst_395 = arith.constant 0.000000e+00 : f32
      %493 = vector.broadcast %cst_395 : f32 to vector<1x128xf32>
      %494 = arith.maximumf %492, %493 : vector<1x128xf32>
      %495 = arith.truncf %494 : vector<1x128xf32> to vector<1x128xbf16>
      %c0_396 = arith.constant 0 : index
      %c0_397 = arith.constant 0 : index
      %496 = vector.load %arg6[%c0_396, %c0_397] : memref<128x128xbf16, #tpu.memory_space<vmem>>, vector<128x128xbf16>
      %cst_398 = arith.constant dense<0.000000e+00> : vector<1x128xf32>
      %497 = tpu.matmul %495, %496, %cst_398 {dimension_numbers = #tpu.dot_dimension_numbers<[1], [0], [0], [1], [0, 0, 1, 1], [], []>} : vector<1x128xbf16>, vector<128x128xbf16>, vector<1x128xf32> -> vector<1x128xf32>
      %c0_399 = arith.constant 0 : index
      %c0_400 = arith.constant 0 : index
      %498 = vector.load %arg9[%c0_399, %c0_400] : memref<1x128xf32, #tpu.memory_space<vmem>>, vector<1x128xf32>
      %499 = arith.addf %497, %498 : vector<1x128xf32>
      %500 = vector.extract_strided_slice %366 {offsets = [7, 0], sizes = [1, 128], strides = [1, 1]} : vector<8x128xf32> to vector<1x128xf32>
      %501 = arith.truncf %499 : vector<1x128xf32> to vector<1x128xbf16>
      %c0_401 = arith.constant 0 : index
      %c0_402 = arith.constant 0 : index
      %502 = vector.load %arg3[%c0_401, %c0_402] : memref<128x128xbf16, #tpu.memory_space<vmem>>, vector<128x128xbf16>
      %cst_403 = arith.constant dense<0.000000e+00> : vector<1x128xf32>
      %503 = tpu.matmul %501, %502, %cst_403 {dimension_numbers = #tpu.dot_dimension_numbers<[1], [0], [0], [1], [0, 0, 1, 1], [], []>} : vector<1x128xbf16>, vector<128x128xbf16>, vector<1x128xf32> -> vector<1x128xf32>
      %504 = arith.addf %503, %500 : vector<1x128xf32>
      %cst_404 = arith.constant 0.000000e+00 : f32
      %505 = vector.broadcast %cst_404 : f32 to vector<1x128xf32>
      %506 = arith.maximumf %504, %505 : vector<1x128xf32>
      %507 = arith.truncf %506 : vector<1x128xf32> to vector<1x128xbf16>
      %c0_405 = arith.constant 0 : index
      %c0_406 = arith.constant 0 : index
      %508 = vector.load %arg5[%c0_405, %c0_406] : memref<128x128xbf16, #tpu.memory_space<vmem>>, vector<128x128xbf16>
      %cst_407 = arith.constant dense<0.000000e+00> : vector<1x128xf32>
      %509 = tpu.matmul %507, %508, %cst_407 {dimension_numbers = #tpu.dot_dimension_numbers<[1], [0], [0], [1], [0, 0, 1, 1], [], []>} : vector<1x128xbf16>, vector<128x128xbf16>, vector<1x128xf32> -> vector<1x128xf32>
      %c0_408 = arith.constant 0 : index
      %c0_409 = arith.constant 0 : index
      %510 = vector.load %arg8[%c0_408, %c0_409] : memref<1x128xf32, #tpu.memory_space<vmem>>, vector<1x128xf32>
      %511 = arith.addf %509, %510 : vector<1x128xf32>
      %cst_410 = arith.constant 0.000000e+00 : f32
      %512 = vector.broadcast %cst_410 : f32 to vector<1x128xf32>
      %513 = arith.maximumf %511, %512 : vector<1x128xf32>
      %514 = arith.truncf %513 : vector<1x128xf32> to vector<1x128xbf16>
      %c0_411 = arith.constant 0 : index
      %c0_412 = arith.constant 0 : index
      %515 = vector.load %arg6[%c0_411, %c0_412] : memref<128x128xbf16, #tpu.memory_space<vmem>>, vector<128x128xbf16>
      %cst_413 = arith.constant dense<0.000000e+00> : vector<1x128xf32>
      %516 = tpu.matmul %514, %515, %cst_413 {dimension_numbers = #tpu.dot_dimension_numbers<[1], [0], [0], [1], [0, 0, 1, 1], [], []>} : vector<1x128xbf16>, vector<128x128xbf16>, vector<1x128xf32> -> vector<1x128xf32>
      %c0_414 = arith.constant 0 : index
      %c0_415 = arith.constant 0 : index
      %517 = vector.load %arg9[%c0_414, %c0_415] : memref<1x128xf32, #tpu.memory_space<vmem>>, vector<1x128xf32>
      %518 = arith.addf %516, %517 : vector<1x128xf32>
      %519 = tpu.concatenate %385, %404, %423, %442, %461, %480, %499, %518 in 0 : vector<1x128xf32>, vector<1x128xf32>, vector<1x128xf32>, vector<1x128xf32>, vector<1x128xf32>, vector<1x128xf32>, vector<1x128xf32>, vector<1x128xf32> -> vector<8x128xf32>
      %520 = arith.index_cast %364 : i32 to index
      %c0_416 = arith.constant 0 : index
      %521 = vector.load %arg30[%520, %c0_416] : memref<96x128xf32, #tpu.memory_space<vmem>>, vector<8x128xf32>
      tpu.vector_store %arg30[%520, %c0_416], %519 {strides = array<i32>} : memref<96x128xf32, #tpu.memory_space<vmem>>, vector<8x128xf32>,
      %c8_i32 = arith.constant 8 : i32
      %522 = arith.addi %364, %c8_i32 : i32
      %523 = arith.index_cast %522 : i32 to index
      %c0_417 = arith.constant 0 : index
      %524 = vector.load %arg31[%523, %c0_417] : memref<96x128xf32, #tpu.memory_space<vmem>>, vector<8x128xf32>
      %525 = vector.extract_strided_slice %524 {offsets = [0, 0], sizes = [1, 128], strides = [1, 1]} : vector<8x128xf32> to vector<1x128xf32>
      %526 = arith.truncf %518 : vector<1x128xf32> to vector<1x128xbf16>
      %c0_418 = arith.constant 0 : index
      %c0_419 = arith.constant 0 : index
      %527 = vector.load %arg3[%c0_418, %c0_419] : memref<128x128xbf16, #tpu.memory_space<vmem>>, vector<128x128xbf16>
      %cst_420 = arith.constant dense<0.000000e+00> : vector<1x128xf32>
      %528 = tpu.matmul %526, %527, %cst_420 {dimension_numbers = #tpu.dot_dimension_numbers<[1], [0], [0], [1], [0, 0, 1, 1], [], []>} : vector<1x128xbf16>, vector<128x128xbf16>, vector<1x128xf32> -> vector<1x128xf32>
      %529 = arith.addf %528, %525 : vector<1x128xf32>
      %cst_421 = arith.constant 0.000000e+00 : f32
      %530 = vector.broadcast %cst_421 : f32 to vector<1x128xf32>
      %531 = arith.maximumf %529, %530 : vector<1x128xf32>
      %532 = arith.truncf %531 : vector<1x128xf32> to vector<1x128xbf16>
      %c0_422 = arith.constant 0 : index
      %c0_423 = arith.constant 0 : index
      %533 = vector.load %arg5[%c0_422, %c0_423] : memref<128x128xbf16, #tpu.memory_space<vmem>>, vector<128x128xbf16>
      %cst_424 = arith.constant dense<0.000000e+00> : vector<1x128xf32>
      %534 = tpu.matmul %532, %533, %cst_424 {dimension_numbers = #tpu.dot_dimension_numbers<[1], [0], [0], [1], [0, 0, 1, 1], [], []>} : vector<1x128xbf16>, vector<128x128xbf16>, vector<1x128xf32> -> vector<1x128xf32>
      %c0_425 = arith.constant 0 : index
      %c0_426 = arith.constant 0 : index
      %535 = vector.load %arg8[%c0_425, %c0_426] : memref<1x128xf32, #tpu.memory_space<vmem>>, vector<1x128xf32>
      %536 = arith.addf %534, %535 : vector<1x128xf32>
      %cst_427 = arith.constant 0.000000e+00 : f32
      %537 = vector.broadcast %cst_427 : f32 to vector<1x128xf32>
      %538 = arith.maximumf %536, %537 : vector<1x128xf32>
      %539 = arith.truncf %538 : vector<1x128xf32> to vector<1x128xbf16>
      %c0_428 = arith.constant 0 : index
      %c0_429 = arith.constant 0 : index
      %540 = vector.load %arg6[%c0_428, %c0_429] : memref<128x128xbf16, #tpu.memory_space<vmem>>, vector<128x128xbf16>
      %cst_430 = arith.constant dense<0.000000e+00> : vector<1x128xf32>
      %541 = tpu.matmul %539, %540, %cst_430 {dimension_numbers = #tpu.dot_dimension_numbers<[1], [0], [0], [1], [0, 0, 1, 1], [], []>} : vector<1x128xbf16>, vector<128x128xbf16>, vector<1x128xf32> -> vector<1x128xf32>
      %c0_431 = arith.constant 0 : index
      %c0_432 = arith.constant 0 : index
      %542 = vector.load %arg9[%c0_431, %c0_432] : memref<1x128xf32, #tpu.memory_space<vmem>>, vector<1x128xf32>
      %543 = arith.addf %541, %542 : vector<1x128xf32>
      %544 = vector.extract_strided_slice %524 {offsets = [1, 0], sizes = [1, 128], strides = [1, 1]} : vector<8x128xf32> to vector<1x128xf32>
      %545 = arith.truncf %543 : vector<1x128xf32> to vector<1x128xbf16>
      %c0_433 = arith.constant 0 : index
      %c0_434 = arith.constant 0 : index
      %546 = vector.load %arg3[%c0_433, %c0_434] : memref<128x128xbf16, #tpu.memory_space<vmem>>, vector<128x128xbf16>
      %cst_435 = arith.constant dense<0.000000e+00> : vector<1x128xf32>
      %547 = tpu.matmul %545, %546, %cst_435 {dimension_numbers = #tpu.dot_dimension_numbers<[1], [0], [0], [1], [0, 0, 1, 1], [], []>} : vector<1x128xbf16>, vector<128x128xbf16>, vector<1x128xf32> -> vector<1x128xf32>
      %548 = arith.addf %547, %544 : vector<1x128xf32>
      %cst_436 = arith.constant 0.000000e+00 : f32
      %549 = vector.broadcast %cst_436 : f32 to vector<1x128xf32>
      %550 = arith.maximumf %548, %549 : vector<1x128xf32>
      %551 = arith.truncf %550 : vector<1x128xf32> to vector<1x128xbf16>
      %c0_437 = arith.constant 0 : index
      %c0_438 = arith.constant 0 : index
      %552 = vector.load %arg5[%c0_437, %c0_438] : memref<128x128xbf16, #tpu.memory_space<vmem>>, vector<128x128xbf16>
      %cst_439 = arith.constant dense<0.000000e+00> : vector<1x128xf32>
      %553 = tpu.matmul %551, %552, %cst_439 {dimension_numbers = #tpu.dot_dimension_numbers<[1], [0], [0], [1], [0, 0, 1, 1], [], []>} : vector<1x128xbf16>, vector<128x128xbf16>, vector<1x128xf32> -> vector<1x128xf32>
      %c0_440 = arith.constant 0 : index
      %c0_441 = arith.constant 0 : index
      %554 = vector.load %arg8[%c0_440, %c0_441] : memref<1x128xf32, #tpu.memory_space<vmem>>, vector<1x128xf32>
      %555 = arith.addf %553, %554 : vector<1x128xf32>
      %cst_442 = arith.constant 0.000000e+00 : f32
      %556 = vector.broadcast %cst_442 : f32 to vector<1x128xf32>
      %557 = arith.maximumf %555, %556 : vector<1x128xf32>
      %558 = arith.truncf %557 : vector<1x128xf32> to vector<1x128xbf16>
      %c0_443 = arith.constant 0 : index
      %c0_444 = arith.constant 0 : index
      %559 = vector.load %arg6[%c0_443, %c0_444] : memref<128x128xbf16, #tpu.memory_space<vmem>>, vector<128x128xbf16>
      %cst_445 = arith.constant dense<0.000000e+00> : vector<1x128xf32>
      %560 = tpu.matmul %558, %559, %cst_445 {dimension_numbers = #tpu.dot_dimension_numbers<[1], [0], [0], [1], [0, 0, 1, 1], [], []>} : vector<1x128xbf16>, vector<128x128xbf16>, vector<1x128xf32> -> vector<1x128xf32>
      %c0_446 = arith.constant 0 : index
      %c0_447 = arith.constant 0 : index
      %561 = vector.load %arg9[%c0_446, %c0_447] : memref<1x128xf32, #tpu.memory_space<vmem>>, vector<1x128xf32>
      %562 = arith.addf %560, %561 : vector<1x128xf32>
      %563 = vector.extract_strided_slice %524 {offsets = [2, 0], sizes = [1, 128], strides = [1, 1]} : vector<8x128xf32> to vector<1x128xf32>
      %564 = arith.truncf %562 : vector<1x128xf32> to vector<1x128xbf16>
      %c0_448 = arith.constant 0 : index
      %c0_449 = arith.constant 0 : index
      %565 = vector.load %arg3[%c0_448, %c0_449] : memref<128x128xbf16, #tpu.memory_space<vmem>>, vector<128x128xbf16>
      %cst_450 = arith.constant dense<0.000000e+00> : vector<1x128xf32>
      %566 = tpu.matmul %564, %565, %cst_450 {dimension_numbers = #tpu.dot_dimension_numbers<[1], [0], [0], [1], [0, 0, 1, 1], [], []>} : vector<1x128xbf16>, vector<128x128xbf16>, vector<1x128xf32> -> vector<1x128xf32>
      %567 = arith.addf %566, %563 : vector<1x128xf32>
      %cst_451 = arith.constant 0.000000e+00 : f32
      %568 = vector.broadcast %cst_451 : f32 to vector<1x128xf32>
      %569 = arith.maximumf %567, %568 : vector<1x128xf32>
      %570 = arith.truncf %569 : vector<1x128xf32> to vector<1x128xbf16>
      %c0_452 = arith.constant 0 : index
      %c0_453 = arith.constant 0 : index
      %571 = vector.load %arg5[%c0_452, %c0_453] : memref<128x128xbf16, #tpu.memory_space<vmem>>, vector<128x128xbf16>
      %cst_454 = arith.constant dense<0.000000e+00> : vector<1x128xf32>
      %572 = tpu.matmul %570, %571, %cst_454 {dimension_numbers = #tpu.dot_dimension_numbers<[1], [0], [0], [1], [0, 0, 1, 1], [], []>} : vector<1x128xbf16>, vector<128x128xbf16>, vector<1x128xf32> -> vector<1x128xf32>
      %c0_455 = arith.constant 0 : index
      %c0_456 = arith.constant 0 : index
      %573 = vector.load %arg8[%c0_455, %c0_456] : memref<1x128xf32, #tpu.memory_space<vmem>>, vector<1x128xf32>
      %574 = arith.addf %572, %573 : vector<1x128xf32>
      %cst_457 = arith.constant 0.000000e+00 : f32
      %575 = vector.broadcast %cst_457 : f32 to vector<1x128xf32>
      %576 = arith.maximumf %574, %575 : vector<1x128xf32>
      %577 = arith.truncf %576 : vector<1x128xf32> to vector<1x128xbf16>
      %c0_458 = arith.constant 0 : index
      %c0_459 = arith.constant 0 : index
      %578 = vector.load %arg6[%c0_458, %c0_459] : memref<128x128xbf16, #tpu.memory_space<vmem>>, vector<128x128xbf16>
      %cst_460 = arith.constant dense<0.000000e+00> : vector<1x128xf32>
      %579 = tpu.matmul %577, %578, %cst_460 {dimension_numbers = #tpu.dot_dimension_numbers<[1], [0], [0], [1], [0, 0, 1, 1], [], []>} : vector<1x128xbf16>, vector<128x128xbf16>, vector<1x128xf32> -> vector<1x128xf32>
      %c0_461 = arith.constant 0 : index
      %c0_462 = arith.constant 0 : index
      %580 = vector.load %arg9[%c0_461, %c0_462] : memref<1x128xf32, #tpu.memory_space<vmem>>, vector<1x128xf32>
      %581 = arith.addf %579, %580 : vector<1x128xf32>
      %582 = vector.extract_strided_slice %524 {offsets = [3, 0], sizes = [1, 128], strides = [1, 1]} : vector<8x128xf32> to vector<1x128xf32>
      %583 = arith.truncf %581 : vector<1x128xf32> to vector<1x128xbf16>
      %c0_463 = arith.constant 0 : index
      %c0_464 = arith.constant 0 : index
      %584 = vector.load %arg3[%c0_463, %c0_464] : memref<128x128xbf16, #tpu.memory_space<vmem>>, vector<128x128xbf16>
      %cst_465 = arith.constant dense<0.000000e+00> : vector<1x128xf32>
      %585 = tpu.matmul %583, %584, %cst_465 {dimension_numbers = #tpu.dot_dimension_numbers<[1], [0], [0], [1], [0, 0, 1, 1], [], []>} : vector<1x128xbf16>, vector<128x128xbf16>, vector<1x128xf32> -> vector<1x128xf32>
      %586 = arith.addf %585, %582 : vector<1x128xf32>
      %cst_466 = arith.constant 0.000000e+00 : f32
      %587 = vector.broadcast %cst_466 : f32 to vector<1x128xf32>
      %588 = arith.maximumf %586, %587 : vector<1x128xf32>
      %589 = arith.truncf %588 : vector<1x128xf32> to vector<1x128xbf16>
      %c0_467 = arith.constant 0 : index
      %c0_468 = arith.constant 0 : index
      %590 = vector.load %arg5[%c0_467, %c0_468] : memref<128x128xbf16, #tpu.memory_space<vmem>>, vector<128x128xbf16>
      %cst_469 = arith.constant dense<0.000000e+00> : vector<1x128xf32>
      %591 = tpu.matmul %589, %590, %cst_469 {dimension_numbers = #tpu.dot_dimension_numbers<[1], [0], [0], [1], [0, 0, 1, 1], [], []>} : vector<1x128xbf16>, vector<128x128xbf16>, vector<1x128xf32> -> vector<1x128xf32>
      %c0_470 = arith.constant 0 : index
      %c0_471 = arith.constant 0 : index
      %592 = vector.load %arg8[%c0_470, %c0_471] : memref<1x128xf32, #tpu.memory_space<vmem>>, vector<1x128xf32>
      %593 = arith.addf %591, %592 : vector<1x128xf32>
      %cst_472 = arith.constant 0.000000e+00 : f32
      %594 = vector.broadcast %cst_472 : f32 to vector<1x128xf32>
      %595 = arith.maximumf %593, %594 : vector<1x128xf32>
      %596 = arith.truncf %595 : vector<1x128xf32> to vector<1x128xbf16>
      %c0_473 = arith.constant 0 : index
      %c0_474 = arith.constant 0 : index
      %597 = vector.load %arg6[%c0_473, %c0_474] : memref<128x128xbf16, #tpu.memory_space<vmem>>, vector<128x128xbf16>
      %cst_475 = arith.constant dense<0.000000e+00> : vector<1x128xf32>
      %598 = tpu.matmul %596, %597, %cst_475 {dimension_numbers = #tpu.dot_dimension_numbers<[1], [0], [0], [1], [0, 0, 1, 1], [], []>} : vector<1x128xbf16>, vector<128x128xbf16>, vector<1x128xf32> -> vector<1x128xf32>
      %c0_476 = arith.constant 0 : index
      %c0_477 = arith.constant 0 : index
      %599 = vector.load %arg9[%c0_476, %c0_477] : memref<1x128xf32, #tpu.memory_space<vmem>>, vector<1x128xf32>
      %600 = arith.addf %598, %599 : vector<1x128xf32>
      %601 = vector.extract_strided_slice %524 {offsets = [4, 0], sizes = [1, 128], strides = [1, 1]} : vector<8x128xf32> to vector<1x128xf32>
      %602 = arith.truncf %600 : vector<1x128xf32> to vector<1x128xbf16>
      %c0_478 = arith.constant 0 : index
      %c0_479 = arith.constant 0 : index
      %603 = vector.load %arg3[%c0_478, %c0_479] : memref<128x128xbf16, #tpu.memory_space<vmem>>, vector<128x128xbf16>
      %cst_480 = arith.constant dense<0.000000e+00> : vector<1x128xf32>
      %604 = tpu.matmul %602, %603, %cst_480 {dimension_numbers = #tpu.dot_dimension_numbers<[1], [0], [0], [1], [0, 0, 1, 1], [], []>} : vector<1x128xbf16>, vector<128x128xbf16>, vector<1x128xf32> -> vector<1x128xf32>
      %605 = arith.addf %604, %601 : vector<1x128xf32>
      %cst_481 = arith.constant 0.000000e+00 : f32
      %606 = vector.broadcast %cst_481 : f32 to vector<1x128xf32>
      %607 = arith.maximumf %605, %606 : vector<1x128xf32>
      %608 = arith.truncf %607 : vector<1x128xf32> to vector<1x128xbf16>
      %c0_482 = arith.constant 0 : index
      %c0_483 = arith.constant 0 : index
      %609 = vector.load %arg5[%c0_482, %c0_483] : memref<128x128xbf16, #tpu.memory_space<vmem>>, vector<128x128xbf16>
      %cst_484 = arith.constant dense<0.000000e+00> : vector<1x128xf32>
      %610 = tpu.matmul %608, %609, %cst_484 {dimension_numbers = #tpu.dot_dimension_numbers<[1], [0], [0], [1], [0, 0, 1, 1], [], []>} : vector<1x128xbf16>, vector<128x128xbf16>, vector<1x128xf32> -> vector<1x128xf32>
      %c0_485 = arith.constant 0 : index
      %c0_486 = arith.constant 0 : index
      %611 = vector.load %arg8[%c0_485, %c0_486] : memref<1x128xf32, #tpu.memory_space<vmem>>, vector<1x128xf32>
      %612 = arith.addf %610, %611 : vector<1x128xf32>
      %cst_487 = arith.constant 0.000000e+00 : f32
      %613 = vector.broadcast %cst_487 : f32 to vector<1x128xf32>
      %614 = arith.maximumf %612, %613 : vector<1x128xf32>
      %615 = arith.truncf %614 : vector<1x128xf32> to vector<1x128xbf16>
      %c0_488 = arith.constant 0 : index
      %c0_489 = arith.constant 0 : index
      %616 = vector.load %arg6[%c0_488, %c0_489] : memref<128x128xbf16, #tpu.memory_space<vmem>>, vector<128x128xbf16>
      %cst_490 = arith.constant dense<0.000000e+00> : vector<1x128xf32>
      %617 = tpu.matmul %615, %616, %cst_490 {dimension_numbers = #tpu.dot_dimension_numbers<[1], [0], [0], [1], [0, 0, 1, 1], [], []>} : vector<1x128xbf16>, vector<128x128xbf16>, vector<1x128xf32> -> vector<1x128xf32>
      %c0_491 = arith.constant 0 : index
      %c0_492 = arith.constant 0 : index
      %618 = vector.load %arg9[%c0_491, %c0_492] : memref<1x128xf32, #tpu.memory_space<vmem>>, vector<1x128xf32>
      %619 = arith.addf %617, %618 : vector<1x128xf32>
      %620 = vector.extract_strided_slice %524 {offsets = [5, 0], sizes = [1, 128], strides = [1, 1]} : vector<8x128xf32> to vector<1x128xf32>
      %621 = arith.truncf %619 : vector<1x128xf32> to vector<1x128xbf16>
      %c0_493 = arith.constant 0 : index
      %c0_494 = arith.constant 0 : index
      %622 = vector.load %arg3[%c0_493, %c0_494] : memref<128x128xbf16, #tpu.memory_space<vmem>>, vector<128x128xbf16>
      %cst_495 = arith.constant dense<0.000000e+00> : vector<1x128xf32>
      %623 = tpu.matmul %621, %622, %cst_495 {dimension_numbers = #tpu.dot_dimension_numbers<[1], [0], [0], [1], [0, 0, 1, 1], [], []>} : vector<1x128xbf16>, vector<128x128xbf16>, vector<1x128xf32> -> vector<1x128xf32>
      %624 = arith.addf %623, %620 : vector<1x128xf32>
      %cst_496 = arith.constant 0.000000e+00 : f32
      %625 = vector.broadcast %cst_496 : f32 to vector<1x128xf32>
      %626 = arith.maximumf %624, %625 : vector<1x128xf32>
      %627 = arith.truncf %626 : vector<1x128xf32> to vector<1x128xbf16>
      %c0_497 = arith.constant 0 : index
      %c0_498 = arith.constant 0 : index
      %628 = vector.load %arg5[%c0_497, %c0_498] : memref<128x128xbf16, #tpu.memory_space<vmem>>, vector<128x128xbf16>
      %cst_499 = arith.constant dense<0.000000e+00> : vector<1x128xf32>
      %629 = tpu.matmul %627, %628, %cst_499 {dimension_numbers = #tpu.dot_dimension_numbers<[1], [0], [0], [1], [0, 0, 1, 1], [], []>} : vector<1x128xbf16>, vector<128x128xbf16>, vector<1x128xf32> -> vector<1x128xf32>
      %c0_500 = arith.constant 0 : index
      %c0_501 = arith.constant 0 : index
      %630 = vector.load %arg8[%c0_500, %c0_501] : memref<1x128xf32, #tpu.memory_space<vmem>>, vector<1x128xf32>
      %631 = arith.addf %629, %630 : vector<1x128xf32>
      %cst_502 = arith.constant 0.000000e+00 : f32
      %632 = vector.broadcast %cst_502 : f32 to vector<1x128xf32>
      %633 = arith.maximumf %631, %632 : vector<1x128xf32>
      %634 = arith.truncf %633 : vector<1x128xf32> to vector<1x128xbf16>
      %c0_503 = arith.constant 0 : index
      %c0_504 = arith.constant 0 : index
      %635 = vector.load %arg6[%c0_503, %c0_504] : memref<128x128xbf16, #tpu.memory_space<vmem>>, vector<128x128xbf16>
      %cst_505 = arith.constant dense<0.000000e+00> : vector<1x128xf32>
      %636 = tpu.matmul %634, %635, %cst_505 {dimension_numbers = #tpu.dot_dimension_numbers<[1], [0], [0], [1], [0, 0, 1, 1], [], []>} : vector<1x128xbf16>, vector<128x128xbf16>, vector<1x128xf32> -> vector<1x128xf32>
      %c0_506 = arith.constant 0 : index
      %c0_507 = arith.constant 0 : index
      %637 = vector.load %arg9[%c0_506, %c0_507] : memref<1x128xf32, #tpu.memory_space<vmem>>, vector<1x128xf32>
      %638 = arith.addf %636, %637 : vector<1x128xf32>
      %639 = vector.extract_strided_slice %524 {offsets = [6, 0], sizes = [1, 128], strides = [1, 1]} : vector<8x128xf32> to vector<1x128xf32>
      %640 = arith.truncf %638 : vector<1x128xf32> to vector<1x128xbf16>
      %c0_508 = arith.constant 0 : index
      %c0_509 = arith.constant 0 : index
      %641 = vector.load %arg3[%c0_508, %c0_509] : memref<128x128xbf16, #tpu.memory_space<vmem>>, vector<128x128xbf16>
      %cst_510 = arith.constant dense<0.000000e+00> : vector<1x128xf32>
      %642 = tpu.matmul %640, %641, %cst_510 {dimension_numbers = #tpu.dot_dimension_numbers<[1], [0], [0], [1], [0, 0, 1, 1], [], []>} : vector<1x128xbf16>, vector<128x128xbf16>, vector<1x128xf32> -> vector<1x128xf32>
      %643 = arith.addf %642, %639 : vector<1x128xf32>
      %cst_511 = arith.constant 0.000000e+00 : f32
      %644 = vector.broadcast %cst_511 : f32 to vector<1x128xf32>
      %645 = arith.maximumf %643, %644 : vector<1x128xf32>
      %646 = arith.truncf %645 : vector<1x128xf32> to vector<1x128xbf16>
      %c0_512 = arith.constant 0 : index
      %c0_513 = arith.constant 0 : index
      %647 = vector.load %arg5[%c0_512, %c0_513] : memref<128x128xbf16, #tpu.memory_space<vmem>>, vector<128x128xbf16>
      %cst_514 = arith.constant dense<0.000000e+00> : vector<1x128xf32>
      %648 = tpu.matmul %646, %647, %cst_514 {dimension_numbers = #tpu.dot_dimension_numbers<[1], [0], [0], [1], [0, 0, 1, 1], [], []>} : vector<1x128xbf16>, vector<128x128xbf16>, vector<1x128xf32> -> vector<1x128xf32>
      %c0_515 = arith.constant 0 : index
      %c0_516 = arith.constant 0 : index
      %649 = vector.load %arg8[%c0_515, %c0_516] : memref<1x128xf32, #tpu.memory_space<vmem>>, vector<1x128xf32>
      %650 = arith.addf %648, %649 : vector<1x128xf32>
      %cst_517 = arith.constant 0.000000e+00 : f32
      %651 = vector.broadcast %cst_517 : f32 to vector<1x128xf32>
      %652 = arith.maximumf %650, %651 : vector<1x128xf32>
      %653 = arith.truncf %652 : vector<1x128xf32> to vector<1x128xbf16>
      %c0_518 = arith.constant 0 : index
      %c0_519 = arith.constant 0 : index
      %654 = vector.load %arg6[%c0_518, %c0_519] : memref<128x128xbf16, #tpu.memory_space<vmem>>, vector<128x128xbf16>
      %cst_520 = arith.constant dense<0.000000e+00> : vector<1x128xf32>
      %655 = tpu.matmul %653, %654, %cst_520 {dimension_numbers = #tpu.dot_dimension_numbers<[1], [0], [0], [1], [0, 0, 1, 1], [], []>} : vector<1x128xbf16>, vector<128x128xbf16>, vector<1x128xf32> -> vector<1x128xf32>
      %c0_521 = arith.constant 0 : index
      %c0_522 = arith.constant 0 : index
      %656 = vector.load %arg9[%c0_521, %c0_522] : memref<1x128xf32, #tpu.memory_space<vmem>>, vector<1x128xf32>
      %657 = arith.addf %655, %656 : vector<1x128xf32>
      %658 = vector.extract_strided_slice %524 {offsets = [7, 0], sizes = [1, 128], strides = [1, 1]} : vector<8x128xf32> to vector<1x128xf32>
      %659 = arith.truncf %657 : vector<1x128xf32> to vector<1x128xbf16>
      %c0_523 = arith.constant 0 : index
      %c0_524 = arith.constant 0 : index
      %660 = vector.load %arg3[%c0_523, %c0_524] : memref<128x128xbf16, #tpu.memory_space<vmem>>, vector<128x128xbf16>
      %cst_525 = arith.constant dense<0.000000e+00> : vector<1x128xf32>
      %661 = tpu.matmul %659, %660, %cst_525 {dimension_numbers = #tpu.dot_dimension_numbers<[1], [0], [0], [1], [0, 0, 1, 1], [], []>} : vector<1x128xbf16>, vector<128x128xbf16>, vector<1x128xf32> -> vector<1x128xf32>
      %662 = arith.addf %661, %658 : vector<1x128xf32>
      %cst_526 = arith.constant 0.000000e+00 : f32
      %663 = vector.broadcast %cst_526 : f32 to vector<1x128xf32>
      %664 = arith.maximumf %662, %663 : vector<1x128xf32>
      %665 = arith.truncf %664 : vector<1x128xf32> to vector<1x128xbf16>
      %c0_527 = arith.constant 0 : index
      %c0_528 = arith.constant 0 : index
      %666 = vector.load %arg5[%c0_527, %c0_528] : memref<128x128xbf16, #tpu.memory_space<vmem>>, vector<128x128xbf16>
      %cst_529 = arith.constant dense<0.000000e+00> : vector<1x128xf32>
      %667 = tpu.matmul %665, %666, %cst_529 {dimension_numbers = #tpu.dot_dimension_numbers<[1], [0], [0], [1], [0, 0, 1, 1], [], []>} : vector<1x128xbf16>, vector<128x128xbf16>, vector<1x128xf32> -> vector<1x128xf32>
      %c0_530 = arith.constant 0 : index
      %c0_531 = arith.constant 0 : index
      %668 = vector.load %arg8[%c0_530, %c0_531] : memref<1x128xf32, #tpu.memory_space<vmem>>, vector<1x128xf32>
      %669 = arith.addf %667, %668 : vector<1x128xf32>
      %cst_532 = arith.constant 0.000000e+00 : f32
      %670 = vector.broadcast %cst_532 : f32 to vector<1x128xf32>
      %671 = arith.maximumf %669, %670 : vector<1x128xf32>
      %672 = arith.truncf %671 : vector<1x128xf32> to vector<1x128xbf16>
      %c0_533 = arith.constant 0 : index
      %c0_534 = arith.constant 0 : index
      %673 = vector.load %arg6[%c0_533, %c0_534] : memref<128x128xbf16, #tpu.memory_space<vmem>>, vector<128x128xbf16>
      %cst_535 = arith.constant dense<0.000000e+00> : vector<1x128xf32>
      %674 = tpu.matmul %672, %673, %cst_535 {dimension_numbers = #tpu.dot_dimension_numbers<[1], [0], [0], [1], [0, 0, 1, 1], [], []>} : vector<1x128xbf16>, vector<128x128xbf16>, vector<1x128xf32> -> vector<1x128xf32>
      %c0_536 = arith.constant 0 : index
      %c0_537 = arith.constant 0 : index
      %675 = vector.load %arg9[%c0_536, %c0_537] : memref<1x128xf32, #tpu.memory_space<vmem>>, vector<1x128xf32>
      %676 = arith.addf %674, %675 : vector<1x128xf32>
      %677 = tpu.concatenate %543, %562, %581, %600, %619, %638, %657, %676 in 0 : vector<1x128xf32>, vector<1x128xf32>, vector<1x128xf32>, vector<1x128xf32>, vector<1x128xf32>, vector<1x128xf32>, vector<1x128xf32>, vector<1x128xf32> -> vector<8x128xf32>
      %678 = arith.index_cast %522 : i32 to index
      %c0_538 = arith.constant 0 : index
      %679 = vector.load %arg30[%678, %c0_538] : memref<96x128xf32, #tpu.memory_space<vmem>>, vector<8x128xf32>
      tpu.vector_store %arg30[%678, %c0_538], %677 {strides = array<i32>} : memref<96x128xf32, #tpu.memory_space<vmem>>, vector<8x128xf32>,
      scf.yield %676 : vector<1x128xf32>
    }
    %c5_i32_269 = arith.constant 5 : i32
    %c0_270 = arith.constant 0 : index
    %c0_271 = arith.constant 0 : index
    %333 = vector.load %arg30[%c0_270, %c0_271] : memref<96x128xf32, #tpu.memory_space<vmem>>, vector<96x128xf32>
    %c0_272 = arith.constant 0 : index
    %c0_273 = arith.constant 0 : index
    %334 = vector.load %arg10[%c0_272, %c0_273] : memref<1x128xf32, #tpu.memory_space<vmem>>, vector<1x128xf32>
    %335 = vector.broadcast %334 : vector<1x128xf32> to vector<96x128xf32>
    %336 = arith.mulf %333, %335 : vector<96x128xf32>
    %c0_274 = arith.constant 0 : index
    %c0_275 = arith.constant 0 : index
    %337 = vector.load %arg11[%c0_274, %c0_275] : memref<1x128xf32, #tpu.memory_space<vmem>>, vector<1x128xf32>
    %338 = vector.broadcast %337 : vector<1x128xf32> to vector<96x128xf32>
    %339 = arith.addf %336, %338 : vector<96x128xf32>
    %c0_276 = arith.constant 0 : index
    %c0_277 = arith.constant 0 : index
    %340 = vector.load %arg14[%c0_276, %c0_277] : memref<1x128xf32, #tpu.memory_space<vmem>>, vector<1x128xf32>
    %341 = vector.broadcast %340 : vector<1x128xf32> to vector<96x128xf32>
    %342 = arith.mulf %339, %341 : vector<96x128xf32>
    %c0_278 = arith.constant 0 : index
    %c0_279 = arith.constant 0 : index
    %343 = vector.load %arg21[%c0_278, %c0_279] : memref<96x128xf32, #tpu.memory_space<vmem>>, vector<96x128xf32>
    %344 = arith.subf %342, %343 : vector<96x128xf32>
    %cst_280 = arith.constant 0.000000e+00 : f32
    %345 = vector.broadcast %cst_280 : f32 to vector<96x128xf32>
    %346 = arith.maximumf %344, %345 : vector<96x128xf32>
    %c0_281 = arith.constant 0 : index
    %c0_282 = arith.constant 0 : index
    %347 = vector.load %arg18[%c0_281, %c0_282] : memref<1x128xf32, #tpu.memory_space<vmem>>, vector<1x128xf32>
    %348 = vector.broadcast %347 : vector<1x128xf32> to vector<96x128xf32>
    %349 = arith.mulf %346, %348 : vector<96x128xf32>
    %c0_283 = arith.constant 0 : index
    %c0_284 = arith.constant 0 : index
    %350 = vector.load %arg25[%c0_283, %c0_284] : memref<96x128xf32, #tpu.memory_space<vmem>>, vector<96x128xf32>
    tpu.vector_store %arg25[%c0_283, %c0_284], %349 {strides = array<i32>} : memref<96x128xf32, #tpu.memory_space<vmem>>, vector<96x128xf32>,
    %c0_285 = arith.constant 0 : index
    %c0_286 = arith.constant 0 : index
    %351 = vector.load %arg15[%c0_285, %c0_286] : memref<1x128xf32, #tpu.memory_space<vmem>>, vector<1x128xf32>
    %352 = vector.broadcast %351 : vector<1x128xf32> to vector<96x128xf32>
    %353 = arith.mulf %339, %352 : vector<96x128xf32>
    %c0_287 = arith.constant 0 : index
    %c0_288 = arith.constant 0 : index
    %354 = vector.load %arg22[%c0_287, %c0_288] : memref<96x128xf32, #tpu.memory_space<vmem>>, vector<96x128xf32>
    %355 = arith.addf %353, %354 : vector<96x128xf32>
    %cst_289 = arith.constant 0.000000e+00 : f32
    %356 = vector.broadcast %cst_289 : f32 to vector<96x128xf32>
    %357 = arith.maximumf %355, %356 : vector<96x128xf32>
    %c0_290 = arith.constant 0 : index
    %c0_291 = arith.constant 0 : index
    %358 = vector.load %arg18[%c0_290, %c0_291] : memref<1x128xf32, #tpu.memory_space<vmem>>, vector<1x128xf32>
    %359 = vector.broadcast %358 : vector<1x128xf32> to vector<96x128xf32>
    %360 = arith.mulf %357, %359 : vector<96x128xf32>
    %c0_292 = arith.constant 0 : index
    %c0_293 = arith.constant 0 : index
    %361 = vector.load %arg26[%c0_292, %c0_293] : memref<96x128xf32, #tpu.memory_space<vmem>>, vector<96x128xf32>
    tpu.vector_store %arg26[%c0_292, %c0_293], %360 {strides = array<i32>} : memref<96x128xf32, #tpu.memory_space<vmem>>, vector<96x128xf32>,
    return
  }
}

</mosaic_0001>

<llo_original>
// kernel: tpu_custom_call.1
$region0: #{tpu_custom_call.1}
  #allocation0 [shape = 'u32[]', space=smem, size = 0x4, offset = 0x4, fixed_abs, tag = 'smem constant byte address 0x4 - core index']
  #allocation1 [shape = 'u32[72,128]{1,0:T(1,128)}', space=vmem, size = 0x9000, scoped, tag = 'internal scratch']
  #allocation2 [shape = 'f32[96,128]{1,0:T(8,128)}', space=vmem, size = 0xc000, scoped, tag = 'scratch operand']
  #allocation3 [shape = 'f32[96,128]{1,0:T(8,128)}', space=vmem, size = 0xc000, scoped, tag = 'scratch operand']
  %s0 = inlined_call_operand.smem [shape: u32[30], index: -1, kind: input, shape index: {}]
  %s1 = sld [smem:[%s0]]
  %s2 = scalar_lea.smem %s0, 1
  %s3 = sld [smem:[%s2]]
  %s4 = scalar_lea.smem %s0, 2
  %s5 = sld [smem:[%s4]]
  %s6 = scalar_lea.smem %s0, 3
  %s7 = sld [smem:[%s6]]
  %s8 = scalar_lea.smem %s0, 4
  %s9 = sld [smem:[%s8]]
  %s10 = scalar_lea.smem %s0, 5
  %s11 = sld [smem:[%s10]]
  %s12 = scalar_lea.smem %s0, 6
  %s13 = sld [smem:[%s12]]
  %s14 = scalar_lea.smem %s0, 7
  %s15 = sld [smem:[%s14]]
  %s16 = scalar_lea.smem %s0, 8
  %s17 = sld [smem:[%s16]]
  %s18 = scalar_lea.smem %s0, 9
  %s19 = sld [smem:[%s18]]
  %s20 = scalar_lea.smem %s0, 10
  %s21 = sld [smem:[%s20]]
  %s22 = scalar_lea.smem %s0, 11
  %s23 = sld [smem:[%s22]]
  %s24 = scalar_lea.smem %s0, 12
  %s25 = sld [smem:[%s24]]
  %s26 = scalar_lea.smem %s0, 13
  %s27 = sld [smem:[%s26]]
  %s28 = scalar_lea.smem %s0, 14
  %s29 = sld [smem:[%s28]]
  %s30 = scalar_lea.smem %s0, 15
  %s31 = sld [smem:[%s30]]
  %s32 = scalar_lea.smem %s0, 16
  %s33 = sld [smem:[%s32]]
  %s34 = scalar_lea.smem %s0, 17
  %s35 = sld [smem:[%s34]]
  %s36 = scalar_lea.smem %s0, 18
  %s37 = sld [smem:[%s36]]
  %s38 = scalar_lea.smem %s0, 19
  %s39 = sld [smem:[%s38]]
  %s40 = scalar_lea.smem %s0, 20
  %s41 = sld [smem:[%s40]]
  %s42 = scalar_lea.smem %s0, 21
  %s43 = sld [smem:[%s42]]
  %s44 = scalar_lea.smem %s0, 22
  %s45 = sld [smem:[%s44]]
  %s46 = scalar_lea.smem %s0, 23
  %s47 = sld [smem:[%s46]]
  %s48 = scalar_lea.smem %s0, 24
  %s49 = sld [smem:[%s48]]
  %s50 = scalar_lea.smem %s0, 25
  %s51 = sld [smem:[%s50]]
  %s52 = scalar_lea.smem %s0, 26
  %s53 = sld [smem:[%s52]]
  %s54 = scalar_lea.smem %s0, 27
  %s55 = sld [smem:[%s54]]
  %s56 = scalar_lea.smem %s0, 28
  %s57 = sld [smem:[%s56]]
  %s58 = scalar_lea.smem %s0, 29
  %s59 = sld [smem:[%s58]]
  %60 = xla_tuple %s51, %s53, %s55, %s57, %s59
  %s61 = sld [smem:[#allocation0]]
  $region197: #{tpu_custom_call.1} parent=0
    _
  %s63 = ssub.s32 1, %s61
  %s64 = scalar_select 0, %s63, %s61
  $region1: #{tpu_custom_call.1} parent=0
    #allocation4 [shape = 'u8[512]{0}', space=vmem, size = 0x400, scoped, tag = 'input window, operand 0, single buffered']
    #allocation5 [shape = 's32[1]{0}', space=sflag, size = 0x4, scoped, tag = 'scoped memory for tpu_custom_call.1']
    #allocation6 [shape = 's32[1]{0}', space=sflag, size = 0x4, scoped, tag = 'scoped memory for tpu_custom_call.1']
    #allocation7 [shape = 'u8[24576]{0}', space=vmem, size = 0x6000, scoped, tag = 'input window, operand 1, single buffered']
    #allocation8 [shape = 's32[1]{0}', space=sflag, size = 0x4, scoped, tag = 'scoped memory for tpu_custom_call.1']
    #allocation9 [shape = 'u8[49152]{0}', space=vmem, size = 0xc000, scoped, tag = 'input window, operand 2, single buffered']
    #allocation10 [shape = 'u8[32768]{0}', space=vmem, size = 0x8000, scoped, tag = 'input window, operand 3, single buffered']
    #allocation11 [shape = 's32[1]{0}', space=sflag, size = 0x4, scoped, tag = 'scoped memory for tpu_custom_call.1']
    #allocation12 [shape = 'u8[32768]{0}', space=vmem, size = 0x8000, scoped, tag = 'input window, operand 4, single buffered']
    #allocation13 [shape = 'u8[32768]{0}', space=vmem, size = 0x8000, scoped, tag = 'input window, operand 5, single buffered']
    #allocation14 [shape = 's32[1]{0}', space=sflag, size = 0x4, scoped, tag = 'scoped memory for tpu_custom_call.1']
    #allocation15 [shape = 'u8[32768]{0}', space=vmem, size = 0x8000, scoped, tag = 'input window, operand 6, single buffered']
    #allocation16 [shape = 'u8[49152]{0}', space=vmem, size = 0xc000, scoped, tag = 'input window, operand 20, single buffered']
    #allocation17 [shape = 's32[1]{0}', space=sflag, size = 0x4, scoped, tag = 'scoped memory for tpu_custom_call.1']
    #allocation18 [shape = 'u8[49152]{0}', space=vmem, size = 0xc000, scoped, tag = 'input window, operand 21, single buffered']
    #allocation19 [shape = 'u8[49152]{0}', space=vmem, size = 0xc000, scoped, tag = 'input window, operand 22, single buffered']
    #allocation20 [shape = 's32[1]{0}', space=sflag, size = 0x4, scoped, tag = 'scoped memory for tpu_custom_call.1']
    #allocation21 [shape = 'u8[49152]{0}', space=vmem, size = 0xc000, scoped, tag = 'input window, operand 23, single buffered']
    #allocation22 [shape = 'u8[49152]{0}', space=vmem, size = 0xc000, scoped, tag = 'input window, operand 24, single buffered']
    #allocation23 [shape = 's32[1]{0}', space=sflag, size = 0x4, scoped, tag = 'scoped memory for tpu_custom_call.1']
    #allocation24 [shape = 'u8[49152]{0}', space=vmem, size = 0xc000, scoped, tag = 'output window, operand 0, single buffered']
    #allocation25 [shape = 'u8[49152]{0}', space=vmem, size = 0xc000, scoped, tag = 'output window, operand 1, single buffered']
    #allocation26 [shape = 's32[1]{0}', space=sflag, size = 0x4, scoped, tag = 'scoped memory for tpu_custom_call.1']
    #allocation27 [shape = 'u8[49152]{0}', space=vmem, size = 0xc000, scoped, tag = 'output window, operand 2, single buffered']
    #allocation28 [shape = 'u8[49152]{0}', space=vmem, size = 0xc000, scoped, tag = 'output window, operand 3, single buffered']
    #allocation29 [shape = 's32[1]{0}', space=sflag, size = 0x4, scoped, tag = 'scoped memory for tpu_custom_call.1']
    #allocation30 [shape = 'u8[49152]{0}', space=vmem, size = 0xc000, scoped, tag = 'output window, operand 4, single buffered']
    %65 = vsyncpa [#allocation5], 0
    %66 = vsyncpa [#allocation8], 0
    %67 = vsyncpa [#allocation11], 0
    %68 = vsyncpa [#allocation14], 0
    %69 = vsyncpa [#allocation17], 0
    %70 = vsyncpa [#allocation20], 0
    %71 = vsyncpa [#allocation23], 0
    %72 = vsyncpa [#allocation6], 0
    %73 = vsyncpa [#allocation26], 0
    %74 = vsyncpa [#allocation29], 0
    // Predicated region
    $region2: #{tpu_custom_call.1} parent=1 // pred_check
      _
    $region3: #{tpu_custom_call.1} parent=1 // pred_check_branch
      %76 = sbr.rel (0) target = $region5
    $region4: #{tpu_custom_call.1} parent=1 // pred_region
      %78 = vsyncadd [#allocation5], 0
      %s80 = sshll.u32 %s1, 4
      %s81 = int_to_ptr.hbm [resolvable:$true] %s80
      %s82 = sshll.u32 [#allocation4], 4
      %s83 = int_to_ptr.vmem [resolvable:$true] %s82
      %85 = dma.hbm_to_vmem [thread:$0]  %s81, 16, %s83, [#allocation5]
    $region5: #{tpu_custom_call.1} parent=1 // pred_fallthru
      _
    // Predicated region
    $region6: #{tpu_custom_call.1} parent=1 // pred_check
      _
    $region7: #{tpu_custom_call.1} parent=1 // pred_check_branch
      %87 = sbr.rel (0) target = $region9
    $region8: #{tpu_custom_call.1} parent=1 // pred_region
      %89 = vsyncadd [#allocation8], 0
      %s90 = sshll.u32 %s3, 4
      %s91 = int_to_ptr.hbm [resolvable:$true] %s90
      %s92 = sshll.u32 [#allocation7], 4
      %s93 = int_to_ptr.vmem [resolvable:$true] %s92
      %98 = dma.hbm_to_vmem [thread:$0]  %s91, 768, %s93, [#allocation8], 64, 64, 4
    $region9: #{tpu_custom_call.1} parent=1 // pred_fallthru
      _
    // Predicated region
    $region10: #{tpu_custom_call.1} parent=1 // pred_check
      _
    $region11: #{tpu_custom_call.1} parent=1 // pred_check_branch
      %100 = sbr.rel (0) target = $region13
    $region12: #{tpu_custom_call.1} parent=1 // pred_region
      %102 = vsyncadd [#allocation8], 0
      %s103 = sshll.u32 %s5, 4
      %s104 = int_to_ptr.hbm [resolvable:$true] %s103
      %s105 = sshll.u32 [#allocation9], 4
      %s106 = int_to_ptr.vmem [resolvable:$true] %s105
      %111 = dma.hbm_to_vmem [thread:$0]  %s104, 1536, %s106, [#allocation8], 128, 128, 8
    $region13: #{tpu_custom_call.1} parent=1 // pred_fallthru
      _
    // Predicated region
    $region14: #{tpu_custom_call.1} parent=1 // pred_check
      _
    $region15: #{tpu_custom_call.1} parent=1 // pred_check_branch
      %113 = sbr.rel (0) target = $region17
    $region16: #{tpu_custom_call.1} parent=1 // pred_region
      %115 = vsyncadd [#allocation11], 0
      %s116 = sshll.u32 %s7, 4
      %s117 = int_to_ptr.hbm [resolvable:$true] %s116
      %s118 = sshll.u32 [#allocation10], 4
      %s119 = int_to_ptr.vmem [resolvable:$true] %s118
      %124 = dma.hbm_to_vmem [thread:$0]  %s117, 1024, %s119, [#allocation11], 64, 64, 4
    $region17: #{tpu_custom_call.1} parent=1 // pred_fallthru
      _
    // Predicated region
    $region18: #{tpu_custom_call.1} parent=1 // pred_check
      _
    $region19: #{tpu_custom_call.1} parent=1 // pred_check_branch
      %126 = sbr.rel (0) target = $region21
    $region20: #{tpu_custom_call.1} parent=1 // pred_region
      %128 = vsyncadd [#allocation11], 0
      %s129 = sshll.u32 %s9, 4
      %s130 = int_to_ptr.hbm [resolvable:$true] %s129
      %s131 = sshll.u32 [#allocation12], 4
      %s132 = int_to_ptr.vmem [resolvable:$true] %s131
      %137 = dma.hbm_to_vmem [thread:$0]  %s130, 1024, %s132, [#allocation11], 64, 64, 4
    $region21: #{tpu_custom_call.1} parent=1 // pred_fallthru
      _
    // Predicated region
    $region22: #{tpu_custom_call.1} parent=1 // pred_check
      _
    $region23: #{tpu_custom_call.1} parent=1 // pred_check_branch
      %139 = sbr.rel (0) target = $region25
    $region24: #{tpu_custom_call.1} parent=1 // pred_region
      %141 = vsyncadd [#allocation14], 0
      %s142 = sshll.u32 %s11, 4
      %s143 = int_to_ptr.hbm [resolvable:$true] %s142
      %s144 = sshll.u32 [#allocation13], 4
      %s145 = int_to_ptr.vmem [resolvable:$true] %s144
      %150 = dma.hbm_to_vmem [thread:$0]  %s143, 1024, %s145, [#allocation14], 64, 64, 4
    $region25: #{tpu_custom_call.1} parent=1 // pred_fallthru
      _
    // Predicated region
    $region26: #{tpu_custom_call.1} parent=1 // pred_check
      _
    $region27: #{tpu_custom_call.1} parent=1 // pred_check_branch
      %152 = sbr.rel (0) target = $region29
    $region28: #{tpu_custom_call.1} parent=1 // pred_region
      %154 = vsyncadd [#allocation14], 0
      %s155 = sshll.u32 %s13, 4
      %s156 = int_to_ptr.hbm [resolvable:$true] %s155
      %s157 = sshll.u32 [#allocation15], 4
      %s158 = int_to_ptr.vmem [resolvable:$true] %s157
      %163 = dma.hbm_to_vmem [thread:$0]  %s156, 1024, %s158, [#allocation14], 64, 64, 4
    $region29: #{tpu_custom_call.1} parent=1 // pred_fallthru
      _
    // Predicated region
    $region30: #{tpu_custom_call.1} parent=1 // pred_check
      _
    $region31: #{tpu_custom_call.1} parent=1 // pred_check_branch
      %165 = sbr.rel (0) target = $region33
    $region32: #{tpu_custom_call.1} parent=1 // pred_region
      _
    $region33: #{tpu_custom_call.1} parent=1 // pred_fallthru
      _
    // Predicated region
    $region34: #{tpu_custom_call.1} parent=1 // pred_check
      _
    $region35: #{tpu_custom_call.1} parent=1 // pred_check_branch
      %167 = sbr.rel (0) target = $region37
    $region36: #{tpu_custom_call.1} parent=1 // pred_region
      _
    $region37: #{tpu_custom_call.1} parent=1 // pred_fallthru
      _
    // Predicated region
    $region38: #{tpu_custom_call.1} parent=1 // pred_check
      _
    $region39: #{tpu_custom_call.1} parent=1 // pred_check_branch
      %169 = sbr.rel (0) target = $region41
    $region40: #{tpu_custom_call.1} parent=1 // pred_region
      _
    $region41: #{tpu_custom_call.1} parent=1 // pred_fallthru
      _
    // Predicated region
    $region42: #{tpu_custom_call.1} parent=1 // pred_check
      _
    $region43: #{tpu_custom_call.1} parent=1 // pred_check_branch
      %171 = sbr.rel (0) target = $region45
    $region44: #{tpu_custom_call.1} parent=1 // pred_region
      _
    $region45: #{tpu_custom_call.1} parent=1 // pred_fallthru
      _
    // Predicated region
    $region46: #{tpu_custom_call.1} parent=1 // pred_check
      _
    $region47: #{tpu_custom_call.1} parent=1 // pred_check_branch
      %173 = sbr.rel (0) target = $region49
    $region48: #{tpu_custom_call.1} parent=1 // pred_region
      _
    $region49: #{tpu_custom_call.1} parent=1 // pred_fallthru
      _
    // Predicated region
    $region50: #{tpu_custom_call.1} parent=1 // pred_check
      _
    $region51: #{tpu_custom_call.1} parent=1 // pred_check_branch
      %175 = sbr.rel (0) target = $region53
    $region52: #{tpu_custom_call.1} parent=1 // pred_region
      _
    $region53: #{tpu_custom_call.1} parent=1 // pred_fallthru
      _
    // Predicated region
    $region54: #{tpu_custom_call.1} parent=1 // pred_check
      _
    $region55: #{tpu_custom_call.1} parent=1 // pred_check_branch
      %177 = sbr.rel (0) target = $region57
    $region56: #{tpu_custom_call.1} parent=1 // pred_region
      _
    $region57: #{tpu_custom_call.1} parent=1 // pred_fallthru
      _
    // Predicated region
    $region58: #{tpu_custom_call.1} parent=1 // pred_check
      _
    $region59: #{tpu_custom_call.1} parent=1 // pred_check_branch
      %179 = sbr.rel (0) target = $region61
    $region60: #{tpu_custom_call.1} parent=1 // pred_region
      _
    $region61: #{tpu_custom_call.1} parent=1 // pred_fallthru
      _
    // Predicated region
    $region62: #{tpu_custom_call.1} parent=1 // pred_check
      _
    $region63: #{tpu_custom_call.1} parent=1 // pred_check_branch
      %181 = sbr.rel (0) target = $region65
    $region64: #{tpu_custom_call.1} parent=1 // pred_region
      _
    $region65: #{tpu_custom_call.1} parent=1 // pred_fallthru
      _
    // Predicated region
    $region66: #{tpu_custom_call.1} parent=1 // pred_check
      _
    $region67: #{tpu_custom_call.1} parent=1 // pred_check_branch
      %183 = sbr.rel (0) target = $region69
    $region68: #{tpu_custom_call.1} parent=1 // pred_region
      _
    $region69: #{tpu_custom_call.1} parent=1 // pred_fallthru
      _
    // Predicated region
    $region70: #{tpu_custom_call.1} parent=1 // pred_check
      _
    $region71: #{tpu_custom_call.1} parent=1 // pred_check_branch
      %185 = sbr.rel (0) target = $region73
    $region72: #{tpu_custom_call.1} parent=1 // pred_region
      _
    $region73: #{tpu_custom_call.1} parent=1 // pred_fallthru
      _
    // Predicated region
    $region74: #{tpu_custom_call.1} parent=1 // pred_check
      _
    $region75: #{tpu_custom_call.1} parent=1 // pred_check_branch
      %187 = sbr.rel (0) target = $region77
    $region76: #{tpu_custom_call.1} parent=1 // pred_region
      _
    $region77: #{tpu_custom_call.1} parent=1 // pred_fallthru
      _
    // Predicated region
    $region78: #{tpu_custom_call.1} parent=1 // pred_check
      _
    $region79: #{tpu_custom_call.1} parent=1 // pred_check_branch
      %189 = sbr.rel (0) target = $region81
    $region80: #{tpu_custom_call.1} parent=1 // pred_region
      _
    $region81: #{tpu_custom_call.1} parent=1 // pred_fallthru
      _
    // Predicated region
    $region82: #{tpu_custom_call.1} parent=1 // pred_check
      _
    $region83: #{tpu_custom_call.1} parent=1 // pred_check_branch
      %191 = sbr.rel (0) target = $region85
    $region84: #{tpu_custom_call.1} parent=1 // pred_region
      %193 = vsyncadd [#allocation17], 0
      %s194 = sshll.u32 %s41, 4
      %s195 = int_to_ptr.hbm [resolvable:$true] %s194
      %s196 = sshll.u32 [#allocation16], 4
      %s197 = int_to_ptr.vmem [resolvable:$true] %s196
      %202 = dma.hbm_to_vmem [thread:$0]  %s195, 1536, %s197, [#allocation17], 128, 128, 8
    $region85: #{tpu_custom_call.1} parent=1 // pred_fallthru
      _
    // Predicated region
    $region86: #{tpu_custom_call.1} parent=1 // pred_check
      _
    $region87: #{tpu_custom_call.1} parent=1 // pred_check_branch
      %204 = sbr.rel (0) target = $region89
    $region88: #{tpu_custom_call.1} parent=1 // pred_region
      %206 = vsyncadd [#allocation17], 0
      %s207 = sshll.u32 %s43, 4
      %s208 = int_to_ptr.hbm [resolvable:$true] %s207
      %s209 = sshll.u32 [#allocation18], 4
      %s210 = int_to_ptr.vmem [resolvable:$true] %s209
      %215 = dma.hbm_to_vmem [thread:$0]  %s208, 1536, %s210, [#allocation17], 128, 128, 8
    $region89: #{tpu_custom_call.1} parent=1 // pred_fallthru
      _
    // Predicated region
    $region90: #{tpu_custom_call.1} parent=1 // pred_check
      _
    $region91: #{tpu_custom_call.1} parent=1 // pred_check_branch
      %217 = sbr.rel (0) target = $region93
    $region92: #{tpu_custom_call.1} parent=1 // pred_region
      %219 = vsyncadd [#allocation20], 0
      %s220 = sshll.u32 %s45, 4
      %s221 = int_to_ptr.hbm [resolvable:$true] %s220
      %s222 = sshll.u32 [#allocation19], 4
      %s223 = int_to_ptr.vmem [resolvable:$true] %s222
      %228 = dma.hbm_to_vmem [thread:$0]  %s221, 1536, %s223, [#allocation20], 128, 128, 8
    $region93: #{tpu_custom_call.1} parent=1 // pred_fallthru
      _
    // Predicated region
    $region94: #{tpu_custom_call.1} parent=1 // pred_check
      _
    $region95: #{tpu_custom_call.1} parent=1 // pred_check_branch
      %230 = sbr.rel (0) target = $region97
    $region96: #{tpu_custom_call.1} parent=1 // pred_region
      %232 = vsyncadd [#allocation20], 0
      %s233 = sshll.u32 %s47, 4
      %s234 = int_to_ptr.hbm [resolvable:$true] %s233
      %s235 = sshll.u32 [#allocation21], 4
      %s236 = int_to_ptr.vmem [resolvable:$true] %s235
      %241 = dma.hbm_to_vmem [thread:$0]  %s234, 1536, %s236, [#allocation20], 128, 128, 8
    $region97: #{tpu_custom_call.1} parent=1 // pred_fallthru
      _
    // Predicated region
    $region98: #{tpu_custom_call.1} parent=1 // pred_check
      _
    $region99: #{tpu_custom_call.1} parent=1 // pred_check_branch
      %243 = sbr.rel (0) target = $region101
    $region100: #{tpu_custom_call.1} parent=1 // pred_region
      %245 = vsyncadd [#allocation23], 0
      %s246 = sshll.u32 %s49, 4
      %s247 = int_to_ptr.hbm [resolvable:$true] %s246
      %s248 = sshll.u32 [#allocation22], 4
      %s249 = int_to_ptr.vmem [resolvable:$true] %s248
      %254 = dma.hbm_to_vmem [thread:$0]  %s247, 1536, %s249, [#allocation23], 128, 128, 8
    $region101: #{tpu_custom_call.1} parent=1 // pred_fallthru
      _
    // Predicated region
    $region102: #{tpu_custom_call.1} parent=1 // pred_check
      _
    $region103: #{tpu_custom_call.1} parent=1 // pred_check_branch
      %256 = sbr.rel (0) target = $region105
    $region104: #{tpu_custom_call.1} parent=1 // pred_region
      %258 = dma.done [#allocation5], 16
    $region105: #{tpu_custom_call.1} parent=1 // pred_fallthru
      _
    // Predicated region
    $region106: #{tpu_custom_call.1} parent=1 // pred_check
      _
    $region107: #{tpu_custom_call.1} parent=1 // pred_check_branch
      %260 = sbr.rel (0) target = $region109
    $region108: #{tpu_custom_call.1} parent=1 // pred_region
      %262 = dma.done [#allocation8], 768
    $region109: #{tpu_custom_call.1} parent=1 // pred_fallthru
      _
    // Predicated region
    $region110: #{tpu_custom_call.1} parent=1 // pred_check
      _
    $region111: #{tpu_custom_call.1} parent=1 // pred_check_branch
      %264 = sbr.rel (0) target = $region113
    $region112: #{tpu_custom_call.1} parent=1 // pred_region
      %266 = dma.done [#allocation8], 1536
    $region113: #{tpu_custom_call.1} parent=1 // pred_fallthru
      _
    // Predicated region
    $region114: #{tpu_custom_call.1} parent=1 // pred_check
      _
    $region115: #{tpu_custom_call.1} parent=1 // pred_check_branch
      %268 = sbr.rel (0) target = $region117
    $region116: #{tpu_custom_call.1} parent=1 // pred_region
      %270 = dma.done [#allocation11], 1024
    $region117: #{tpu_custom_call.1} parent=1 // pred_fallthru
      _
    // Predicated region
    $region118: #{tpu_custom_call.1} parent=1 // pred_check
      _
    $region119: #{tpu_custom_call.1} parent=1 // pred_check_branch
      %272 = sbr.rel (0) target = $region121
    $region120: #{tpu_custom_call.1} parent=1 // pred_region
      %274 = dma.done [#allocation11], 1024
    $region121: #{tpu_custom_call.1} parent=1 // pred_fallthru
      _
    // Predicated region
    $region122: #{tpu_custom_call.1} parent=1 // pred_check
      _
    $region123: #{tpu_custom_call.1} parent=1 // pred_check_branch
      %276 = sbr.rel (0) target = $region125
    $region124: #{tpu_custom_call.1} parent=1 // pred_region
      %278 = dma.done [#allocation14], 1024
    $region125: #{tpu_custom_call.1} parent=1 // pred_fallthru
      _
    // Predicated region
    $region126: #{tpu_custom_call.1} parent=1 // pred_check
      _
    $region127: #{tpu_custom_call.1} parent=1 // pred_check_branch
      %280 = sbr.rel (0) target = $region129
    $region128: #{tpu_custom_call.1} parent=1 // pred_region
      %282 = dma.done [#allocation14], 1024
    $region129: #{tpu_custom_call.1} parent=1 // pred_fallthru
      _
    // Predicated region
    $region130: #{tpu_custom_call.1} parent=1 // pred_check
      _
    $region131: #{tpu_custom_call.1} parent=1 // pred_check_branch
      %284 = sbr.rel (0) target = $region133
    $region132: #{tpu_custom_call.1} parent=1 // pred_region
      %286 = dma.done [#allocation17], 1536
    $region133: #{tpu_custom_call.1} parent=1 // pred_fallthru
      _
    // Predicated region
    $region134: #{tpu_custom_call.1} parent=1 // pred_check
      _
    $region135: #{tpu_custom_call.1} parent=1 // pred_check_branch
      %288 = sbr.rel (0) target = $region137
    $region136: #{tpu_custom_call.1} parent=1 // pred_region
      %290 = dma.done [#allocation17], 1536
    $region137: #{tpu_custom_call.1} parent=1 // pred_fallthru
      _
    // Predicated region
    $region138: #{tpu_custom_call.1} parent=1 // pred_check
      _
    $region139: #{tpu_custom_call.1} parent=1 // pred_check_branch
      %292 = sbr.rel (0) target = $region141
    $region140: #{tpu_custom_call.1} parent=1 // pred_region
      %294 = dma.done [#allocation20], 1536
    $region141: #{tpu_custom_call.1} parent=1 // pred_fallthru
      _
    // Predicated region
    $region142: #{tpu_custom_call.1} parent=1 // pred_check
      _
    $region143: #{tpu_custom_call.1} parent=1 // pred_check_branch
      %296 = sbr.rel (0) target = $region145
    $region144: #{tpu_custom_call.1} parent=1 // pred_region
      %298 = dma.done [#allocation20], 1536
    $region145: #{tpu_custom_call.1} parent=1 // pred_fallthru
      _
    // Predicated region
    $region146: #{tpu_custom_call.1} parent=1 // pred_check
      _
    $region147: #{tpu_custom_call.1} parent=1 // pred_check_branch
      %300 = sbr.rel (0) target = $region149
    $region148: #{tpu_custom_call.1} parent=1 // pred_region
      %302 = dma.done [#allocation23], 1536
    $region149: #{tpu_custom_call.1} parent=1 // pred_fallthru
      _
    %v303 = vld [vmem:[#allocation7] sm:$0xf]
    %v304 = vld [vmem:[#allocation7 + $0x4] sm:$0xf]
    %v305 = vld [vmem:[#allocation7 + $0x8] sm:$0xf]
    %v306 = vld [vmem:[#allocation7 + $0xc] sm:$0xf]
    %v307 = vld [vmem:[#allocation7 + $0x10] sm:$0xf]
    %v308 = vld [vmem:[#allocation7 + $0x14] sm:$0xf]
    %v309 = vld [vmem:[#allocation7 + $0x18] sm:$0xf]
    %v310 = vld [vmem:[#allocation7 + $0x1c] sm:$0xf]
    %v311 = vld [vmem:[#allocation7 + $0x20] sm:$0xf]
    %v312 = vld [vmem:[#allocation7 + $0x24] sm:$0xf]
    %v313 = vld [vmem:[#allocation7 + $0x28] sm:$0xf]
    %v314 = vld [vmem:[#allocation7 + $0x2c] sm:$0xf]
    %v315 = vld [vmem:[#allocation12] sm:$0xf]
    %v316 = vld [vmem:[#allocation12 + $0x4] sm:$0xf]
    %v317 = vld [vmem:[#allocation12 + $0x8] sm:$0xf]
    %v318 = vld [vmem:[#allocation12 + $0xc] sm:$0xf]
    %v319 = vld [vmem:[#allocation12 + $0x10] sm:$0xf]
    %v320 = vld [vmem:[#allocation12 + $0x14] sm:$0xf]
    %v321 = vld [vmem:[#allocation12 + $0x18] sm:$0xf]
    %v322 = vld [vmem:[#allocation12 + $0x1c] sm:$0xf]
    %v323 = vld [vmem:[#allocation12 + $0x20] sm:$0xf]
    %v324 = vld [vmem:[#allocation12 + $0x24] sm:$0xf]
    %v325 = vld [vmem:[#allocation12 + $0x28] sm:$0xf]
    %v326 = vld [vmem:[#allocation12 + $0x2c] sm:$0xf]
    %v327 = vld [vmem:[#allocation12 + $0x30] sm:$0xf]
    %v328 = vld [vmem:[#allocation12 + $0x34] sm:$0xf]
    %v329 = vld [vmem:[#allocation12 + $0x38] sm:$0xf]
    %v330 = vld [vmem:[#allocation12 + $0x3c] sm:$0xf]
    %v331 = vld [vmem:[%s15] sm:$0x1]
    %v333 = vperm.slane %v331, 0
    %v347 = vunpack.c.l.b16 %v303
    %v348 = vunpack.c.l.b16 %v304
    %v349 = vunpack.c.l.b16 %v305
    %v350 = vunpack.c.l.b16 %v306
    %v351 = vunpack.c.l.b16 %v307
    %v352 = vunpack.c.l.b16 %v308
    %v353 = vunpack.c.l.b16 %v309
    %v354 = vunpack.c.l.b16 %v310
    %v355 = vunpack.c.l.b16 %v311
    %v356 = vunpack.c.l.b16 %v312
    %v357 = vunpack.c.l.b16 %v313
    %v358 = vunpack.c.l.b16 %v314
    %v359 = vpack.c.b16 %v348, %v347
    %v360 = vpack.c.b16 %v350, %v349
    %v361 = vpack.c.b16 %v352, %v351
    %v362 = vpack.c.b16 %v354, %v353
    %v363 = vpack.c.b16 %v356, %v355
    %v364 = vpack.c.b16 %v358, %v357
    %v387 = vunpack.c.l.b16 %v315
    %v388 = vunpack.c.l.b16 %v316
    %v389 = vunpack.c.l.b16 %v317
    %v390 = vunpack.c.l.b16 %v318
    %v391 = vunpack.c.l.b16 %v319
    %v392 = vunpack.c.l.b16 %v320
    %v393 = vunpack.c.l.b16 %v321
    %v394 = vunpack.c.l.b16 %v322
    %v395 = vunpack.c.l.b16 %v323
    %v396 = vunpack.c.l.b16 %v324
    %v397 = vunpack.c.l.b16 %v325
    %v398 = vunpack.c.l.b16 %v326
    %v399 = vunpack.c.l.b16 %v327
    %v400 = vunpack.c.l.b16 %v328
    %v401 = vunpack.c.l.b16 %v329
    %v402 = vunpack.c.l.b16 %v330
    %v403 = vpack.c.b16 %v388, %v387
    %v404 = vpack.c.b16 %v390, %v389
    %v405 = vpack.c.b16 %v392, %v391
    %v406 = vpack.c.b16 %v394, %v393
    %v407 = vpack.c.b16 %v396, %v395
    %v408 = vpack.c.b16 %v398, %v397
    %v409 = vpack.c.b16 %v400, %v399
    %v410 = vpack.c.b16 %v402, %v401
    %419 = vmatpush.bf16.msra.mxu0 %v410
    %420 = vmatpush.bf16.msra.mxu0 %v409
    %421 = vmatpush.bf16.msra.mxu0 %v408
    %422 = vmatpush.bf16.msra.mxu0 %v407
    %423 = vmatpush.bf16.msra.mxu0 %v406
    %424 = vmatpush.bf16.msra.mxu0 %v405
    %425 = vmatpush.bf16.msra.mxu0 %v404
    %426 = vmatpush.bf16.msra.mxu0 %v403
    %427 = vmatmul.bf16.gmra.mxu0 %v359
    %v428 = vpop.f32.mrf.mxu0
    %v429 = vadd.f32 %v333, %v428
    %v430 = vpop.f32.mrf.mxu0
    %v431 = vadd.f32 %v333, %v430
    %432 = vmatmul.bf16.gmra.mxu0 %v360
    %v433 = vpop.f32.mrf.mxu0
    %v434 = vadd.f32 %v333, %v433
    %v435 = vpop.f32.mrf.mxu0
    %v436 = vadd.f32 %v333, %v435
    %437 = vmatmul.bf16.gmra.mxu0 %v361
    %v438 = vpop.f32.mrf.mxu0
    %v439 = vadd.f32 %v333, %v438
    %v440 = vpop.f32.mrf.mxu0
    %v441 = vadd.f32 %v333, %v440
    %442 = vmatmul.bf16.gmra.mxu0 %v362
    %v443 = vpop.f32.mrf.mxu0
    %v444 = vadd.f32 %v333, %v443
    %v445 = vpop.f32.mrf.mxu0
    %v446 = vadd.f32 %v333, %v445
    %447 = vmatmul.bf16.gmra.mxu0 %v363
    %v448 = vpop.f32.mrf.mxu0
    %v449 = vadd.f32 %v333, %v448
    %v450 = vpop.f32.mrf.mxu0
    %v451 = vadd.f32 %v333, %v450
    %452 = vmatmul.bf16.gmra.mxu0 %v364
    %v453 = vpop.f32.mrf.mxu0
    %v454 = vadd.f32 %v333, %v453
    %v455 = vpop.f32.mrf.mxu0
    %v456 = vadd.f32 %v333, %v455
    %457 = vdwg.mxu0
    %458 = vst [vmem:[#allocation3] sm:$0xff] %v429
    %459 = vst [vmem:[#allocation3 + $0x8] sm:$0xff] %v431
    %460 = vst [vmem:[#allocation3 + $0x10] sm:$0xff] %v434
    %461 = vst [vmem:[#allocation3 + $0x18] sm:$0xff] %v436
    %462 = vst [vmem:[#allocation3 + $0x20] sm:$0xff] %v439
    %463 = vst [vmem:[#allocation3 + $0x28] sm:$0xff] %v441
    %464 = vst [vmem:[#allocation3 + $0x30] sm:$0xff] %v444
    %465 = vst [vmem:[#allocation3 + $0x38] sm:$0xff] %v446
    %466 = vst [vmem:[#allocation3 + $0x40] sm:$0xff] %v449
    %467 = vst [vmem:[#allocation3 + $0x48] sm:$0xff] %v451
    %468 = vst [vmem:[#allocation3 + $0x50] sm:$0xff] %v454
    %469 = vst [vmem:[#allocation3 + $0x58] sm:$0xff] %v456
    %v470 = vld [vmem:[#allocation9] sm:$0xff]
    %v471 = vld [vmem:[#allocation9 + $0x8] sm:$0xff]
    %v472 = vld [vmem:[#allocation9 + $0x10] sm:$0xff]
    %v473 = vld [vmem:[#allocation9 + $0x18] sm:$0xff]
    %v474 = vld [vmem:[#allocation9 + $0x20] sm:$0xff]
    %v475 = vld [vmem:[#allocation9 + $0x28] sm:$0xff]
    %v476 = vld [vmem:[#allocation9 + $0x30] sm:$0xff]
    %v477 = vld [vmem:[#allocation9 + $0x38] sm:$0xff]
    %v478 = vld [vmem:[#allocation9 + $0x40] sm:$0xff]
    %v479 = vld [vmem:[#allocation9 + $0x48] sm:$0xff]
    %v480 = vld [vmem:[#allocation9 + $0x50] sm:$0xff]
    %v481 = vld [vmem:[#allocation9 + $0x58] sm:$0xff]
    %v482 = vld [vmem:[%s25] sm:$0x1]
    %v484 = vperm.slane %v482, 0
    %v486 = vmul.f32 %v470, %v484
    %v487 = vmul.f32 %v471, %v484
    %v488 = vmul.f32 %v472, %v484
    %v489 = vmul.f32 %v473, %v484
    %v490 = vmul.f32 %v474, %v484
    %v491 = vmul.f32 %v475, %v484
    %v492 = vmul.f32 %v476, %v484
    %v493 = vmul.f32 %v477, %v484
    %v494 = vmul.f32 %v478, %v484
    %v495 = vmul.f32 %v479, %v484
    %v496 = vmul.f32 %v480, %v484
    %v497 = vmul.f32 %v481, %v484
    %v498 = vld [vmem:[%s27] sm:$0x1]
    %v500 = vperm.slane %v498, 0
    %v502 = vadd.f32 %v486, %v500
    %v503 = vadd.f32 %v487, %v500
    %v504 = vadd.f32 %v488, %v500
    %v505 = vadd.f32 %v489, %v500
    %v506 = vadd.f32 %v490, %v500
    %v507 = vadd.f32 %v491, %v500
    %v508 = vadd.f32 %v492, %v500
    %v509 = vadd.f32 %v493, %v500
    %v510 = vadd.f32 %v494, %v500
    %v511 = vadd.f32 %v495, %v500
    %v512 = vadd.f32 %v496, %v500
    %v513 = vadd.f32 %v497, %v500
    %v514 = vld [vmem:[#allocation16] sm:$0xff]
    %v515 = vld [vmem:[#allocation16 + $0x8] sm:$0xff]
    %v516 = vld [vmem:[#allocation16 + $0x10] sm:$0xff]
    %v517 = vld [vmem:[#allocation16 + $0x18] sm:$0xff]
    %v518 = vld [vmem:[#allocation16 + $0x20] sm:$0xff]
    %v519 = vld [vmem:[#allocation16 + $0x28] sm:$0xff]
    %v520 = vld [vmem:[#allocation16 + $0x30] sm:$0xff]
    %v521 = vld [vmem:[#allocation16 + $0x38] sm:$0xff]
    %v522 = vld [vmem:[#allocation16 + $0x40] sm:$0xff]
    %v523 = vld [vmem:[#allocation16 + $0x48] sm:$0xff]
    %v524 = vld [vmem:[#allocation16 + $0x50] sm:$0xff]
    %v525 = vld [vmem:[#allocation16 + $0x58] sm:$0xff]
    %v526 = vmul.f32 %v502, %v514
    %v527 = vmul.f32 %v503, %v515
    %v528 = vmul.f32 %v504, %v516
    %v529 = vmul.f32 %v505, %v517
    %v530 = vmul.f32 %v506, %v518
    %v531 = vmul.f32 %v507, %v519
    %v532 = vmul.f32 %v508, %v520
    %v533 = vmul.f32 %v509, %v521
    %v534 = vmul.f32 %v510, %v522
    %v535 = vmul.f32 %v511, %v523
    %v536 = vmul.f32 %v512, %v524
    %v537 = vmul.f32 %v513, %v525
    %538 = vst [vmem:[#allocation27] sm:$0xff] %v526
    %539 = vst [vmem:[#allocation27 + $0x8] sm:$0xff] %v527
    %540 = vst [vmem:[#allocation27 + $0x10] sm:$0xff] %v528
    %541 = vst [vmem:[#allocation27 + $0x18] sm:$0xff] %v529
    %542 = vst [vmem:[#allocation27 + $0x20] sm:$0xff] %v530
    %543 = vst [vmem:[#allocation27 + $0x28] sm:$0xff] %v531
    %544 = vst [vmem:[#allocation27 + $0x30] sm:$0xff] %v532
    %545 = vst [vmem:[#allocation27 + $0x38] sm:$0xff] %v533
    %546 = vst [vmem:[#allocation27 + $0x40] sm:$0xff] %v534
    %547 = vst [vmem:[#allocation27 + $0x48] sm:$0xff] %v535
    %548 = vst [vmem:[#allocation27 + $0x50] sm:$0xff] %v536
    %549 = vst [vmem:[#allocation27 + $0x58] sm:$0xff] %v537
    %v550 = vld [vmem:[%s33] sm:$0x1]
    %v552 = vperm.slane %v550, 0
    %v554 = vmul.f32 %v502, %v552
    %v555 = vmul.f32 %v503, %v552
    %v556 = vmul.f32 %v504, %v552
    %v557 = vmul.f32 %v505, %v552
    %v558 = vmul.f32 %v506, %v552
    %v559 = vmul.f32 %v507, %v552
    %v560 = vmul.f32 %v508, %v552
    %v561 = vmul.f32 %v509, %v552
    %v562 = vmul.f32 %v510, %v552
    %v563 = vmul.f32 %v511, %v552
    %v564 = vmul.f32 %v512, %v552
    %v565 = vmul.f32 %v513, %v552
    %v566 = vld [vmem:[#allocation21] sm:$0xff]
    %v567 = vld [vmem:[#allocation21 + $0x8] sm:$0xff]
    %v568 = vld [vmem:[#allocation21 + $0x10] sm:$0xff]
    %v569 = vld [vmem:[#allocation21 + $0x18] sm:$0xff]
    %v570 = vld [vmem:[#allocation21 + $0x20] sm:$0xff]
    %v571 = vld [vmem:[#allocation21 + $0x28] sm:$0xff]
    %v572 = vld [vmem:[#allocation21 + $0x30] sm:$0xff]
    %v573 = vld [vmem:[#allocation21 + $0x38] sm:$0xff]
    %v574 = vld [vmem:[#allocation21 + $0x40] sm:$0xff]
    %v575 = vld [vmem:[#allocation21 + $0x48] sm:$0xff]
    %v576 = vld [vmem:[#allocation21 + $0x50] sm:$0xff]
    %v577 = vld [vmem:[#allocation21 + $0x58] sm:$0xff]
    %v578 = vsub.f32 %v554, %v566
    %v579 = vsub.f32 %v555, %v567
    %v580 = vsub.f32 %v556, %v568
    %v581 = vsub.f32 %v557, %v569
    %v582 = vsub.f32 %v558, %v570
    %v583 = vsub.f32 %v559, %v571
    %v584 = vsub.f32 %v560, %v572
    %v585 = vsub.f32 %v561, %v573
    %v586 = vsub.f32 %v562, %v574
    %v587 = vsub.f32 %v563, %v575
    %v588 = vsub.f32 %v564, %v576
    %v589 = vsub.f32 %v565, %v577
    %v590 = vmax.f32 %v578, 0.0
    %v591 = vmax.f32 %v579, 0.0
    %v592 = vmax.f32 %v580, 0.0
    %v593 = vmax.f32 %v581, 0.0
    %v594 = vmax.f32 %v582, 0.0
    %v595 = vmax.f32 %v583, 0.0
    %v596 = vmax.f32 %v584, 0.0
    %v597 = vmax.f32 %v585, 0.0
    %v598 = vmax.f32 %v586, 0.0
    %v599 = vmax.f32 %v587, 0.0
    %v600 = vmax.f32 %v588, 0.0
    %v601 = vmax.f32 %v589, 0.0
    %v602 = vld [vmem:[%s39] sm:$0x1]
    %v604 = vperm.slane %v602, 0
    %v606 = vmul.f32 %v590, %v604
    %v607 = vmul.f32 %v591, %v604
    %v608 = vmul.f32 %v592, %v604
    %v609 = vmul.f32 %v593, %v604
    %v610 = vmul.f32 %v594, %v604
    %v611 = vmul.f32 %v595, %v604
    %v612 = vmul.f32 %v596, %v604
    %v613 = vmul.f32 %v597, %v604
    %v614 = vmul.f32 %v598, %v604
    %v615 = vmul.f32 %v599, %v604
    %v616 = vmul.f32 %v600, %v604
    %v617 = vmul.f32 %v601, %v604
    %618 = vst [vmem:[#allocation28] sm:$0xff] %v606
    %619 = vst [vmem:[#allocation28 + $0x8] sm:$0xff] %v607
    %620 = vst [vmem:[#allocation28 + $0x10] sm:$0xff] %v608
    %621 = vst [vmem:[#allocation28 + $0x18] sm:$0xff] %v609
    %622 = vst [vmem:[#allocation28 + $0x20] sm:$0xff] %v610
    %623 = vst [vmem:[#allocation28 + $0x28] sm:$0xff] %v611
    %624 = vst [vmem:[#allocation28 + $0x30] sm:$0xff] %v612
    %625 = vst [vmem:[#allocation28 + $0x38] sm:$0xff] %v613
    %626 = vst [vmem:[#allocation28 + $0x40] sm:$0xff] %v614
    %627 = vst [vmem:[#allocation28 + $0x48] sm:$0xff] %v615
    %628 = vst [vmem:[#allocation28 + $0x50] sm:$0xff] %v616
    %629 = vst [vmem:[#allocation28 + $0x58] sm:$0xff] %v617
    %v630 = vld [vmem:[%s35] sm:$0x1]
    %v632 = vperm.slane %v630, 0
    %v634 = vmul.f32 %v502, %v632
    %v635 = vmul.f32 %v503, %v632
    %v636 = vmul.f32 %v504, %v632
    %v637 = vmul.f32 %v505, %v632
    %v638 = vmul.f32 %v506, %v632
    %v639 = vmul.f32 %v507, %v632
    %v640 = vmul.f32 %v508, %v632
    %v641 = vmul.f32 %v509, %v632
    %v642 = vmul.f32 %v510, %v632
    %v643 = vmul.f32 %v511, %v632
    %v644 = vmul.f32 %v512, %v632
    %v645 = vmul.f32 %v513, %v632
    %v646 = vld [vmem:[#allocation22] sm:$0xff]
    %v647 = vld [vmem:[#allocation22 + $0x8] sm:$0xff]
    %v648 = vld [vmem:[#allocation22 + $0x10] sm:$0xff]
    %v649 = vld [vmem:[#allocation22 + $0x18] sm:$0xff]
    %v650 = vld [vmem:[#allocation22 + $0x20] sm:$0xff]
    %v651 = vld [vmem:[#allocation22 + $0x28] sm:$0xff]
    %v652 = vld [vmem:[#allocation22 + $0x30] sm:$0xff]
    %v653 = vld [vmem:[#allocation22 + $0x38] sm:$0xff]
    %v654 = vld [vmem:[#allocation22 + $0x40] sm:$0xff]
    %v655 = vld [vmem:[#allocation22 + $0x48] sm:$0xff]
    %v656 = vld [vmem:[#allocation22 + $0x50] sm:$0xff]
    %v657 = vld [vmem:[#allocation22 + $0x58] sm:$0xff]
    %v658 = vadd.f32 %v634, %v646
    %v659 = vadd.f32 %v635, %v647
    %v660 = vadd.f32 %v636, %v648
    %v661 = vadd.f32 %v637, %v649
    %v662 = vadd.f32 %v638, %v650
    %v663 = vadd.f32 %v639, %v651
    %v664 = vadd.f32 %v640, %v652
    %v665 = vadd.f32 %v641, %v653
    %v666 = vadd.f32 %v642, %v654
    %v667 = vadd.f32 %v643, %v655
    %v668 = vadd.f32 %v644, %v656
    %v669 = vadd.f32 %v645, %v657
    %v670 = vmax.f32 %v658, 0.0
    %v671 = vmax.f32 %v659, 0.0
    %v672 = vmax.f32 %v660, 0.0
    %v673 = vmax.f32 %v661, 0.0
    %v674 = vmax.f32 %v662, 0.0
    %v675 = vmax.f32 %v663, 0.0
    %v676 = vmax.f32 %v664, 0.0
    %v677 = vmax.f32 %v665, 0.0
    %v678 = vmax.f32 %v666, 0.0
    %v679 = vmax.f32 %v667, 0.0
    %v680 = vmax.f32 %v668, 0.0
    %v681 = vmax.f32 %v669, 0.0
    %v682 = vld [vmem:[%s39] sm:$0x1]
    %v684 = vperm.slane %v682, 0
    %v686 = vmul.f32 %v670, %v684
    %v687 = vmul.f32 %v671, %v684
    %v688 = vmul.f32 %v672, %v684
    %v689 = vmul.f32 %v673, %v684
    %v690 = vmul.f32 %v674, %v684
    %v691 = vmul.f32 %v675, %v684
    %v692 = vmul.f32 %v676, %v684
    %v693 = vmul.f32 %v677, %v684
    %v694 = vmul.f32 %v678, %v684
    %v695 = vmul.f32 %v679, %v684
    %v696 = vmul.f32 %v680, %v684
    %v697 = vmul.f32 %v681, %v684
    %698 = vst [vmem:[#allocation30] sm:$0xff] %v686
    %699 = vst [vmem:[#allocation30 + $0x8] sm:$0xff] %v687
    %700 = vst [vmem:[#allocation30 + $0x10] sm:$0xff] %v688
    %701 = vst [vmem:[#allocation30 + $0x18] sm:$0xff] %v689
    %702 = vst [vmem:[#allocation30 + $0x20] sm:$0xff] %v690
    %703 = vst [vmem:[#allocation30 + $0x28] sm:$0xff] %v691
    %704 = vst [vmem:[#allocation30 + $0x30] sm:$0xff] %v692
    %705 = vst [vmem:[#allocation30 + $0x38] sm:$0xff] %v693
    %706 = vst [vmem:[#allocation30 + $0x40] sm:$0xff] %v694
    %707 = vst [vmem:[#allocation30 + $0x48] sm:$0xff] %v695
    %708 = vst [vmem:[#allocation30 + $0x50] sm:$0xff] %v696
    %709 = vst [vmem:[#allocation30 + $0x58] sm:$0xff] %v697
    %v710 = vld [vmem:[#allocation4] sm:$0x1]
    %v711 = vld [vmem:[#allocation3] sm:$0xff]
    %v712 = vpack.c.bf16 %v710, %v710
    %v713 = vld [vmem:[#allocation10] sm:$0xf]
    %v714 = vld [vmem:[#allocation10 + $0x4] sm:$0xf]
    %v715 = vld [vmem:[#allocation10 + $0x8] sm:$0xf]
    %v716 = vld [vmem:[#allocation10 + $0xc] sm:$0xf]
    %v717 = vld [vmem:[#allocation10 + $0x10] sm:$0xf]
    %v718 = vld [vmem:[#allocation10 + $0x14] sm:$0xf]
    %v719 = vld [vmem:[#allocation10 + $0x18] sm:$0xf]
    %v720 = vld [vmem:[#allocation10 + $0x1c] sm:$0xf]
    %v721 = vld [vmem:[#allocation10 + $0x20] sm:$0xf]
    %v722 = vld [vmem:[#allocation10 + $0x24] sm:$0xf]
    %v723 = vld [vmem:[#allocation10 + $0x28] sm:$0xf]
    %v724 = vld [vmem:[#allocation10 + $0x2c] sm:$0xf]
    %v725 = vld [vmem:[#allocation10 + $0x30] sm:$0xf]
    %v726 = vld [vmem:[#allocation10 + $0x34] sm:$0xf]
    %v727 = vld [vmem:[#allocation10 + $0x38] sm:$0xf]
    %v728 = vld [vmem:[#allocation10 + $0x3c] sm:$0xf]
    %v745 = vunpack.c.l.b16 %v713
    %v746 = vunpack.c.l.b16 %v714
    %v747 = vunpack.c.l.b16 %v715
    %v748 = vunpack.c.l.b16 %v716
    %v749 = vunpack.c.l.b16 %v717
    %v750 = vunpack.c.l.b16 %v718
    %v751 = vunpack.c.l.b16 %v719
    %v752 = vunpack.c.l.b16 %v720
    %v753 = vunpack.c.l.b16 %v721
    %v754 = vunpack.c.l.b16 %v722
    %v755 = vunpack.c.l.b16 %v723
    %v756 = vunpack.c.l.b16 %v724
    %v757 = vunpack.c.l.b16 %v725
    %v758 = vunpack.c.l.b16 %v726
    %v759 = vunpack.c.l.b16 %v727
    %v760 = vunpack.c.l.b16 %v728
    %v761 = vpack.c.b16 %v746, %v745
    %v762 = vpack.c.b16 %v748, %v747
    %v763 = vpack.c.b16 %v750, %v749
    %v764 = vpack.c.b16 %v752, %v751
    %v765 = vpack.c.b16 %v754, %v753
    %v766 = vpack.c.b16 %v756, %v755
    %v767 = vpack.c.b16 %v758, %v757
    %v768 = vpack.c.b16 %v760, %v759
    %v778 = vrot.slane %v711, 1
    %780 = vmatpush.bf16.msra.mxu0 %v768
    %781 = vmatpush.bf16.msra.mxu0 %v767
    %782 = vmatpush.bf16.msra.mxu0 %v766
    %783 = vmatpush.bf16.msra.mxu0 %v765
    %784 = vmatpush.bf16.msra.mxu0 %v764
    %785 = vmatpush.bf16.msra.mxu0 %v763
    %786 = vmatpush.bf16.msra.mxu0 %v762
    %787 = vmatpush.bf16.msra.mxu0 %v761
    %788 = vmatmul.bf16.gmra.mxu0 %v712
    %v789 = vpop.f32.mrf.mxu0
    %v790 = vadd.f32 %v778, %v789
    %v791 = vpop.f32.mrf.mxu0
    %792 = vdwg.mxu0
    %v793 = vmax.f32 %v790, 0.0
    %v794 = vpack.c.bf16 %v793, %v793
    %v795 = vld [vmem:[#allocation13] sm:$0xf]
    %v796 = vld [vmem:[#allocation13 + $0x4] sm:$0xf]
    %v797 = vld [vmem:[#allocation13 + $0x8] sm:$0xf]
    %v798 = vld [vmem:[#allocation13 + $0xc] sm:$0xf]
    %v799 = vld [vmem:[#allocation13 + $0x10] sm:$0xf]
    %v800 = vld [vmem:[#allocation13 + $0x14] sm:$0xf]
    %v801 = vld [vmem:[#allocation13 + $0x18] sm:$0xf]
    %v802 = vld [vmem:[#allocation13 + $0x1c] sm:$0xf]
    %v803 = vld [vmem:[#allocation13 + $0x20] sm:$0xf]
    %v804 = vld [vmem:[#allocation13 + $0x24] sm:$0xf]
    %v805 = vld [vmem:[#allocation13 + $0x28] sm:$0xf]
    %v806 = vld [vmem:[#allocation13 + $0x2c] sm:$0xf]
    %v807 = vld [vmem:[#allocation13 + $0x30] sm:$0xf]
    %v808 = vld [vmem:[#allocation13 + $0x34] sm:$0xf]
    %v809 = vld [vmem:[#allocation13 + $0x38] sm:$0xf]
    %v810 = vld [vmem:[#allocation13 + $0x3c] sm:$0xf]
    %v811 = vld [vmem:[%s17] sm:$0x1]
    %v828 = vunpack.c.l.b16 %v795
    %v829 = vunpack.c.l.b16 %v796
    %v830 = vunpack.c.l.b16 %v797
    %v831 = vunpack.c.l.b16 %v798
    %v832 = vunpack.c.l.b16 %v799
    %v833 = vunpack.c.l.b16 %v800
    %v834 = vunpack.c.l.b16 %v801
    %v835 = vunpack.c.l.b16 %v802
    %v836 = vunpack.c.l.b16 %v803
    %v837 = vunpack.c.l.b16 %v804
    %v838 = vunpack.c.l.b16 %v805
    %v839 = vunpack.c.l.b16 %v806
    %v840 = vunpack.c.l.b16 %v807
    %v841 = vunpack.c.l.b16 %v808
    %v842 = vunpack.c.l.b16 %v809
    %v843 = vunpack.c.l.b16 %v810
    %v844 = vpack.c.b16 %v829, %v828
    %v845 = vpack.c.b16 %v831, %v830
    %v846 = vpack.c.b16 %v833, %v832
    %v847 = vpack.c.b16 %v835, %v834
    %v848 = vpack.c.b16 %v837, %v836
    %v849 = vpack.c.b16 %v839, %v838
    %v850 = vpack.c.b16 %v841, %v840
    %v851 = vpack.c.b16 %v843, %v842
    %860 = vmatpush.bf16.msra.mxu0 %v851
    %861 = vmatpush.bf16.msra.mxu0 %v850
    %862 = vmatpush.bf16.msra.mxu0 %v849
    %863 = vmatpush.bf16.msra.mxu0 %v848
    %864 = vmatpush.bf16.msra.mxu0 %v847
    %865 = vmatpush.bf16.msra.mxu0 %v846
    %866 = vmatpush.bf16.msra.mxu0 %v845
    %867 = vmatpush.bf16.msra.mxu0 %v844
    %868 = vmatmul.bf16.gmra.mxu0 %v794
    %v869 = vpop.f32.mrf.mxu0
    %v870 = vadd.f32 %v811, %v869
    %v871 = vpop.f32.mrf.mxu0
    %872 = vdwg.mxu0
    %v873 = vmax.f32 %v870, 0.0
    %v874 = vpack.c.bf16 %v873, %v873
    %v875 = vld [vmem:[#allocation15] sm:$0xf]
    %v876 = vld [vmem:[#allocation15 + $0x4] sm:$0xf]
    %v877 = vld [vmem:[#allocation15 + $0x8] sm:$0xf]
    %v878 = vld [vmem:[#allocation15 + $0xc] sm:$0xf]
    %v879 = vld [vmem:[#allocation15 + $0x10] sm:$0xf]
    %v880 = vld [vmem:[#allocation15 + $0x14] sm:$0xf]
    %v881 = vld [vmem:[#allocation15 + $0x18] sm:$0xf]
    %v882 = vld [vmem:[#allocation15 + $0x1c] sm:$0xf]
    %v883 = vld [vmem:[#allocation15 + $0x20] sm:$0xf]
    %v884 = vld [vmem:[#allocation15 + $0x24] sm:$0xf]
    %v885 = vld [vmem:[#allocation15 + $0x28] sm:$0xf]
    %v886 = vld [vmem:[#allocation15 + $0x2c] sm:$0xf]
    %v887 = vld [vmem:[#allocation15 + $0x30] sm:$0xf]
    %v888 = vld [vmem:[#allocation15 + $0x34] sm:$0xf]
    %v889 = vld [vmem:[#allocation15 + $0x38] sm:$0xf]
    %v890 = vld [vmem:[#allocation15 + $0x3c] sm:$0xf]
    %v891 = vld [vmem:[%s19] sm:$0x1]
    %v908 = vunpack.c.l.b16 %v875
    %v909 = vunpack.c.l.b16 %v876
    %v910 = vunpack.c.l.b16 %v877
    %v911 = vunpack.c.l.b16 %v878
    %v912 = vunpack.c.l.b16 %v879
    %v913 = vunpack.c.l.b16 %v880
    %v914 = vunpack.c.l.b16 %v881
    %v915 = vunpack.c.l.b16 %v882
    %v916 = vunpack.c.l.b16 %v883
    %v917 = vunpack.c.l.b16 %v884
    %v918 = vunpack.c.l.b16 %v885
    %v919 = vunpack.c.l.b16 %v886
    %v920 = vunpack.c.l.b16 %v887
    %v921 = vunpack.c.l.b16 %v888
    %v922 = vunpack.c.l.b16 %v889
    %v923 = vunpack.c.l.b16 %v890
    %v924 = vpack.c.b16 %v909, %v908
    %v925 = vpack.c.b16 %v911, %v910
    %v926 = vpack.c.b16 %v913, %v912
    %v927 = vpack.c.b16 %v915, %v914
    %v928 = vpack.c.b16 %v917, %v916
    %v929 = vpack.c.b16 %v919, %v918
    %v930 = vpack.c.b16 %v921, %v920
    %v931 = vpack.c.b16 %v923, %v922
    %940 = vmatpush.bf16.msra.mxu0 %v931
    %941 = vmatpush.bf16.msra.mxu0 %v930
    %942 = vmatpush.bf16.msra.mxu0 %v929
    %943 = vmatpush.bf16.msra.mxu0 %v928
    %944 = vmatpush.bf16.msra.mxu0 %v927
    %945 = vmatpush.bf16.msra.mxu0 %v926
    %946 = vmatpush.bf16.msra.mxu0 %v925
    %947 = vmatpush.bf16.msra.mxu0 %v924
    %948 = vmatmul.bf16.gmra.mxu0 %v874
    %v949 = vpop.f32.mrf.mxu0
    %v950 = vadd.f32 %v891, %v949
    %v951 = vpop.f32.mrf.mxu0
    %952 = vdwg.mxu0
    %v953 = vpack.c.bf16 %v950, %v950
    %v954 = vrot.slane %v711, 2
    %956 = vmatpush.bf16.msra.mxu0 %v768
    %957 = vmatpush.bf16.msra.mxu0 %v767
    %958 = vmatpush.bf16.msra.mxu0 %v766
    %959 = vmatpush.bf16.msra.mxu0 %v765
    %960 = vmatpush.bf16.msra.mxu0 %v764
    %961 = vmatpush.bf16.msra.mxu0 %v763
    %962 = vmatpush.bf16.msra.mxu0 %v762
    %963 = vmatpush.bf16.msra.mxu0 %v761
    %964 = vmatmul.bf16.gmra.mxu0 %v953
    %v965 = vpop.f32.mrf.mxu0
    %v966 = vadd.f32 %v954, %v965
    %v967 = vpop.f32.mrf.mxu0
    %968 = vdwg.mxu0
    %v969 = vmax.f32 %v966, 0.0
    %v970 = vpack.c.bf16 %v969, %v969
    %971 = vmatpush.bf16.msra.mxu0 %v851
    %972 = vmatpush.bf16.msra.mxu0 %v850
    %973 = vmatpush.bf16.msra.mxu0 %v849
    %974 = vmatpush.bf16.msra.mxu0 %v848
    %975 = vmatpush.bf16.msra.mxu0 %v847
    %976 = vmatpush.bf16.msra.mxu0 %v846
    %977 = vmatpush.bf16.msra.mxu0 %v845
    %978 = vmatpush.bf16.msra.mxu0 %v844
    %979 = vmatmul.bf16.gmra.mxu0 %v970
    %v980 = vpop.f32.mrf.mxu0
    %v981 = vadd.f32 %v811, %v980
    %v982 = vpop.f32.mrf.mxu0
    %983 = vdwg.mxu0
    %v984 = vmax.f32 %v981, 0.0
    %v985 = vpack.c.bf16 %v984, %v984
    %986 = vmatpush.bf16.msra.mxu0 %v931
    %987 = vmatpush.bf16.msra.mxu0 %v930
    %988 = vmatpush.bf16.msra.mxu0 %v929
    %989 = vmatpush.bf16.msra.mxu0 %v928
    %990 = vmatpush.bf16.msra.mxu0 %v927
    %991 = vmatpush.bf16.msra.mxu0 %v926
    %992 = vmatpush.bf16.msra.mxu0 %v925
    %993 = vmatpush.bf16.msra.mxu0 %v924
    %994 = vmatmul.bf16.gmra.mxu0 %v985
    %v995 = vpop.f32.mrf.mxu0
    %v996 = vadd.f32 %v891, %v995
    %v997 = vpop.f32.mrf.mxu0
    %998 = vdwg.mxu0
    %v999 = vpack.c.bf16 %v996, %v996
    %v1000 = vrot.slane %v711, 3
    %1002 = vmatpush.bf16.msra.mxu0 %v768
    %1003 = vmatpush.bf16.msra.mxu0 %v767
    %1004 = vmatpush.bf16.msra.mxu0 %v766
    %1005 = vmatpush.bf16.msra.mxu0 %v765
    %1006 = vmatpush.bf16.msra.mxu0 %v764
    %1007 = vmatpush.bf16.msra.mxu0 %v763
    %1008 = vmatpush.bf16.msra.mxu0 %v762
    %1009 = vmatpush.bf16.msra.mxu0 %v761
    %1010 = vmatmul.bf16.gmra.mxu0 %v999
    %v1011 = vpop.f32.mrf.mxu0
    %v1012 = vadd.f32 %v1000, %v1011
    %v1013 = vpop.f32.mrf.mxu0
    %1014 = vdwg.mxu0
    %v1015 = vmax.f32 %v1012, 0.0
    %v1016 = vpack.c.bf16 %v1015, %v1015
    %1017 = vmatpush.bf16.msra.mxu0 %v851
    %1018 = vmatpush.bf16.msra.mxu0 %v850
    %1019 = vmatpush.bf16.msra.mxu0 %v849
    %1020 = vmatpush.bf16.msra.mxu0 %v848
    %1021 = vmatpush.bf16.msra.mxu0 %v847
    %1022 = vmatpush.bf16.msra.mxu0 %v846
    %1023 = vmatpush.bf16.msra.mxu0 %v845
    %1024 = vmatpush.bf16.msra.mxu0 %v844
    %1025 = vmatmul.bf16.gmra.mxu0 %v1016
    %v1026 = vpop.f32.mrf.mxu0
    %v1027 = vadd.f32 %v811, %v1026
    %v1028 = vpop.f32.mrf.mxu0
    %1029 = vdwg.mxu0
    %v1030 = vmax.f32 %v1027, 0.0
    %v1031 = vpack.c.bf16 %v1030, %v1030
    %1032 = vmatpush.bf16.msra.mxu0 %v931
    %1033 = vmatpush.bf16.msra.mxu0 %v930
    %1034 = vmatpush.bf16.msra.mxu0 %v929
    %1035 = vmatpush.bf16.msra.mxu0 %v928
    %1036 = vmatpush.bf16.msra.mxu0 %v927
    %1037 = vmatpush.bf16.msra.mxu0 %v926
    %1038 = vmatpush.bf16.msra.mxu0 %v925
    %1039 = vmatpush.bf16.msra.mxu0 %v924
    %1040 = vmatmul.bf16.gmra.mxu0 %v1031
    %v1041 = vpop.f32.mrf.mxu0
    %v1042 = vadd.f32 %v891, %v1041
    %v1043 = vpop.f32.mrf.mxu0
    %1044 = vdwg.mxu0
    %v1045 = vpack.c.bf16 %v1042, %v1042
    %v1046 = vrot.slane %v711, 4
    %1048 = vmatpush.bf16.msra.mxu0 %v768
    %1049 = vmatpush.bf16.msra.mxu0 %v767
    %1050 = vmatpush.bf16.msra.mxu0 %v766
    %1051 = vmatpush.bf16.msra.mxu0 %v765
    %1052 = vmatpush.bf16.msra.mxu0 %v764
    %1053 = vmatpush.bf16.msra.mxu0 %v763
    %1054 = vmatpush.bf16.msra.mxu0 %v762
    %1055 = vmatpush.bf16.msra.mxu0 %v761
    %1056 = vmatmul.bf16.gmra.mxu0 %v1045
    %v1057 = vpop.f32.mrf.mxu0
    %v1058 = vadd.f32 %v1046, %v1057
    %v1059 = vpop.f32.mrf.mxu0
    %1060 = vdwg.mxu0
    %v1061 = vmax.f32 %v1058, 0.0
    %v1062 = vpack.c.bf16 %v1061, %v1061
    %1063 = vmatpush.bf16.msra.mxu0 %v851
    %1064 = vmatpush.bf16.msra.mxu0 %v850
    %1065 = vmatpush.bf16.msra.mxu0 %v849
    %1066 = vmatpush.bf16.msra.mxu0 %v848
    %1067 = vmatpush.bf16.msra.mxu0 %v847
    %1068 = vmatpush.bf16.msra.mxu0 %v846
    %1069 = vmatpush.bf16.msra.mxu0 %v845
    %1070 = vmatpush.bf16.msra.mxu0 %v844
    %1071 = vmatmul.bf16.gmra.mxu0 %v1062
    %v1072 = vpop.f32.mrf.mxu0
    %v1073 = vadd.f32 %v811, %v1072
    %v1074 = vpop.f32.mrf.mxu0
    %1075 = vdwg.mxu0
    %v1076 = vmax.f32 %v1073, 0.0
    %v1077 = vpack.c.bf16 %v1076, %v1076
    %1078 = vmatpush.bf16.msra.mxu0 %v931
    %1079 = vmatpush.bf16.msra.mxu0 %v930
    %1080 = vmatpush.bf16.msra.mxu0 %v929
    %1081 = vmatpush.bf16.msra.mxu0 %v928
    %1082 = vmatpush.bf16.msra.mxu0 %v927
    %1083 = vmatpush.bf16.msra.mxu0 %v926
    %1084 = vmatpush.bf16.msra.mxu0 %v925
    %1085 = vmatpush.bf16.msra.mxu0 %v924
    %1086 = vmatmul.bf16.gmra.mxu0 %v1077
    %v1087 = vpop.f32.mrf.mxu0
    %v1088 = vadd.f32 %v891, %v1087
    %v1089 = vpop.f32.mrf.mxu0
    %1090 = vdwg.mxu0
    %v1091 = vpack.c.bf16 %v1088, %v1088
    %v1092 = vrot.slane %v711, 5
    %1094 = vmatpush.bf16.msra.mxu0 %v768
    %1095 = vmatpush.bf16.msra.mxu0 %v767
    %1096 = vmatpush.bf16.msra.mxu0 %v766
    %1097 = vmatpush.bf16.msra.mxu0 %v765
    %1098 = vmatpush.bf16.msra.mxu0 %v764
    %1099 = vmatpush.bf16.msra.mxu0 %v763
    %1100 = vmatpush.bf16.msra.mxu0 %v762
    %1101 = vmatpush.bf16.msra.mxu0 %v761
    %1102 = vmatmul.bf16.gmra.mxu0 %v1091
    %v1103 = vpop.f32.mrf.mxu0
    %v1104 = vadd.f32 %v1092, %v1103
    %v1105 = vpop.f32.mrf.mxu0
    %1106 = vdwg.mxu0
    %v1107 = vmax.f32 %v1104, 0.0
    %v1108 = vpack.c.bf16 %v1107, %v1107
    %1109 = vmatpush.bf16.msra.mxu0 %v851
    %1110 = vmatpush.bf16.msra.mxu0 %v850
    %1111 = vmatpush.bf16.msra.mxu0 %v849
    %1112 = vmatpush.bf16.msra.mxu0 %v848
    %1113 = vmatpush.bf16.msra.mxu0 %v847
    %1114 = vmatpush.bf16.msra.mxu0 %v846
    %1115 = vmatpush.bf16.msra.mxu0 %v845
    %1116 = vmatpush.bf16.msra.mxu0 %v844
    %1117 = vmatmul.bf16.gmra.mxu0 %v1108
    %v1118 = vpop.f32.mrf.mxu0
    %v1119 = vadd.f32 %v811, %v1118
    %v1120 = vpop.f32.mrf.mxu0
    %1121 = vdwg.mxu0
    %v1122 = vmax.f32 %v1119, 0.0
    %v1123 = vpack.c.bf16 %v1122, %v1122
    %1124 = vmatpush.bf16.msra.mxu0 %v931
    %1125 = vmatpush.bf16.msra.mxu0 %v930
    %1126 = vmatpush.bf16.msra.mxu0 %v929
    %1127 = vmatpush.bf16.msra.mxu0 %v928
    %1128 = vmatpush.bf16.msra.mxu0 %v927
    %1129 = vmatpush.bf16.msra.mxu0 %v926
    %1130 = vmatpush.bf16.msra.mxu0 %v925
    %1131 = vmatpush.bf16.msra.mxu0 %v924
    %1132 = vmatmul.bf16.gmra.mxu0 %v1123
    %v1133 = vpop.f32.mrf.mxu0
    %v1134 = vadd.f32 %v891, %v1133
    %v1135 = vpop.f32.mrf.mxu0
    %1136 = vdwg.mxu0
    %v1137 = vpack.c.bf16 %v1134, %v1134
    %v1138 = vrot.slane %v711, 6
    %1140 = vmatpush.bf16.msra.mxu0 %v768
    %1141 = vmatpush.bf16.msra.mxu0 %v767
    %1142 = vmatpush.bf16.msra.mxu0 %v766
    %1143 = vmatpush.bf16.msra.mxu0 %v765
    %1144 = vmatpush.bf16.msra.mxu0 %v764
    %1145 = vmatpush.bf16.msra.mxu0 %v763
    %1146 = vmatpush.bf16.msra.mxu0 %v762
    %1147 = vmatpush.bf16.msra.mxu0 %v761
    %1148 = vmatmul.bf16.gmra.mxu0 %v1137
    %v1149 = vpop.f32.mrf.mxu0
    %v1150 = vadd.f32 %v1138, %v1149
    %v1151 = vpop.f32.mrf.mxu0
    %1152 = vdwg.mxu0
    %v1153 = vmax.f32 %v1150, 0.0
    %v1154 = vpack.c.bf16 %v1153, %v1153
    %1155 = vmatpush.bf16.msra.mxu0 %v851
    %1156 = vmatpush.bf16.msra.mxu0 %v850
    %1157 = vmatpush.bf16.msra.mxu0 %v849
    %1158 = vmatpush.bf16.msra.mxu0 %v848
    %1159 = vmatpush.bf16.msra.mxu0 %v847
    %1160 = vmatpush.bf16.msra.mxu0 %v846
    %1161 = vmatpush.bf16.msra.mxu0 %v845
    %1162 = vmatpush.bf16.msra.mxu0 %v844
    %1163 = vmatmul.bf16.gmra.mxu0 %v1154
    %v1164 = vpop.f32.mrf.mxu0
    %v1165 = vadd.f32 %v811, %v1164
    %v1166 = vpop.f32.mrf.mxu0
    %1167 = vdwg.mxu0
    %v1168 = vmax.f32 %v1165, 0.0
    %v1169 = vpack.c.bf16 %v1168, %v1168
    %1170 = vmatpush.bf16.msra.mxu0 %v931
    %1171 = vmatpush.bf16.msra.mxu0 %v930
    %1172 = vmatpush.bf16.msra.mxu0 %v929
    %1173 = vmatpush.bf16.msra.mxu0 %v928
    %1174 = vmatpush.bf16.msra.mxu0 %v927
    %1175 = vmatpush.bf16.msra.mxu0 %v926
    %1176 = vmatpush.bf16.msra.mxu0 %v925
    %1177 = vmatpush.bf16.msra.mxu0 %v924
    %1178 = vmatmul.bf16.gmra.mxu0 %v1169
    %v1179 = vpop.f32.mrf.mxu0
    %v1180 = vadd.f32 %v891, %v1179
    %v1181 = vpop.f32.mrf.mxu0
    %1182 = vdwg.mxu0
    %v1183 = vpack.c.bf16 %v1180, %v1180
    %v1184 = vrot.slane %v711, 7
    %1186 = vmatpush.bf16.msra.mxu0 %v768
    %1187 = vmatpush.bf16.msra.mxu0 %v767
    %1188 = vmatpush.bf16.msra.mxu0 %v766
    %1189 = vmatpush.bf16.msra.mxu0 %v765
    %1190 = vmatpush.bf16.msra.mxu0 %v764
    %1191 = vmatpush.bf16.msra.mxu0 %v763
    %1192 = vmatpush.bf16.msra.mxu0 %v762
    %1193 = vmatpush.bf16.msra.mxu0 %v761
    %1194 = vmatmul.bf16.gmra.mxu0 %v1183
    %v1195 = vpop.f32.mrf.mxu0
    %v1196 = vadd.f32 %v1184, %v1195
    %v1197 = vpop.f32.mrf.mxu0
    %1198 = vdwg.mxu0
    %v1199 = vmax.f32 %v1196, 0.0
    %v1200 = vpack.c.bf16 %v1199, %v1199
    %1201 = vmatpush.bf16.msra.mxu0 %v851
    %1202 = vmatpush.bf16.msra.mxu0 %v850
    %1203 = vmatpush.bf16.msra.mxu0 %v849
    %1204 = vmatpush.bf16.msra.mxu0 %v848
    %1205 = vmatpush.bf16.msra.mxu0 %v847
    %1206 = vmatpush.bf16.msra.mxu0 %v846
    %1207 = vmatpush.bf16.msra.mxu0 %v845
    %1208 = vmatpush.bf16.msra.mxu0 %v844
    %1209 = vmatmul.bf16.gmra.mxu0 %v1200
    %v1210 = vpop.f32.mrf.mxu0
    %v1211 = vadd.f32 %v811, %v1210
    %v1212 = vpop.f32.mrf.mxu0
    %1213 = vdwg.mxu0
    %v1214 = vmax.f32 %v1211, 0.0
    %v1215 = vpack.c.bf16 %v1214, %v1214
    %1216 = vmatpush.bf16.msra.mxu0 %v931
    %1217 = vmatpush.bf16.msra.mxu0 %v930
    %1218 = vmatpush.bf16.msra.mxu0 %v929
    %1219 = vmatpush.bf16.msra.mxu0 %v928
    %1220 = vmatpush.bf16.msra.mxu0 %v927
    %1221 = vmatpush.bf16.msra.mxu0 %v926
    %1222 = vmatpush.bf16.msra.mxu0 %v925
    %1223 = vmatpush.bf16.msra.mxu0 %v924
    %1224 = vmatmul.bf16.gmra.mxu0 %v1215
    %v1225 = vpop.f32.mrf.mxu0
    %v1226 = vadd.f32 %v891, %v1225
    %v1227 = vpop.f32.mrf.mxu0
    %1228 = vdwg.mxu0
    %v1230 = vrot.slane %v950, 7
    %v1233 = vrot.slane %v996, 6
    %v1236 = vrot.slane %v1042, 5
    %v1239 = vrot.slane %v1088, 4
    %v1242 = vrot.slane %v1134, 3
    %v1245 = vrot.slane %v1180, 2
    %v1248 = vrot.slane %v1226, 1
    %vm1250 = vcmask 1040384
    %v1251 = vsel %vm1250, %v710, %v1230
    %vm1252 = vcmask 1041408
    %v1253 = vsel %vm1252, %v1251, %v1233
    %vm1254 = vcmask 1042432
    %v1255 = vsel %vm1254, %v1253, %v1236
    %vm1256 = vcmask 1043456
    %v1257 = vsel %vm1256, %v1255, %v1239
    %vm1258 = vcmask 1044480
    %v1259 = vsel %vm1258, %v1257, %v1242
    %vm1260 = vcmask 1045504
    %v1261 = vsel %vm1260, %v1259, %v1245
    %vm1262 = vcmask 1046528
    %v1263 = vsel %vm1262, %v1261, %v1248
    %1264 = vst [vmem:[#allocation2] sm:$0xff] %v1263
    %v1265 = vld [vmem:[#allocation3 + $0x8] sm:$0xff]
    %v1266 = vpack.c.bf16 %v1226, %v1226
    %v1267 = vld [vmem:[#allocation10] sm:$0xf]
    %v1268 = vld [vmem:[#allocation10 + $0x4] sm:$0xf]
    %v1269 = vld [vmem:[#allocation10 + $0x8] sm:$0xf]
    %v1270 = vld [vmem:[#allocation10 + $0xc] sm:$0xf]
    %v1271 = vld [vmem:[#allocation10 + $0x10] sm:$0xf]
    %v1272 = vld [vmem:[#allocation10 + $0x14] sm:$0xf]
    %v1273 = vld [vmem:[#allocation10 + $0x18] sm:$0xf]
    %v1274 = vld [vmem:[#allocation10 + $0x1c] sm:$0xf]
    %v1275 = vld [vmem:[#allocation10 + $0x20] sm:$0xf]
    %v1276 = vld [vmem:[#allocation10 + $0x24] sm:$0xf]
    %v1277 = vld [vmem:[#allocation10 + $0x28] sm:$0xf]
    %v1278 = vld [vmem:[#allocation10 + $0x2c] sm:$0xf]
    %v1279 = vld [vmem:[#allocation10 + $0x30] sm:$0xf]
    %v1280 = vld [vmem:[#allocation10 + $0x34] sm:$0xf]
    %v1281 = vld [vmem:[#allocation10 + $0x38] sm:$0xf]
    %v1282 = vld [vmem:[#allocation10 + $0x3c] sm:$0xf]
    %v1299 = vunpack.c.l.b16 %v1267
    %v1300 = vunpack.c.l.b16 %v1268
    %v1301 = vunpack.c.l.b16 %v1269
    %v1302 = vunpack.c.l.b16 %v1270
    %v1303 = vunpack.c.l.b16 %v1271
    %v1304 = vunpack.c.l.b16 %v1272
    %v1305 = vunpack.c.l.b16 %v1273
    %v1306 = vunpack.c.l.b16 %v1274
    %v1307 = vunpack.c.l.b16 %v1275
    %v1308 = vunpack.c.l.b16 %v1276
    %v1309 = vunpack.c.l.b16 %v1277
    %v1310 = vunpack.c.l.b16 %v1278
    %v1311 = vunpack.c.l.b16 %v1279
    %v1312 = vunpack.c.l.b16 %v1280
    %v1313 = vunpack.c.l.b16 %v1281
    %v1314 = vunpack.c.l.b16 %v1282
    %v1315 = vpack.c.b16 %v1300, %v1299
    %v1316 = vpack.c.b16 %v1302, %v1301
    %v1317 = vpack.c.b16 %v1304, %v1303
    %v1318 = vpack.c.b16 %v1306, %v1305
    %v1319 = vpack.c.b16 %v1308, %v1307
    %v1320 = vpack.c.b16 %v1310, %v1309
    %v1321 = vpack.c.b16 %v1312, %v1311
    %v1322 = vpack.c.b16 %v1314, %v1313
    %1331 = vmatpush.bf16.msra.mxu0 %v1322
    %1332 = vmatpush.bf16.msra.mxu0 %v1321
    %1333 = vmatpush.bf16.msra.mxu0 %v1320
    %1334 = vmatpush.bf16.msra.mxu0 %v1319
    %1335 = vmatpush.bf16.msra.mxu0 %v1318
    %1336 = vmatpush.bf16.msra.mxu0 %v1317
    %1337 = vmatpush.bf16.msra.mxu0 %v1316
    %1338 = vmatpush.bf16.msra.mxu0 %v1315
    %1339 = vmatmul.bf16.gmra.mxu0 %v1266
    %v1340 = vpop.f32.mrf.mxu0
    %v1341 = vadd.f32 %v1265, %v1340
    %v1342 = vpop.f32.mrf.mxu0
    %1343 = vdwg.mxu0
    %v1344 = vmax.f32 %v1341, 0.0
    %v1345 = vpack.c.bf16 %v1344, %v1344
    %v1346 = vld [vmem:[#allocation13] sm:$0xf]
    %v1347 = vld [vmem:[#allocation13 + $0x4] sm:$0xf]
    %v1348 = vld [vmem:[#allocation13 + $0x8] sm:$0xf]
    %v1349 = vld [vmem:[#allocation13 + $0xc] sm:$0xf]
    %v1350 = vld [vmem:[#allocation13 + $0x10] sm:$0xf]
    %v1351 = vld [vmem:[#allocation13 + $0x14] sm:$0xf]
    %v1352 = vld [vmem:[#allocation13 + $0x18] sm:$0xf]
    %v1353 = vld [vmem:[#allocation13 + $0x1c] sm:$0xf]
    %v1354 = vld [vmem:[#allocation13 + $0x20] sm:$0xf]
    %v1355 = vld [vmem:[#allocation13 + $0x24] sm:$0xf]
    %v1356 = vld [vmem:[#allocation13 + $0x28] sm:$0xf]
    %v1357 = vld [vmem:[#allocation13 + $0x2c] sm:$0xf]
    %v1358 = vld [vmem:[#allocation13 + $0x30] sm:$0xf]
    %v1359 = vld [vmem:[#allocation13 + $0x34] sm:$0xf]
    %v1360 = vld [vmem:[#allocation13 + $0x38] sm:$0xf]
    %v1361 = vld [vmem:[#allocation13 + $0x3c] sm:$0xf]
    %v1362 = vld [vmem:[%s17] sm:$0x1]
    %v1379 = vunpack.c.l.b16 %v1346
    %v1380 = vunpack.c.l.b16 %v1347
    %v1381 = vunpack.c.l.b16 %v1348
    %v1382 = vunpack.c.l.b16 %v1349
    %v1383 = vunpack.c.l.b16 %v1350
    %v1384 = vunpack.c.l.b16 %v1351
    %v1385 = vunpack.c.l.b16 %v1352
    %v1386 = vunpack.c.l.b16 %v1353
    %v1387 = vunpack.c.l.b16 %v1354
    %v1388 = vunpack.c.l.b16 %v1355
    %v1389 = vunpack.c.l.b16 %v1356
    %v1390 = vunpack.c.l.b16 %v1357
    %v1391 = vunpack.c.l.b16 %v1358
    %v1392 = vunpack.c.l.b16 %v1359
    %v1393 = vunpack.c.l.b16 %v1360
    %v1394 = vunpack.c.l.b16 %v1361
    %v1395 = vpack.c.b16 %v1380, %v1379
    %v1396 = vpack.c.b16 %v1382, %v1381
    %v1397 = vpack.c.b16 %v1384, %v1383
    %v1398 = vpack.c.b16 %v1386, %v1385
    %v1399 = vpack.c.b16 %v1388, %v1387
    %v1400 = vpack.c.b16 %v1390, %v1389
    %v1401 = vpack.c.b16 %v1392, %v1391
    %v1402 = vpack.c.b16 %v1394, %v1393
    %1411 = vmatpush.bf16.msra.mxu0 %v1402
    %1412 = vmatpush.bf16.msra.mxu0 %v1401
    %1413 = vmatpush.bf16.msra.mxu0 %v1400
    %1414 = vmatpush.bf16.msra.mxu0 %v1399
    %1415 = vmatpush.bf16.msra.mxu0 %v1398
    %1416 = vmatpush.bf16.msra.mxu0 %v1397
    %1417 = vmatpush.bf16.msra.mxu0 %v1396
    %1418 = vmatpush.bf16.msra.mxu0 %v1395
    %1419 = vmatmul.bf16.gmra.mxu0 %v1345
    %v1420 = vpop.f32.mrf.mxu0
    %v1421 = vadd.f32 %v1362, %v1420
    %v1422 = vpop.f32.mrf.mxu0
    %1423 = vdwg.mxu0
    %v1424 = vmax.f32 %v1421, 0.0
    %v1425 = vpack.c.bf16 %v1424, %v1424
    %v1426 = vld [vmem:[#allocation15] sm:$0xf]
    %v1427 = vld [vmem:[#allocation15 + $0x4] sm:$0xf]
    %v1428 = vld [vmem:[#allocation15 + $0x8] sm:$0xf]
    %v1429 = vld [vmem:[#allocation15 + $0xc] sm:$0xf]
    %v1430 = vld [vmem:[#allocation15 + $0x10] sm:$0xf]
    %v1431 = vld [vmem:[#allocation15 + $0x14] sm:$0xf]
    %v1432 = vld [vmem:[#allocation15 + $0x18] sm:$0xf]
    %v1433 = vld [vmem:[#allocation15 + $0x1c] sm:$0xf]
    %v1434 = vld [vmem:[#allocation15 + $0x20] sm:$0xf]
    %v1435 = vld [vmem:[#allocation15 + $0x24] sm:$0xf]
    %v1436 = vld [vmem:[#allocation15 + $0x28] sm:$0xf]
    %v1437 = vld [vmem:[#allocation15 + $0x2c] sm:$0xf]
    %v1438 = vld [vmem:[#allocation15 + $0x30] sm:$0xf]
    %v1439 = vld [vmem:[#allocation15 + $0x34] sm:$0xf]
    %v1440 = vld [vmem:[#allocation15 + $0x38] sm:$0xf]
    %v1441 = vld [vmem:[#allocation15 + $0x3c] sm:$0xf]
    %v1442 = vld [vmem:[%s19] sm:$0x1]
    %v1459 = vunpack.c.l.b16 %v1426
    %v1460 = vunpack.c.l.b16 %v1427
    %v1461 = vunpack.c.l.b16 %v1428
    %v1462 = vunpack.c.l.b16 %v1429
    %v1463 = vunpack.c.l.b16 %v1430
    %v1464 = vunpack.c.l.b16 %v1431
    %v1465 = vunpack.c.l.b16 %v1432
    %v1466 = vunpack.c.l.b16 %v1433
    %v1467 = vunpack.c.l.b16 %v1434
    %v1468 = vunpack.c.l.b16 %v1435
    %v1469 = vunpack.c.l.b16 %v1436
    %v1470 = vunpack.c.l.b16 %v1437
    %v1471 = vunpack.c.l.b16 %v1438
    %v1472 = vunpack.c.l.b16 %v1439
    %v1473 = vunpack.c.l.b16 %v1440
    %v1474 = vunpack.c.l.b16 %v1441
    %v1475 = vpack.c.b16 %v1460, %v1459
    %v1476 = vpack.c.b16 %v1462, %v1461
    %v1477 = vpack.c.b16 %v1464, %v1463
    %v1478 = vpack.c.b16 %v1466, %v1465
    %v1479 = vpack.c.b16 %v1468, %v1467
    %v1480 = vpack.c.b16 %v1470, %v1469
    %v1481 = vpack.c.b16 %v1472, %v1471
    %v1482 = vpack.c.b16 %v1474, %v1473
    %1491 = vmatpush.bf16.msra.mxu0 %v1482
    %1492 = vmatpush.bf16.msra.mxu0 %v1481
    %1493 = vmatpush.bf16.msra.mxu0 %v1480
    %1494 = vmatpush.bf16.msra.mxu0 %v1479
    %1495 = vmatpush.bf16.msra.mxu0 %v1478
    %1496 = vmatpush.bf16.msra.mxu0 %v1477
    %1497 = vmatpush.bf16.msra.mxu0 %v1476
    %1498 = vmatpush.bf16.msra.mxu0 %v1475
    %1499 = vmatmul.bf16.gmra.mxu0 %v1425
    %v1500 = vpop.f32.mrf.mxu0
    %v1501 = vadd.f32 %v1442, %v1500
    %v1502 = vpop.f32.mrf.mxu0
    %1503 = vdwg.mxu0
    %v1504 = vpack.c.bf16 %v1501, %v1501
    %v1506 = vrot.slane %v1265, 1
    %1508 = vmatpush.bf16.msra.mxu0 %v1322
    %1509 = vmatpush.bf16.msra.mxu0 %v1321
    %1510 = vmatpush.bf16.msra.mxu0 %v1320
    %1511 = vmatpush.bf16.msra.mxu0 %v1319
    %1512 = vmatpush.bf16.msra.mxu0 %v1318
    %1513 = vmatpush.bf16.msra.mxu0 %v1317
    %1514 = vmatpush.bf16.msra.mxu0 %v1316
    %1515 = vmatpush.bf16.msra.mxu0 %v1315
    %1516 = vmatmul.bf16.gmra.mxu0 %v1504
    %v1517 = vpop.f32.mrf.mxu0
    %v1518 = vadd.f32 %v1506, %v1517
    %v1519 = vpop.f32.mrf.mxu0
    %1520 = vdwg.mxu0
    %v1521 = vmax.f32 %v1518, 0.0
    %v1522 = vpack.c.bf16 %v1521, %v1521
    %1523 = vmatpush.bf16.msra.mxu0 %v1402
    %1524 = vmatpush.bf16.msra.mxu0 %v1401
    %1525 = vmatpush.bf16.msra.mxu0 %v1400
    %1526 = vmatpush.bf16.msra.mxu0 %v1399
    %1527 = vmatpush.bf16.msra.mxu0 %v1398
    %1528 = vmatpush.bf16.msra.mxu0 %v1397
    %1529 = vmatpush.bf16.msra.mxu0 %v1396
    %1530 = vmatpush.bf16.msra.mxu0 %v1395
    %1531 = vmatmul.bf16.gmra.mxu0 %v1522
    %v1532 = vpop.f32.mrf.mxu0
    %v1533 = vadd.f32 %v1362, %v1532
    %v1534 = vpop.f32.mrf.mxu0
    %1535 = vdwg.mxu0
    %v1536 = vmax.f32 %v1533, 0.0
    %v1537 = vpack.c.bf16 %v1536, %v1536
    %1538 = vmatpush.bf16.msra.mxu0 %v1482
    %1539 = vmatpush.bf16.msra.mxu0 %v1481
    %1540 = vmatpush.bf16.msra.mxu0 %v1480
    %1541 = vmatpush.bf16.msra.mxu0 %v1479
    %1542 = vmatpush.bf16.msra.mxu0 %v1478
    %1543 = vmatpush.bf16.msra.mxu0 %v1477
    %1544 = vmatpush.bf16.msra.mxu0 %v1476
    %1545 = vmatpush.bf16.msra.mxu0 %v1475
    %1546 = vmatmul.bf16.gmra.mxu0 %v1537
    %v1547 = vpop.f32.mrf.mxu0
    %v1548 = vadd.f32 %v1442, %v1547
    %v1549 = vpop.f32.mrf.mxu0
    %1550 = vdwg.mxu0
    %v1551 = vpack.c.bf16 %v1548, %v1548
    %v1552 = vrot.slane %v1265, 2
    %1554 = vmatpush.bf16.msra.mxu0 %v1322
    %1555 = vmatpush.bf16.msra.mxu0 %v1321
    %1556 = vmatpush.bf16.msra.mxu0 %v1320
    %1557 = vmatpush.bf16.msra.mxu0 %v1319
    %1558 = vmatpush.bf16.msra.mxu0 %v1318
    %1559 = vmatpush.bf16.msra.mxu0 %v1317
    %1560 = vmatpush.bf16.msra.mxu0 %v1316
    %1561 = vmatpush.bf16.msra.mxu0 %v1315
    %1562 = vmatmul.bf16.gmra.mxu0 %v1551
    %v1563 = vpop.f32.mrf.mxu0
    %v1564 = vadd.f32 %v1552, %v1563
    %v1565 = vpop.f32.mrf.mxu0
    %1566 = vdwg.mxu0
    %v1567 = vmax.f32 %v1564, 0.0
    %v1568 = vpack.c.bf16 %v1567, %v1567
    %1569 = vmatpush.bf16.msra.mxu0 %v1402
    %1570 = vmatpush.bf16.msra.mxu0 %v1401
    %1571 = vmatpush.bf16.msra.mxu0 %v1400
    %1572 = vmatpush.bf16.msra.mxu0 %v1399
    %1573 = vmatpush.bf16.msra.mxu0 %v1398
    %1574 = vmatpush.bf16.msra.mxu0 %v1397
    %1575 = vmatpush.bf16.msra.mxu0 %v1396
    %1576 = vmatpush.bf16.msra.mxu0 %v1395
    %1577 = vmatmul.bf16.gmra.mxu0 %v1568
    %v1578 = vpop.f32.mrf.mxu0
    %v1579 = vadd.f32 %v1362, %v1578
    %v1580 = vpop.f32.mrf.mxu0
    %1581 = vdwg.mxu0
    %v1582 = vmax.f32 %v1579, 0.0
    %v1583 = vpack.c.bf16 %v1582, %v1582
    %1584 = vmatpush.bf16.msra.mxu0 %v1482
    %1585 = vmatpush.bf16.msra.mxu0 %v1481
    %1586 = vmatpush.bf16.msra.mxu0 %v1480
    %1587 = vmatpush.bf16.msra.mxu0 %v1479
    %1588 = vmatpush.bf16.msra.mxu0 %v1478
    %1589 = vmatpush.bf16.msra.mxu0 %v1477
    %1590 = vmatpush.bf16.msra.mxu0 %v1476
    %1591 = vmatpush.bf16.msra.mxu0 %v1475
    %1592 = vmatmul.bf16.gmra.mxu0 %v1583
    %v1593 = vpop.f32.mrf.mxu0
    %v1594 = vadd.f32 %v1442, %v1593
    %v1595 = vpop.f32.mrf.mxu0
    %1596 = vdwg.mxu0
    %v1597 = vpack.c.bf16 %v1594, %v1594
    %v1598 = vrot.slane %v1265, 3
    %1600 = vmatpush.bf16.msra.mxu0 %v1322
    %1601 = vmatpush.bf16.msra.mxu0 %v1321
    %1602 = vmatpush.bf16.msra.mxu0 %v1320
    %1603 = vmatpush.bf16.msra.mxu0 %v1319
    %1604 = vmatpush.bf16.msra.mxu0 %v1318
    %1605 = vmatpush.bf16.msra.mxu0 %v1317
    %1606 = vmatpush.bf16.msra.mxu0 %v1316
    %1607 = vmatpush.bf16.msra.mxu0 %v1315
    %1608 = vmatmul.bf16.gmra.mxu0 %v1597
    %v1609 = vpop.f32.mrf.mxu0
    %v1610 = vadd.f32 %v1598, %v1609
    %v1611 = vpop.f32.mrf.mxu0
    %1612 = vdwg.mxu0
    %v1613 = vmax.f32 %v1610, 0.0
    %v1614 = vpack.c.bf16 %v1613, %v1613
    %1615 = vmatpush.bf16.msra.mxu0 %v1402
    %1616 = vmatpush.bf16.msra.mxu0 %v1401
    %1617 = vmatpush.bf16.msra.mxu0 %v1400
    %1618 = vmatpush.bf16.msra.mxu0 %v1399
    %1619 = vmatpush.bf16.msra.mxu0 %v1398
    %1620 = vmatpush.bf16.msra.mxu0 %v1397
    %1621 = vmatpush.bf16.msra.mxu0 %v1396
    %1622 = vmatpush.bf16.msra.mxu0 %v1395
    %1623 = vmatmul.bf16.gmra.mxu0 %v1614
    %v1624 = vpop.f32.mrf.mxu0
    %v1625 = vadd.f32 %v1362, %v1624
    %v1626 = vpop.f32.mrf.mxu0
    %1627 = vdwg.mxu0
    %v1628 = vmax.f32 %v1625, 0.0
    %v1629 = vpack.c.bf16 %v1628, %v1628
    %1630 = vmatpush.bf16.msra.mxu0 %v1482
    %1631 = vmatpush.bf16.msra.mxu0 %v1481
    %1632 = vmatpush.bf16.msra.mxu0 %v1480
    %1633 = vmatpush.bf16.msra.mxu0 %v1479
    %1634 = vmatpush.bf16.msra.mxu0 %v1478
    %1635 = vmatpush.bf16.msra.mxu0 %v1477
    %1636 = vmatpush.bf16.msra.mxu0 %v1476
    %1637 = vmatpush.bf16.msra.mxu0 %v1475
    %1638 = vmatmul.bf16.gmra.mxu0 %v1629
    %v1639 = vpop.f32.mrf.mxu0
    %v1640 = vadd.f32 %v1442, %v1639
    %v1641 = vpop.f32.mrf.mxu0
    %1642 = vdwg.mxu0
    %v1643 = vpack.c.bf16 %v1640, %v1640
    %v1644 = vrot.slane %v1265, 4
    %1646 = vmatpush.bf16.msra.mxu0 %v1322
    %1647 = vmatpush.bf16.msra.mxu0 %v1321
    %1648 = vmatpush.bf16.msra.mxu0 %v1320
    %1649 = vmatpush.bf16.msra.mxu0 %v1319
    %1650 = vmatpush.bf16.msra.mxu0 %v1318
    %1651 = vmatpush.bf16.msra.mxu0 %v1317
    %1652 = vmatpush.bf16.msra.mxu0 %v1316
    %1653 = vmatpush.bf16.msra.mxu0 %v1315
    %1654 = vmatmul.bf16.gmra.mxu0 %v1643
    %v1655 = vpop.f32.mrf.mxu0
    %v1656 = vadd.f32 %v1644, %v1655
    %v1657 = vpop.f32.mrf.mxu0
    %1658 = vdwg.mxu0
    %v1659 = vmax.f32 %v1656, 0.0
    %v1660 = vpack.c.bf16 %v1659, %v1659
    %1661 = vmatpush.bf16.msra.mxu0 %v1402
    %1662 = vmatpush.bf16.msra.mxu0 %v1401
    %1663 = vmatpush.bf16.msra.mxu0 %v1400
    %1664 = vmatpush.bf16.msra.mxu0 %v1399
    %1665 = vmatpush.bf16.msra.mxu0 %v1398
    %1666 = vmatpush.bf16.msra.mxu0 %v1397
    %1667 = vmatpush.bf16.msra.mxu0 %v1396
    %1668 = vmatpush.bf16.msra.mxu0 %v1395
    %1669 = vmatmul.bf16.gmra.mxu0 %v1660
    %v1670 = vpop.f32.mrf.mxu0
    %v1671 = vadd.f32 %v1362, %v1670
    %v1672 = vpop.f32.mrf.mxu0
    %1673 = vdwg.mxu0
    %v1674 = vmax.f32 %v1671, 0.0
    %v1675 = vpack.c.bf16 %v1674, %v1674
    %1676 = vmatpush.bf16.msra.mxu0 %v1482
    %1677 = vmatpush.bf16.msra.mxu0 %v1481
    %1678 = vmatpush.bf16.msra.mxu0 %v1480
    %1679 = vmatpush.bf16.msra.mxu0 %v1479
    %1680 = vmatpush.bf16.msra.mxu0 %v1478
    %1681 = vmatpush.bf16.msra.mxu0 %v1477
    %1682 = vmatpush.bf16.msra.mxu0 %v1476
    %1683 = vmatpush.bf16.msra.mxu0 %v1475
    %1684 = vmatmul.bf16.gmra.mxu0 %v1675
    %v1685 = vpop.f32.mrf.mxu0
    %v1686 = vadd.f32 %v1442, %v1685
    %v1687 = vpop.f32.mrf.mxu0
    %1688 = vdwg.mxu0
    %v1689 = vpack.c.bf16 %v1686, %v1686
    %v1690 = vrot.slane %v1265, 5
    %1692 = vmatpush.bf16.msra.mxu0 %v1322
    %1693 = vmatpush.bf16.msra.mxu0 %v1321
    %1694 = vmatpush.bf16.msra.mxu0 %v1320
    %1695 = vmatpush.bf16.msra.mxu0 %v1319
    %1696 = vmatpush.bf16.msra.mxu0 %v1318
    %1697 = vmatpush.bf16.msra.mxu0 %v1317
    %1698 = vmatpush.bf16.msra.mxu0 %v1316
    %1699 = vmatpush.bf16.msra.mxu0 %v1315
    %1700 = vmatmul.bf16.gmra.mxu0 %v1689
    %v1701 = vpop.f32.mrf.mxu0
    %v1702 = vadd.f32 %v1690, %v1701
    %v1703 = vpop.f32.mrf.mxu0
    %1704 = vdwg.mxu0
    %v1705 = vmax.f32 %v1702, 0.0
    %v1706 = vpack.c.bf16 %v1705, %v1705
    %1707 = vmatpush.bf16.msra.mxu0 %v1402
    %1708 = vmatpush.bf16.msra.mxu0 %v1401
    %1709 = vmatpush.bf16.msra.mxu0 %v1400
    %1710 = vmatpush.bf16.msra.mxu0 %v1399
    %1711 = vmatpush.bf16.msra.mxu0 %v1398
    %1712 = vmatpush.bf16.msra.mxu0 %v1397
    %1713 = vmatpush.bf16.msra.mxu0 %v1396
    %1714 = vmatpush.bf16.msra.mxu0 %v1395
    %1715 = vmatmul.bf16.gmra.mxu0 %v1706
    %v1716 = vpop.f32.mrf.mxu0
    %v1717 = vadd.f32 %v1362, %v1716
    %v1718 = vpop.f32.mrf.mxu0
    %1719 = vdwg.mxu0
    %v1720 = vmax.f32 %v1717, 0.0
    %v1721 = vpack.c.bf16 %v1720, %v1720
    %1722 = vmatpush.bf16.msra.mxu0 %v1482
    %1723 = vmatpush.bf16.msra.mxu0 %v1481
    %1724 = vmatpush.bf16.msra.mxu0 %v1480
    %1725 = vmatpush.bf16.msra.mxu0 %v1479
    %1726 = vmatpush.bf16.msra.mxu0 %v1478
    %1727 = vmatpush.bf16.msra.mxu0 %v1477
    %1728 = vmatpush.bf16.msra.mxu0 %v1476
    %1729 = vmatpush.bf16.msra.mxu0 %v1475
    %1730 = vmatmul.bf16.gmra.mxu0 %v1721
    %v1731 = vpop.f32.mrf.mxu0
    %v1732 = vadd.f32 %v1442, %v1731
    %v1733 = vpop.f32.mrf.mxu0
    %1734 = vdwg.mxu0
    %v1735 = vpack.c.bf16 %v1732, %v1732
    %v1736 = vrot.slane %v1265, 6
    %1738 = vmatpush.bf16.msra.mxu0 %v1322
    %1739 = vmatpush.bf16.msra.mxu0 %v1321
    %1740 = vmatpush.bf16.msra.mxu0 %v1320
    %1741 = vmatpush.bf16.msra.mxu0 %v1319
    %1742 = vmatpush.bf16.msra.mxu0 %v1318
    %1743 = vmatpush.bf16.msra.mxu0 %v1317
    %1744 = vmatpush.bf16.msra.mxu0 %v1316
    %1745 = vmatpush.bf16.msra.mxu0 %v1315
    %1746 = vmatmul.bf16.gmra.mxu0 %v1735
    %v1747 = vpop.f32.mrf.mxu0
    %v1748 = vadd.f32 %v1736, %v1747
    %v1749 = vpop.f32.mrf.mxu0
    %1750 = vdwg.mxu0
    %v1751 = vmax.f32 %v1748, 0.0
    %v1752 = vpack.c.bf16 %v1751, %v1751
    %1753 = vmatpush.bf16.msra.mxu0 %v1402
    %1754 = vmatpush.bf16.msra.mxu0 %v1401
    %1755 = vmatpush.bf16.msra.mxu0 %v1400
    %1756 = vmatpush.bf16.msra.mxu0 %v1399
    %1757 = vmatpush.bf16.msra.mxu0 %v1398
    %1758 = vmatpush.bf16.msra.mxu0 %v1397
    %1759 = vmatpush.bf16.msra.mxu0 %v1396
    %1760 = vmatpush.bf16.msra.mxu0 %v1395
    %1761 = vmatmul.bf16.gmra.mxu0 %v1752
    %v1762 = vpop.f32.mrf.mxu0
    %v1763 = vadd.f32 %v1362, %v1762
    %v1764 = vpop.f32.mrf.mxu0
    %1765 = vdwg.mxu0
    %v1766 = vmax.f32 %v1763, 0.0
    %v1767 = vpack.c.bf16 %v1766, %v1766
    %1768 = vmatpush.bf16.msra.mxu0 %v1482
    %1769 = vmatpush.bf16.msra.mxu0 %v1481
    %1770 = vmatpush.bf16.msra.mxu0 %v1480
    %1771 = vmatpush.bf16.msra.mxu0 %v1479
    %1772 = vmatpush.bf16.msra.mxu0 %v1478
    %1773 = vmatpush.bf16.msra.mxu0 %v1477
    %1774 = vmatpush.bf16.msra.mxu0 %v1476
    %1775 = vmatpush.bf16.msra.mxu0 %v1475
    %1776 = vmatmul.bf16.gmra.mxu0 %v1767
    %v1777 = vpop.f32.mrf.mxu0
    %v1778 = vadd.f32 %v1442, %v1777
    %v1779 = vpop.f32.mrf.mxu0
    %1780 = vdwg.mxu0
    %v1781 = vpack.c.bf16 %v1778, %v1778
    %v1782 = vrot.slane %v1265, 7
    %1784 = vmatpush.bf16.msra.mxu0 %v1322
    %1785 = vmatpush.bf16.msra.mxu0 %v1321
    %1786 = vmatpush.bf16.msra.mxu0 %v1320
    %1787 = vmatpush.bf16.msra.mxu0 %v1319
    %1788 = vmatpush.bf16.msra.mxu0 %v1318
    %1789 = vmatpush.bf16.msra.mxu0 %v1317
    %1790 = vmatpush.bf16.msra.mxu0 %v1316
    %1791 = vmatpush.bf16.msra.mxu0 %v1315
    %1792 = vmatmul.bf16.gmra.mxu0 %v1781
    %v1793 = vpop.f32.mrf.mxu0
    %v1794 = vadd.f32 %v1782, %v1793
    %v1795 = vpop.f32.mrf.mxu0
    %1796 = vdwg.mxu0
    %v1797 = vmax.f32 %v1794, 0.0
    %v1798 = vpack.c.bf16 %v1797, %v1797
    %1799 = vmatpush.bf16.msra.mxu0 %v1402
    %1800 = vmatpush.bf16.msra.mxu0 %v1401
    %1801 = vmatpush.bf16.msra.mxu0 %v1400
    %1802 = vmatpush.bf16.msra.mxu0 %v1399
    %1803 = vmatpush.bf16.msra.mxu0 %v1398
    %1804 = vmatpush.bf16.msra.mxu0 %v1397
    %1805 = vmatpush.bf16.msra.mxu0 %v1396
    %1806 = vmatpush.bf16.msra.mxu0 %v1395
    %1807 = vmatmul.bf16.gmra.mxu0 %v1798
    %v1808 = vpop.f32.mrf.mxu0
    %v1809 = vadd.f32 %v1362, %v1808
    %v1810 = vpop.f32.mrf.mxu0
    %1811 = vdwg.mxu0
    %v1812 = vmax.f32 %v1809, 0.0
    %v1813 = vpack.c.bf16 %v1812, %v1812
    %1814 = vmatpush.bf16.msra.mxu0 %v1482
    %1815 = vmatpush.bf16.msra.mxu0 %v1481
    %1816 = vmatpush.bf16.msra.mxu0 %v1480
    %1817 = vmatpush.bf16.msra.mxu0 %v1479
    %1818 = vmatpush.bf16.msra.mxu0 %v1478
    %1819 = vmatpush.bf16.msra.mxu0 %v1477
    %1820 = vmatpush.bf16.msra.mxu0 %v1476
    %1821 = vmatpush.bf16.msra.mxu0 %v1475
    %1822 = vmatmul.bf16.gmra.mxu0 %v1813
    %v1823 = vpop.f32.mrf.mxu0
    %v1824 = vadd.f32 %v1442, %v1823
    %v1825 = vpop.f32.mrf.mxu0
    %1826 = vdwg.mxu0
    %v1828 = vrot.slane %v1548, 7
    %v1831 = vrot.slane %v1594, 6
    %v1834 = vrot.slane %v1640, 5
    %v1837 = vrot.slane %v1686, 4
    %v1840 = vrot.slane %v1732, 3
    %v1843 = vrot.slane %v1778, 2
    %v1846 = vrot.slane %v1824, 1
    %v1848 = vsel %vm1250, %v1501, %v1828
    %v1849 = vsel %vm1252, %v1848, %v1831
    %v1850 = vsel %vm1254, %v1849, %v1834
    %v1851 = vsel %vm1256, %v1850, %v1837
    %v1852 = vsel %vm1258, %v1851, %v1840
    %v1853 = vsel %vm1260, %v1852, %v1843
    %v1854 = vsel %vm1262, %v1853, %v1846
    %1855 = vst [vmem:[#allocation2 + $0x8] sm:$0xff] %v1854
    loop: start=0, step=1, limit=5
    $region150: #{tpu_custom_call.1} parent=1 // loop_pre_header
      _
    $region151: #{tpu_custom_call.1} parent=1 // loop_header
      %s1857 = sphi 0, %s1861
      %p1858 = scmp.ge.s32.totalorder %s1857, 5
      %v1862 = vphi %v1824, %v3019
    $region152: #{tpu_custom_call.1} parent=1 // loop_header_branch
      %1860 = sbr.rel (%p1858) target = $region156
    $region153: #{tpu_custom_call.1} parent=1 // loop_body
      %s1863 = sadd.s32 %s1857, 1
      %s1864 = smul.u32 %s1863, 16
      %s1865 = scalar_lea.vmem [#allocation3], %s1864
      %v1866 = vld [vmem:[%s1865] sm:$0xff]
      %v1867 = vpack.c.bf16 %v1862, %v1862
      %v1868 = vld [vmem:[#allocation10] sm:$0xf]
      %v1869 = vld [vmem:[#allocation10 + $0x4] sm:$0xf]
      %v1870 = vld [vmem:[#allocation10 + $0x8] sm:$0xf]
      %v1871 = vld [vmem:[#allocation10 + $0xc] sm:$0xf]
      %v1872 = vld [vmem:[#allocation10 + $0x10] sm:$0xf]
      %v1873 = vld [vmem:[#allocation10 + $0x14] sm:$0xf]
      %v1874 = vld [vmem:[#allocation10 + $0x18] sm:$0xf]
      %v1875 = vld [vmem:[#allocation10 + $0x1c] sm:$0xf]
      %v1876 = vld [vmem:[#allocation10 + $0x20] sm:$0xf]
      %v1877 = vld [vmem:[#allocation10 + $0x24] sm:$0xf]
      %v1878 = vld [vmem:[#allocation10 + $0x28] sm:$0xf]
      %v1879 = vld [vmem:[#allocation10 + $0x2c] sm:$0xf]
      %v1880 = vld [vmem:[#allocation10 + $0x30] sm:$0xf]
      %v1881 = vld [vmem:[#allocation10 + $0x34] sm:$0xf]
      %v1882 = vld [vmem:[#allocation10 + $0x38] sm:$0xf]
      %v1883 = vld [vmem:[#allocation10 + $0x3c] sm:$0xf]
      %v1900 = vunpack.c.l.b16 %v1868
      %v1901 = vunpack.c.l.b16 %v1869
      %v1902 = vunpack.c.l.b16 %v1870
      %v1903 = vunpack.c.l.b16 %v1871
      %v1904 = vunpack.c.l.b16 %v1872
      %v1905 = vunpack.c.l.b16 %v1873
      %v1906 = vunpack.c.l.b16 %v1874
      %v1907 = vunpack.c.l.b16 %v1875
      %v1908 = vunpack.c.l.b16 %v1876
      %v1909 = vunpack.c.l.b16 %v1877
      %v1910 = vunpack.c.l.b16 %v1878
      %v1911 = vunpack.c.l.b16 %v1879
      %v1912 = vunpack.c.l.b16 %v1880
      %v1913 = vunpack.c.l.b16 %v1881
      %v1914 = vunpack.c.l.b16 %v1882
      %v1915 = vunpack.c.l.b16 %v1883
      %v1916 = vpack.c.b16 %v1901, %v1900
      %v1917 = vpack.c.b16 %v1903, %v1902
      %v1918 = vpack.c.b16 %v1905, %v1904
      %v1919 = vpack.c.b16 %v1907, %v1906
      %v1920 = vpack.c.b16 %v1909, %v1908
      %v1921 = vpack.c.b16 %v1911, %v1910
      %v1922 = vpack.c.b16 %v1913, %v1912
      %v1923 = vpack.c.b16 %v1915, %v1914
      %1932 = vmatpush.bf16.msra.mxu0 %v1923
      %1933 = vmatpush.bf16.msra.mxu0 %v1922
      %1934 = vmatpush.bf16.msra.mxu0 %v1921
      %1935 = vmatpush.bf16.msra.mxu0 %v1920
      %1936 = vmatpush.bf16.msra.mxu0 %v1919
      %1937 = vmatpush.bf16.msra.mxu0 %v1918
      %1938 = vmatpush.bf16.msra.mxu0 %v1917
      %1939 = vmatpush.bf16.msra.mxu0 %v1916
      %1940 = vmatmul.bf16.gmra.mxu0 %v1867
      %v1941 = vpop.f32.mrf.mxu0
      %v1942 = vadd.f32 %v1866, %v1941
      %v1943 = vpop.f32.mrf.mxu0
      %1944 = vdwg.mxu0
      %v1945 = vmax.f32 %v1942, 0.0
      %v1946 = vpack.c.bf16 %v1945, %v1945
      %v1947 = vld [vmem:[#allocation13] sm:$0xf]
      %v1948 = vld [vmem:[#allocation13 + $0x4] sm:$0xf]
      %v1949 = vld [vmem:[#allocation13 + $0x8] sm:$0xf]
      %v1950 = vld [vmem:[#allocation13 + $0xc] sm:$0xf]
      %v1951 = vld [vmem:[#allocation13 + $0x10] sm:$0xf]
      %v1952 = vld [vmem:[#allocation13 + $0x14] sm:$0xf]
      %v1953 = vld [vmem:[#allocation13 + $0x18] sm:$0xf]
      %v1954 = vld [vmem:[#allocation13 + $0x1c] sm:$0xf]
      %v1955 = vld [vmem:[#allocation13 + $0x20] sm:$0xf]
      %v1956 = vld [vmem:[#allocation13 + $0x24] sm:$0xf]
      %v1957 = vld [vmem:[#allocation13 + $0x28] sm:$0xf]
      %v1958 = vld [vmem:[#allocation13 + $0x2c] sm:$0xf]
      %v1959 = vld [vmem:[#allocation13 + $0x30] sm:$0xf]
      %v1960 = vld [vmem:[#allocation13 + $0x34] sm:$0xf]
      %v1961 = vld [vmem:[#allocation13 + $0x38] sm:$0xf]
      %v1962 = vld [vmem:[#allocation13 + $0x3c] sm:$0xf]
      %v1963 = vld [vmem:[%s17] sm:$0x1]
      %v1980 = vunpack.c.l.b16 %v1947
      %v1981 = vunpack.c.l.b16 %v1948
      %v1982 = vunpack.c.l.b16 %v1949
      %v1983 = vunpack.c.l.b16 %v1950
      %v1984 = vunpack.c.l.b16 %v1951
      %v1985 = vunpack.c.l.b16 %v1952
      %v1986 = vunpack.c.l.b16 %v1953
      %v1987 = vunpack.c.l.b16 %v1954
      %v1988 = vunpack.c.l.b16 %v1955
      %v1989 = vunpack.c.l.b16 %v1956
      %v1990 = vunpack.c.l.b16 %v1957
      %v1991 = vunpack.c.l.b16 %v1958
      %v1992 = vunpack.c.l.b16 %v1959
      %v1993 = vunpack.c.l.b16 %v1960
      %v1994 = vunpack.c.l.b16 %v1961
      %v1995 = vunpack.c.l.b16 %v1962
      %v1996 = vpack.c.b16 %v1981, %v1980
      %v1997 = vpack.c.b16 %v1983, %v1982
      %v1998 = vpack.c.b16 %v1985, %v1984
      %v1999 = vpack.c.b16 %v1987, %v1986
      %v2000 = vpack.c.b16 %v1989, %v1988
      %v2001 = vpack.c.b16 %v1991, %v1990
      %v2002 = vpack.c.b16 %v1993, %v1992
      %v2003 = vpack.c.b16 %v1995, %v1994
      %2012 = vmatpush.bf16.msra.mxu0 %v2003
      %2013 = vmatpush.bf16.msra.mxu0 %v2002
      %2014 = vmatpush.bf16.msra.mxu0 %v2001
      %2015 = vmatpush.bf16.msra.mxu0 %v2000
      %2016 = vmatpush.bf16.msra.mxu0 %v1999
      %2017 = vmatpush.bf16.msra.mxu0 %v1998
      %2018 = vmatpush.bf16.msra.mxu0 %v1997
      %2019 = vmatpush.bf16.msra.mxu0 %v1996
      %2020 = vmatmul.bf16.gmra.mxu0 %v1946
      %v2021 = vpop.f32.mrf.mxu0
      %v2022 = vadd.f32 %v1963, %v2021
      %v2023 = vpop.f32.mrf.mxu0
      %2024 = vdwg.mxu0
      %v2025 = vmax.f32 %v2022, 0.0
      %v2026 = vpack.c.bf16 %v2025, %v2025
      %v2027 = vld [vmem:[#allocation15] sm:$0xf]
      %v2028 = vld [vmem:[#allocation15 + $0x4] sm:$0xf]
      %v2029 = vld [vmem:[#allocation15 + $0x8] sm:$0xf]
      %v2030 = vld [vmem:[#allocation15 + $0xc] sm:$0xf]
      %v2031 = vld [vmem:[#allocation15 + $0x10] sm:$0xf]
      %v2032 = vld [vmem:[#allocation15 + $0x14] sm:$0xf]
      %v2033 = vld [vmem:[#allocation15 + $0x18] sm:$0xf]
      %v2034 = vld [vmem:[#allocation15 + $0x1c] sm:$0xf]
      %v2035 = vld [vmem:[#allocation15 + $0x20] sm:$0xf]
      %v2036 = vld [vmem:[#allocation15 + $0x24] sm:$0xf]
      %v2037 = vld [vmem:[#allocation15 + $0x28] sm:$0xf]
      %v2038 = vld [vmem:[#allocation15 + $0x2c] sm:$0xf]
      %v2039 = vld [vmem:[#allocation15 + $0x30] sm:$0xf]
      %v2040 = vld [vmem:[#allocation15 + $0x34] sm:$0xf]
      %v2041 = vld [vmem:[#allocation15 + $0x38] sm:$0xf]
      %v2042 = vld [vmem:[#allocation15 + $0x3c] sm:$0xf]
      %v2043 = vld [vmem:[%s19] sm:$0x1]
      %v2060 = vunpack.c.l.b16 %v2027
      %v2061 = vunpack.c.l.b16 %v2028
      %v2062 = vunpack.c.l.b16 %v2029
      %v2063 = vunpack.c.l.b16 %v2030
      %v2064 = vunpack.c.l.b16 %v2031
      %v2065 = vunpack.c.l.b16 %v2032
      %v2066 = vunpack.c.l.b16 %v2033
      %v2067 = vunpack.c.l.b16 %v2034
      %v2068 = vunpack.c.l.b16 %v2035
      %v2069 = vunpack.c.l.b16 %v2036
      %v2070 = vunpack.c.l.b16 %v2037
      %v2071 = vunpack.c.l.b16 %v2038
      %v2072 = vunpack.c.l.b16 %v2039
      %v2073 = vunpack.c.l.b16 %v2040
      %v2074 = vunpack.c.l.b16 %v2041
      %v2075 = vunpack.c.l.b16 %v2042
      %v2076 = vpack.c.b16 %v2061, %v2060
      %v2077 = vpack.c.b16 %v2063, %v2062
      %v2078 = vpack.c.b16 %v2065, %v2064
      %v2079 = vpack.c.b16 %v2067, %v2066
      %v2080 = vpack.c.b16 %v2069, %v2068
      %v2081 = vpack.c.b16 %v2071, %v2070
      %v2082 = vpack.c.b16 %v2073, %v2072
      %v2083 = vpack.c.b16 %v2075, %v2074
      %2092 = vmatpush.bf16.msra.mxu0 %v2083
      %2093 = vmatpush.bf16.msra.mxu0 %v2082
      %2094 = vmatpush.bf16.msra.mxu0 %v2081
      %2095 = vmatpush.bf16.msra.mxu0 %v2080
      %2096 = vmatpush.bf16.msra.mxu0 %v2079
      %2097 = vmatpush.bf16.msra.mxu0 %v2078
      %2098 = vmatpush.bf16.msra.mxu0 %v2077
      %2099 = vmatpush.bf16.msra.mxu0 %v2076
      %2100 = vmatmul.bf16.gmra.mxu0 %v2026
      %v2101 = vpop.f32.mrf.mxu0
      %v2102 = vadd.f32 %v2043, %v2101
      %v2103 = vpop.f32.mrf.mxu0
      %2104 = vdwg.mxu0
      %v2105 = vpack.c.bf16 %v2102, %v2102
      %v2107 = vrot.slane %v1866, 1
      %2109 = vmatpush.bf16.msra.mxu0 %v1923
      %2110 = vmatpush.bf16.msra.mxu0 %v1922
      %2111 = vmatpush.bf16.msra.mxu0 %v1921
      %2112 = vmatpush.bf16.msra.mxu0 %v1920
      %2113 = vmatpush.bf16.msra.mxu0 %v1919
      %2114 = vmatpush.bf16.msra.mxu0 %v1918
      %2115 = vmatpush.bf16.msra.mxu0 %v1917
      %2116 = vmatpush.bf16.msra.mxu0 %v1916
      %2117 = vmatmul.bf16.gmra.mxu0 %v2105
      %v2118 = vpop.f32.mrf.mxu0
      %v2119 = vadd.f32 %v2107, %v2118
      %v2120 = vpop.f32.mrf.mxu0
      %2121 = vdwg.mxu0
      %v2122 = vmax.f32 %v2119, 0.0
      %v2123 = vpack.c.bf16 %v2122, %v2122
      %2124 = vmatpush.bf16.msra.mxu0 %v2003
      %2125 = vmatpush.bf16.msra.mxu0 %v2002
      %2126 = vmatpush.bf16.msra.mxu0 %v2001
      %2127 = vmatpush.bf16.msra.mxu0 %v2000
      %2128 = vmatpush.bf16.msra.mxu0 %v1999
      %2129 = vmatpush.bf16.msra.mxu0 %v1998
      %2130 = vmatpush.bf16.msra.mxu0 %v1997
      %2131 = vmatpush.bf16.msra.mxu0 %v1996
      %2132 = vmatmul.bf16.gmra.mxu0 %v2123
      %v2133 = vpop.f32.mrf.mxu0
      %v2134 = vadd.f32 %v1963, %v2133
      %v2135 = vpop.f32.mrf.mxu0
      %2136 = vdwg.mxu0
      %v2137 = vmax.f32 %v2134, 0.0
      %v2138 = vpack.c.bf16 %v2137, %v2137
      %2139 = vmatpush.bf16.msra.mxu0 %v2083
      %2140 = vmatpush.bf16.msra.mxu0 %v2082
      %2141 = vmatpush.bf16.msra.mxu0 %v2081
      %2142 = vmatpush.bf16.msra.mxu0 %v2080
      %2143 = vmatpush.bf16.msra.mxu0 %v2079
      %2144 = vmatpush.bf16.msra.mxu0 %v2078
      %2145 = vmatpush.bf16.msra.mxu0 %v2077
      %2146 = vmatpush.bf16.msra.mxu0 %v2076
      %2147 = vmatmul.bf16.gmra.mxu0 %v2138
      %v2148 = vpop.f32.mrf.mxu0
      %v2149 = vadd.f32 %v2043, %v2148
      %v2150 = vpop.f32.mrf.mxu0
      %2151 = vdwg.mxu0
      %v2152 = vpack.c.bf16 %v2149, %v2149
      %v2153 = vrot.slane %v1866, 2
      %2155 = vmatpush.bf16.msra.mxu0 %v1923
      %2156 = vmatpush.bf16.msra.mxu0 %v1922
      %2157 = vmatpush.bf16.msra.mxu0 %v1921
      %2158 = vmatpush.bf16.msra.mxu0 %v1920
      %2159 = vmatpush.bf16.msra.mxu0 %v1919
      %2160 = vmatpush.bf16.msra.mxu0 %v1918
      %2161 = vmatpush.bf16.msra.mxu0 %v1917
      %2162 = vmatpush.bf16.msra.mxu0 %v1916
      %2163 = vmatmul.bf16.gmra.mxu0 %v2152
      %v2164 = vpop.f32.mrf.mxu0
      %v2165 = vadd.f32 %v2153, %v2164
      %v2166 = vpop.f32.mrf.mxu0
      %2167 = vdwg.mxu0
      %v2168 = vmax.f32 %v2165, 0.0
      %v2169 = vpack.c.bf16 %v2168, %v2168
      %2170 = vmatpush.bf16.msra.mxu0 %v2003
      %2171 = vmatpush.bf16.msra.mxu0 %v2002
      %2172 = vmatpush.bf16.msra.mxu0 %v2001
      %2173 = vmatpush.bf16.msra.mxu0 %v2000
      %2174 = vmatpush.bf16.msra.mxu0 %v1999
      %2175 = vmatpush.bf16.msra.mxu0 %v1998
      %2176 = vmatpush.bf16.msra.mxu0 %v1997
      %2177 = vmatpush.bf16.msra.mxu0 %v1996
      %2178 = vmatmul.bf16.gmra.mxu0 %v2169
      %v2179 = vpop.f32.mrf.mxu0
      %v2180 = vadd.f32 %v1963, %v2179
      %v2181 = vpop.f32.mrf.mxu0
      %2182 = vdwg.mxu0
      %v2183 = vmax.f32 %v2180, 0.0
      %v2184 = vpack.c.bf16 %v2183, %v2183
      %2185 = vmatpush.bf16.msra.mxu0 %v2083
      %2186 = vmatpush.bf16.msra.mxu0 %v2082
      %2187 = vmatpush.bf16.msra.mxu0 %v2081
      %2188 = vmatpush.bf16.msra.mxu0 %v2080
      %2189 = vmatpush.bf16.msra.mxu0 %v2079
      %2190 = vmatpush.bf16.msra.mxu0 %v2078
      %2191 = vmatpush.bf16.msra.mxu0 %v2077
      %2192 = vmatpush.bf16.msra.mxu0 %v2076
      %2193 = vmatmul.bf16.gmra.mxu0 %v2184
      %v2194 = vpop.f32.mrf.mxu0
      %v2195 = vadd.f32 %v2043, %v2194
      %v2196 = vpop.f32.mrf.mxu0
      %2197 = vdwg.mxu0
      %v2198 = vpack.c.bf16 %v2195, %v2195
      %v2199 = vrot.slane %v1866, 3
      %2201 = vmatpush.bf16.msra.mxu0 %v1923
      %2202 = vmatpush.bf16.msra.mxu0 %v1922
      %2203 = vmatpush.bf16.msra.mxu0 %v1921
      %2204 = vmatpush.bf16.msra.mxu0 %v1920
      %2205 = vmatpush.bf16.msra.mxu0 %v1919
      %2206 = vmatpush.bf16.msra.mxu0 %v1918
      %2207 = vmatpush.bf16.msra.mxu0 %v1917
      %2208 = vmatpush.bf16.msra.mxu0 %v1916
      %2209 = vmatmul.bf16.gmra.mxu0 %v2198
      %v2210 = vpop.f32.mrf.mxu0
      %v2211 = vadd.f32 %v2199, %v2210
      %v2212 = vpop.f32.mrf.mxu0
      %2213 = vdwg.mxu0
      %v2214 = vmax.f32 %v2211, 0.0
      %v2215 = vpack.c.bf16 %v2214, %v2214
      %2216 = vmatpush.bf16.msra.mxu0 %v2003
      %2217 = vmatpush.bf16.msra.mxu0 %v2002
      %2218 = vmatpush.bf16.msra.mxu0 %v2001
      %2219 = vmatpush.bf16.msra.mxu0 %v2000
      %2220 = vmatpush.bf16.msra.mxu0 %v1999
      %2221 = vmatpush.bf16.msra.mxu0 %v1998
      %2222 = vmatpush.bf16.msra.mxu0 %v1997
      %2223 = vmatpush.bf16.msra.mxu0 %v1996
      %2224 = vmatmul.bf16.gmra.mxu0 %v2215
      %v2225 = vpop.f32.mrf.mxu0
      %v2226 = vadd.f32 %v1963, %v2225
      %v2227 = vpop.f32.mrf.mxu0
      %2228 = vdwg.mxu0
      %v2229 = vmax.f32 %v2226, 0.0
      %v2230 = vpack.c.bf16 %v2229, %v2229
      %2231 = vmatpush.bf16.msra.mxu0 %v2083
      %2232 = vmatpush.bf16.msra.mxu0 %v2082
      %2233 = vmatpush.bf16.msra.mxu0 %v2081
      %2234 = vmatpush.bf16.msra.mxu0 %v2080
      %2235 = vmatpush.bf16.msra.mxu0 %v2079
      %2236 = vmatpush.bf16.msra.mxu0 %v2078
      %2237 = vmatpush.bf16.msra.mxu0 %v2077
      %2238 = vmatpush.bf16.msra.mxu0 %v2076
      %2239 = vmatmul.bf16.gmra.mxu0 %v2230
      %v2240 = vpop.f32.mrf.mxu0
      %v2241 = vadd.f32 %v2043, %v2240
      %v2242 = vpop.f32.mrf.mxu0
      %2243 = vdwg.mxu0
      %v2244 = vpack.c.bf16 %v2241, %v2241
      %v2245 = vrot.slane %v1866, 4
      %2247 = vmatpush.bf16.msra.mxu0 %v1923
      %2248 = vmatpush.bf16.msra.mxu0 %v1922
      %2249 = vmatpush.bf16.msra.mxu0 %v1921
      %2250 = vmatpush.bf16.msra.mxu0 %v1920
      %2251 = vmatpush.bf16.msra.mxu0 %v1919
      %2252 = vmatpush.bf16.msra.mxu0 %v1918
      %2253 = vmatpush.bf16.msra.mxu0 %v1917
      %2254 = vmatpush.bf16.msra.mxu0 %v1916
      %2255 = vmatmul.bf16.gmra.mxu0 %v2244
      %v2256 = vpop.f32.mrf.mxu0
      %v2257 = vadd.f32 %v2245, %v2256
      %v2258 = vpop.f32.mrf.mxu0
      %2259 = vdwg.mxu0
      %v2260 = vmax.f32 %v2257, 0.0
      %v2261 = vpack.c.bf16 %v2260, %v2260
      %2262 = vmatpush.bf16.msra.mxu0 %v2003
      %2263 = vmatpush.bf16.msra.mxu0 %v2002
      %2264 = vmatpush.bf16.msra.mxu0 %v2001
      %2265 = vmatpush.bf16.msra.mxu0 %v2000
      %2266 = vmatpush.bf16.msra.mxu0 %v1999
      %2267 = vmatpush.bf16.msra.mxu0 %v1998
      %2268 = vmatpush.bf16.msra.mxu0 %v1997
      %2269 = vmatpush.bf16.msra.mxu0 %v1996
      %2270 = vmatmul.bf16.gmra.mxu0 %v2261
      %v2271 = vpop.f32.mrf.mxu0
      %v2272 = vadd.f32 %v1963, %v2271
      %v2273 = vpop.f32.mrf.mxu0
      %2274 = vdwg.mxu0
      %v2275 = vmax.f32 %v2272, 0.0
      %v2276 = vpack.c.bf16 %v2275, %v2275
      %2277 = vmatpush.bf16.msra.mxu0 %v2083
      %2278 = vmatpush.bf16.msra.mxu0 %v2082
      %2279 = vmatpush.bf16.msra.mxu0 %v2081
      %2280 = vmatpush.bf16.msra.mxu0 %v2080
      %2281 = vmatpush.bf16.msra.mxu0 %v2079
      %2282 = vmatpush.bf16.msra.mxu0 %v2078
      %2283 = vmatpush.bf16.msra.mxu0 %v2077
      %2284 = vmatpush.bf16.msra.mxu0 %v2076
      %2285 = vmatmul.bf16.gmra.mxu0 %v2276
      %v2286 = vpop.f32.mrf.mxu0
      %v2287 = vadd.f32 %v2043, %v2286
      %v2288 = vpop.f32.mrf.mxu0
      %2289 = vdwg.mxu0
      %v2290 = vpack.c.bf16 %v2287, %v2287
      %v2291 = vrot.slane %v1866, 5
      %2293 = vmatpush.bf16.msra.mxu0 %v1923
      %2294 = vmatpush.bf16.msra.mxu0 %v1922
      %2295 = vmatpush.bf16.msra.mxu0 %v1921
      %2296 = vmatpush.bf16.msra.mxu0 %v1920
      %2297 = vmatpush.bf16.msra.mxu0 %v1919
      %2298 = vmatpush.bf16.msra.mxu0 %v1918
      %2299 = vmatpush.bf16.msra.mxu0 %v1917
      %2300 = vmatpush.bf16.msra.mxu0 %v1916
      %2301 = vmatmul.bf16.gmra.mxu0 %v2290
      %v2302 = vpop.f32.mrf.mxu0
      %v2303 = vadd.f32 %v2291, %v2302
      %v2304 = vpop.f32.mrf.mxu0
      %2305 = vdwg.mxu0
      %v2306 = vmax.f32 %v2303, 0.0
      %v2307 = vpack.c.bf16 %v2306, %v2306
      %2308 = vmatpush.bf16.msra.mxu0 %v2003
      %2309 = vmatpush.bf16.msra.mxu0 %v2002
      %2310 = vmatpush.bf16.msra.mxu0 %v2001
      %2311 = vmatpush.bf16.msra.mxu0 %v2000
      %2312 = vmatpush.bf16.msra.mxu0 %v1999
      %2313 = vmatpush.bf16.msra.mxu0 %v1998
      %2314 = vmatpush.bf16.msra.mxu0 %v1997
      %2315 = vmatpush.bf16.msra.mxu0 %v1996
      %2316 = vmatmul.bf16.gmra.mxu0 %v2307
      %v2317 = vpop.f32.mrf.mxu0
      %v2318 = vadd.f32 %v1963, %v2317
      %v2319 = vpop.f32.mrf.mxu0
      %2320 = vdwg.mxu0
      %v2321 = vmax.f32 %v2318, 0.0
      %v2322 = vpack.c.bf16 %v2321, %v2321
      %2323 = vmatpush.bf16.msra.mxu0 %v2083
      %2324 = vmatpush.bf16.msra.mxu0 %v2082
      %2325 = vmatpush.bf16.msra.mxu0 %v2081
      %2326 = vmatpush.bf16.msra.mxu0 %v2080
      %2327 = vmatpush.bf16.msra.mxu0 %v2079
      %2328 = vmatpush.bf16.msra.mxu0 %v2078
      %2329 = vmatpush.bf16.msra.mxu0 %v2077
      %2330 = vmatpush.bf16.msra.mxu0 %v2076
      %2331 = vmatmul.bf16.gmra.mxu0 %v2322
      %v2332 = vpop.f32.mrf.mxu0
      %v2333 = vadd.f32 %v2043, %v2332
      %v2334 = vpop.f32.mrf.mxu0
      %2335 = vdwg.mxu0
      %v2336 = vpack.c.bf16 %v2333, %v2333
      %v2337 = vrot.slane %v1866, 6
      %2339 = vmatpush.bf16.msra.mxu0 %v1923
      %2340 = vmatpush.bf16.msra.mxu0 %v1922
      %2341 = vmatpush.bf16.msra.mxu0 %v1921
      %2342 = vmatpush.bf16.msra.mxu0 %v1920
      %2343 = vmatpush.bf16.msra.mxu0 %v1919
      %2344 = vmatpush.bf16.msra.mxu0 %v1918
      %2345 = vmatpush.bf16.msra.mxu0 %v1917
      %2346 = vmatpush.bf16.msra.mxu0 %v1916
      %2347 = vmatmul.bf16.gmra.mxu0 %v2336
      %v2348 = vpop.f32.mrf.mxu0
      %v2349 = vadd.f32 %v2337, %v2348
      %v2350 = vpop.f32.mrf.mxu0
      %2351 = vdwg.mxu0
      %v2352 = vmax.f32 %v2349, 0.0
      %v2353 = vpack.c.bf16 %v2352, %v2352
      %2354 = vmatpush.bf16.msra.mxu0 %v2003
      %2355 = vmatpush.bf16.msra.mxu0 %v2002
      %2356 = vmatpush.bf16.msra.mxu0 %v2001
      %2357 = vmatpush.bf16.msra.mxu0 %v2000
      %2358 = vmatpush.bf16.msra.mxu0 %v1999
      %2359 = vmatpush.bf16.msra.mxu0 %v1998
      %2360 = vmatpush.bf16.msra.mxu0 %v1997
      %2361 = vmatpush.bf16.msra.mxu0 %v1996
      %2362 = vmatmul.bf16.gmra.mxu0 %v2353
      %v2363 = vpop.f32.mrf.mxu0
      %v2364 = vadd.f32 %v1963, %v2363
      %v2365 = vpop.f32.mrf.mxu0
      %2366 = vdwg.mxu0
      %v2367 = vmax.f32 %v2364, 0.0
      %v2368 = vpack.c.bf16 %v2367, %v2367
      %2369 = vmatpush.bf16.msra.mxu0 %v2083
      %2370 = vmatpush.bf16.msra.mxu0 %v2082
      %2371 = vmatpush.bf16.msra.mxu0 %v2081
      %2372 = vmatpush.bf16.msra.mxu0 %v2080
      %2373 = vmatpush.bf16.msra.mxu0 %v2079
      %2374 = vmatpush.bf16.msra.mxu0 %v2078
      %2375 = vmatpush.bf16.msra.mxu0 %v2077
      %2376 = vmatpush.bf16.msra.mxu0 %v2076
      %2377 = vmatmul.bf16.gmra.mxu0 %v2368
      %v2378 = vpop.f32.mrf.mxu0
      %v2379 = vadd.f32 %v2043, %v2378
      %v2380 = vpop.f32.mrf.mxu0
      %2381 = vdwg.mxu0
      %v2382 = vpack.c.bf16 %v2379, %v2379
      %v2383 = vrot.slane %v1866, 7
      %2385 = vmatpush.bf16.msra.mxu0 %v1923
      %2386 = vmatpush.bf16.msra.mxu0 %v1922
      %2387 = vmatpush.bf16.msra.mxu0 %v1921
      %2388 = vmatpush.bf16.msra.mxu0 %v1920
      %2389 = vmatpush.bf16.msra.mxu0 %v1919
      %2390 = vmatpush.bf16.msra.mxu0 %v1918
      %2391 = vmatpush.bf16.msra.mxu0 %v1917
      %2392 = vmatpush.bf16.msra.mxu0 %v1916
      %2393 = vmatmul.bf16.gmra.mxu0 %v2382
      %v2394 = vpop.f32.mrf.mxu0
      %v2395 = vadd.f32 %v2383, %v2394
      %v2396 = vpop.f32.mrf.mxu0
      %2397 = vdwg.mxu0
      %v2398 = vmax.f32 %v2395, 0.0
      %v2399 = vpack.c.bf16 %v2398, %v2398
      %2400 = vmatpush.bf16.msra.mxu0 %v2003
      %2401 = vmatpush.bf16.msra.mxu0 %v2002
      %2402 = vmatpush.bf16.msra.mxu0 %v2001
      %2403 = vmatpush.bf16.msra.mxu0 %v2000
      %2404 = vmatpush.bf16.msra.mxu0 %v1999
      %2405 = vmatpush.bf16.msra.mxu0 %v1998
      %2406 = vmatpush.bf16.msra.mxu0 %v1997
      %2407 = vmatpush.bf16.msra.mxu0 %v1996
      %2408 = vmatmul.bf16.gmra.mxu0 %v2399
      %v2409 = vpop.f32.mrf.mxu0
      %v2410 = vadd.f32 %v1963, %v2409
      %v2411 = vpop.f32.mrf.mxu0
      %2412 = vdwg.mxu0
      %v2413 = vmax.f32 %v2410, 0.0
      %v2414 = vpack.c.bf16 %v2413, %v2413
      %2415 = vmatpush.bf16.msra.mxu0 %v2083
      %2416 = vmatpush.bf16.msra.mxu0 %v2082
      %2417 = vmatpush.bf16.msra.mxu0 %v2081
      %2418 = vmatpush.bf16.msra.mxu0 %v2080
      %2419 = vmatpush.bf16.msra.mxu0 %v2079
      %2420 = vmatpush.bf16.msra.mxu0 %v2078
      %2421 = vmatpush.bf16.msra.mxu0 %v2077
      %2422 = vmatpush.bf16.msra.mxu0 %v2076
      %2423 = vmatmul.bf16.gmra.mxu0 %v2414
      %v2424 = vpop.f32.mrf.mxu0
      %v2425 = vadd.f32 %v2043, %v2424
      %v2426 = vpop.f32.mrf.mxu0
      %2427 = vdwg.mxu0
      %v2429 = vrot.slane %v2149, 7
      %v2432 = vrot.slane %v2195, 6
      %v2435 = vrot.slane %v2241, 5
      %v2438 = vrot.slane %v2287, 4
      %v2441 = vrot.slane %v2333, 3
      %v2444 = vrot.slane %v2379, 2
      %v2447 = vrot.slane %v2425, 1
      %v2449 = vsel %vm1250, %v2102, %v2429
      %v2450 = vsel %vm1252, %v2449, %v2432
      %v2451 = vsel %vm1254, %v2450, %v2435
      %v2452 = vsel %vm1256, %v2451, %v2438
      %v2453 = vsel %vm1258, %v2452, %v2441
      %v2454 = vsel %vm1260, %v2453, %v2444
      %v2455 = vsel %vm1262, %v2454, %v2447
      %s2456 = scalar_lea.vmem [#allocation2], %s1864
      %2457 = vst [vmem:[%s2456] sm:$0xff] %v2455
      %s2458 = sadd.s32 %s1864, 8
      %s2459 = scalar_lea.vmem [#allocation3], %s2458
      %v2460 = vld [vmem:[%s2459] sm:$0xff]
      %v2461 = vpack.c.bf16 %v2425, %v2425
      %v2462 = vld [vmem:[#allocation10] sm:$0xf]
      %v2463 = vld [vmem:[#allocation10 + $0x4] sm:$0xf]
      %v2464 = vld [vmem:[#allocation10 + $0x8] sm:$0xf]
      %v2465 = vld [vmem:[#allocation10 + $0xc] sm:$0xf]
      %v2466 = vld [vmem:[#allocation10 + $0x10] sm:$0xf]
      %v2467 = vld [vmem:[#allocation10 + $0x14] sm:$0xf]
      %v2468 = vld [vmem:[#allocation10 + $0x18] sm:$0xf]
      %v2469 = vld [vmem:[#allocation10 + $0x1c] sm:$0xf]
      %v2470 = vld [vmem:[#allocation10 + $0x20] sm:$0xf]
      %v2471 = vld [vmem:[#allocation10 + $0x24] sm:$0xf]
      %v2472 = vld [vmem:[#allocation10 + $0x28] sm:$0xf]
      %v2473 = vld [vmem:[#allocation10 + $0x2c] sm:$0xf]
      %v2474 = vld [vmem:[#allocation10 + $0x30] sm:$0xf]
      %v2475 = vld [vmem:[#allocation10 + $0x34] sm:$0xf]
      %v2476 = vld [vmem:[#allocation10 + $0x38] sm:$0xf]
      %v2477 = vld [vmem:[#allocation10 + $0x3c] sm:$0xf]
      %v2494 = vunpack.c.l.b16 %v2462
      %v2495 = vunpack.c.l.b16 %v2463
      %v2496 = vunpack.c.l.b16 %v2464
      %v2497 = vunpack.c.l.b16 %v2465
      %v2498 = vunpack.c.l.b16 %v2466
      %v2499 = vunpack.c.l.b16 %v2467
      %v2500 = vunpack.c.l.b16 %v2468
      %v2501 = vunpack.c.l.b16 %v2469
      %v2502 = vunpack.c.l.b16 %v2470
      %v2503 = vunpack.c.l.b16 %v2471
      %v2504 = vunpack.c.l.b16 %v2472
      %v2505 = vunpack.c.l.b16 %v2473
      %v2506 = vunpack.c.l.b16 %v2474
      %v2507 = vunpack.c.l.b16 %v2475
      %v2508 = vunpack.c.l.b16 %v2476
      %v2509 = vunpack.c.l.b16 %v2477
      %v2510 = vpack.c.b16 %v2495, %v2494
      %v2511 = vpack.c.b16 %v2497, %v2496
      %v2512 = vpack.c.b16 %v2499, %v2498
      %v2513 = vpack.c.b16 %v2501, %v2500
      %v2514 = vpack.c.b16 %v2503, %v2502
      %v2515 = vpack.c.b16 %v2505, %v2504
      %v2516 = vpack.c.b16 %v2507, %v2506
      %v2517 = vpack.c.b16 %v2509, %v2508
      %2526 = vmatpush.bf16.msra.mxu0 %v2517
      %2527 = vmatpush.bf16.msra.mxu0 %v2516
      %2528 = vmatpush.bf16.msra.mxu0 %v2515
      %2529 = vmatpush.bf16.msra.mxu0 %v2514
      %2530 = vmatpush.bf16.msra.mxu0 %v2513
      %2531 = vmatpush.bf16.msra.mxu0 %v2512
      %2532 = vmatpush.bf16.msra.mxu0 %v2511
      %2533 = vmatpush.bf16.msra.mxu0 %v2510
      %2534 = vmatmul.bf16.gmra.mxu0 %v2461
      %v2535 = vpop.f32.mrf.mxu0
      %v2536 = vadd.f32 %v2460, %v2535
      %v2537 = vpop.f32.mrf.mxu0
      %2538 = vdwg.mxu0
      %v2539 = vmax.f32 %v2536, 0.0
      %v2540 = vpack.c.bf16 %v2539, %v2539
      %v2541 = vld [vmem:[#allocation13] sm:$0xf]
      %v2542 = vld [vmem:[#allocation13 + $0x4] sm:$0xf]
      %v2543 = vld [vmem:[#allocation13 + $0x8] sm:$0xf]
      %v2544 = vld [vmem:[#allocation13 + $0xc] sm:$0xf]
      %v2545 = vld [vmem:[#allocation13 + $0x10] sm:$0xf]
      %v2546 = vld [vmem:[#allocation13 + $0x14] sm:$0xf]
      %v2547 = vld [vmem:[#allocation13 + $0x18] sm:$0xf]
      %v2548 = vld [vmem:[#allocation13 + $0x1c] sm:$0xf]
      %v2549 = vld [vmem:[#allocation13 + $0x20] sm:$0xf]
      %v2550 = vld [vmem:[#allocation13 + $0x24] sm:$0xf]
      %v2551 = vld [vmem:[#allocation13 + $0x28] sm:$0xf]
      %v2552 = vld [vmem:[#allocation13 + $0x2c] sm:$0xf]
      %v2553 = vld [vmem:[#allocation13 + $0x30] sm:$0xf]
      %v2554 = vld [vmem:[#allocation13 + $0x34] sm:$0xf]
      %v2555 = vld [vmem:[#allocation13 + $0x38] sm:$0xf]
      %v2556 = vld [vmem:[#allocation13 + $0x3c] sm:$0xf]
      %v2557 = vld [vmem:[%s17] sm:$0x1]
      %v2574 = vunpack.c.l.b16 %v2541
      %v2575 = vunpack.c.l.b16 %v2542
      %v2576 = vunpack.c.l.b16 %v2543
      %v2577 = vunpack.c.l.b16 %v2544
      %v2578 = vunpack.c.l.b16 %v2545
      %v2579 = vunpack.c.l.b16 %v2546
      %v2580 = vunpack.c.l.b16 %v2547
      %v2581 = vunpack.c.l.b16 %v2548
      %v2582 = vunpack.c.l.b16 %v2549
      %v2583 = vunpack.c.l.b16 %v2550
      %v2584 = vunpack.c.l.b16 %v2551
      %v2585 = vunpack.c.l.b16 %v2552
      %v2586 = vunpack.c.l.b16 %v2553
      %v2587 = vunpack.c.l.b16 %v2554
      %v2588 = vunpack.c.l.b16 %v2555
      %v2589 = vunpack.c.l.b16 %v2556
      %v2590 = vpack.c.b16 %v2575, %v2574
      %v2591 = vpack.c.b16 %v2577, %v2576
      %v2592 = vpack.c.b16 %v2579, %v2578
      %v2593 = vpack.c.b16 %v2581, %v2580
      %v2594 = vpack.c.b16 %v2583, %v2582
      %v2595 = vpack.c.b16 %v2585, %v2584
      %v2596 = vpack.c.b16 %v2587, %v2586
      %v2597 = vpack.c.b16 %v2589, %v2588
      %2606 = vmatpush.bf16.msra.mxu0 %v2597
      %2607 = vmatpush.bf16.msra.mxu0 %v2596
      %2608 = vmatpush.bf16.msra.mxu0 %v2595
      %2609 = vmatpush.bf16.msra.mxu0 %v2594
      %2610 = vmatpush.bf16.msra.mxu0 %v2593
      %2611 = vmatpush.bf16.msra.mxu0 %v2592
      %2612 = vmatpush.bf16.msra.mxu0 %v2591
      %2613 = vmatpush.bf16.msra.mxu0 %v2590
      %2614 = vmatmul.bf16.gmra.mxu0 %v2540
      %v2615 = vpop.f32.mrf.mxu0
      %v2616 = vadd.f32 %v2557, %v2615
      %v2617 = vpop.f32.mrf.mxu0
      %2618 = vdwg.mxu0
      %v2619 = vmax.f32 %v2616, 0.0
      %v2620 = vpack.c.bf16 %v2619, %v2619
      %v2621 = vld [vmem:[#allocation15] sm:$0xf]
      %v2622 = vld [vmem:[#allocation15 + $0x4] sm:$0xf]
      %v2623 = vld [vmem:[#allocation15 + $0x8] sm:$0xf]
      %v2624 = vld [vmem:[#allocation15 + $0xc] sm:$0xf]
      %v2625 = vld [vmem:[#allocation15 + $0x10] sm:$0xf]
      %v2626 = vld [vmem:[#allocation15 + $0x14] sm:$0xf]
      %v2627 = vld [vmem:[#allocation15 + $0x18] sm:$0xf]
      %v2628 = vld [vmem:[#allocation15 + $0x1c] sm:$0xf]
      %v2629 = vld [vmem:[#allocation15 + $0x20] sm:$0xf]
      %v2630 = vld [vmem:[#allocation15 + $0x24] sm:$0xf]
      %v2631 = vld [vmem:[#allocation15 + $0x28] sm:$0xf]
      %v2632 = vld [vmem:[#allocation15 + $0x2c] sm:$0xf]
      %v2633 = vld [vmem:[#allocation15 + $0x30] sm:$0xf]
      %v2634 = vld [vmem:[#allocation15 + $0x34] sm:$0xf]
      %v2635 = vld [vmem:[#allocation15 + $0x38] sm:$0xf]
      %v2636 = vld [vmem:[#allocation15 + $0x3c] sm:$0xf]
      %v2637 = vld [vmem:[%s19] sm:$0x1]
      %v2654 = vunpack.c.l.b16 %v2621
      %v2655 = vunpack.c.l.b16 %v2622
      %v2656 = vunpack.c.l.b16 %v2623
      %v2657 = vunpack.c.l.b16 %v2624
      %v2658 = vunpack.c.l.b16 %v2625
      %v2659 = vunpack.c.l.b16 %v2626
      %v2660 = vunpack.c.l.b16 %v2627
      %v2661 = vunpack.c.l.b16 %v2628
      %v2662 = vunpack.c.l.b16 %v2629
      %v2663 = vunpack.c.l.b16 %v2630
      %v2664 = vunpack.c.l.b16 %v2631
      %v2665 = vunpack.c.l.b16 %v2632
      %v2666 = vunpack.c.l.b16 %v2633
      %v2667 = vunpack.c.l.b16 %v2634
      %v2668 = vunpack.c.l.b16 %v2635
      %v2669 = vunpack.c.l.b16 %v2636
      %v2670 = vpack.c.b16 %v2655, %v2654
      %v2671 = vpack.c.b16 %v2657, %v2656
      %v2672 = vpack.c.b16 %v2659, %v2658
      %v2673 = vpack.c.b16 %v2661, %v2660
      %v2674 = vpack.c.b16 %v2663, %v2662
      %v2675 = vpack.c.b16 %v2665, %v2664
      %v2676 = vpack.c.b16 %v2667, %v2666
      %v2677 = vpack.c.b16 %v2669, %v2668
      %2686 = vmatpush.bf16.msra.mxu0 %v2677
      %2687 = vmatpush.bf16.msra.mxu0 %v2676
      %2688 = vmatpush.bf16.msra.mxu0 %v2675
      %2689 = vmatpush.bf16.msra.mxu0 %v2674
      %2690 = vmatpush.bf16.msra.mxu0 %v2673
      %2691 = vmatpush.bf16.msra.mxu0 %v2672
      %2692 = vmatpush.bf16.msra.mxu0 %v2671
      %2693 = vmatpush.bf16.msra.mxu0 %v2670
      %2694 = vmatmul.bf16.gmra.mxu0 %v2620
      %v2695 = vpop.f32.mrf.mxu0
      %v2696 = vadd.f32 %v2637, %v2695
      %v2697 = vpop.f32.mrf.mxu0
      %2698 = vdwg.mxu0
      %v2699 = vpack.c.bf16 %v2696, %v2696
      %v2701 = vrot.slane %v2460, 1
      %2703 = vmatpush.bf16.msra.mxu0 %v2517
      %2704 = vmatpush.bf16.msra.mxu0 %v2516
      %2705 = vmatpush.bf16.msra.mxu0 %v2515
      %2706 = vmatpush.bf16.msra.mxu0 %v2514
      %2707 = vmatpush.bf16.msra.mxu0 %v2513
      %2708 = vmatpush.bf16.msra.mxu0 %v2512
      %2709 = vmatpush.bf16.msra.mxu0 %v2511
      %2710 = vmatpush.bf16.msra.mxu0 %v2510
      %2711 = vmatmul.bf16.gmra.mxu0 %v2699
      %v2712 = vpop.f32.mrf.mxu0
      %v2713 = vadd.f32 %v2701, %v2712
      %v2714 = vpop.f32.mrf.mxu0
      %2715 = vdwg.mxu0
      %v2716 = vmax.f32 %v2713, 0.0
      %v2717 = vpack.c.bf16 %v2716, %v2716
      %2718 = vmatpush.bf16.msra.mxu0 %v2597
      %2719 = vmatpush.bf16.msra.mxu0 %v2596
      %2720 = vmatpush.bf16.msra.mxu0 %v2595
      %2721 = vmatpush.bf16.msra.mxu0 %v2594
      %2722 = vmatpush.bf16.msra.mxu0 %v2593
      %2723 = vmatpush.bf16.msra.mxu0 %v2592
      %2724 = vmatpush.bf16.msra.mxu0 %v2591
      %2725 = vmatpush.bf16.msra.mxu0 %v2590
      %2726 = vmatmul.bf16.gmra.mxu0 %v2717
      %v2727 = vpop.f32.mrf.mxu0
      %v2728 = vadd.f32 %v2557, %v2727
      %v2729 = vpop.f32.mrf.mxu0
      %2730 = vdwg.mxu0
      %v2731 = vmax.f32 %v2728, 0.0
      %v2732 = vpack.c.bf16 %v2731, %v2731
      %2733 = vmatpush.bf16.msra.mxu0 %v2677
      %2734 = vmatpush.bf16.msra.mxu0 %v2676
      %2735 = vmatpush.bf16.msra.mxu0 %v2675
      %2736 = vmatpush.bf16.msra.mxu0 %v2674
      %2737 = vmatpush.bf16.msra.mxu0 %v2673
      %2738 = vmatpush.bf16.msra.mxu0 %v2672
      %2739 = vmatpush.bf16.msra.mxu0 %v2671
      %2740 = vmatpush.bf16.msra.mxu0 %v2670
      %2741 = vmatmul.bf16.gmra.mxu0 %v2732
      %v2742 = vpop.f32.mrf.mxu0
      %v2743 = vadd.f32 %v2637, %v2742
      %v2744 = vpop.f32.mrf.mxu0
      %2745 = vdwg.mxu0
      %v2746 = vpack.c.bf16 %v2743, %v2743
      %v2747 = vrot.slane %v2460, 2
      %2749 = vmatpush.bf16.msra.mxu0 %v2517
      %2750 = vmatpush.bf16.msra.mxu0 %v2516
      %2751 = vmatpush.bf16.msra.mxu0 %v2515
      %2752 = vmatpush.bf16.msra.mxu0 %v2514
      %2753 = vmatpush.bf16.msra.mxu0 %v2513
      %2754 = vmatpush.bf16.msra.mxu0 %v2512
      %2755 = vmatpush.bf16.msra.mxu0 %v2511
      %2756 = vmatpush.bf16.msra.mxu0 %v2510
      %2757 = vmatmul.bf16.gmra.mxu0 %v2746
      %v2758 = vpop.f32.mrf.mxu0
      %v2759 = vadd.f32 %v2747, %v2758
      %v2760 = vpop.f32.mrf.mxu0
      %2761 = vdwg.mxu0
      %v2762 = vmax.f32 %v2759, 0.0
      %v2763 = vpack.c.bf16 %v2762, %v2762
      %2764 = vmatpush.bf16.msra.mxu0 %v2597
      %2765 = vmatpush.bf16.msra.mxu0 %v2596
      %2766 = vmatpush.bf16.msra.mxu0 %v2595
      %2767 = vmatpush.bf16.msra.mxu0 %v2594
      %2768 = vmatpush.bf16.msra.mxu0 %v2593
      %2769 = vmatpush.bf16.msra.mxu0 %v2592
      %2770 = vmatpush.bf16.msra.mxu0 %v2591
      %2771 = vmatpush.bf16.msra.mxu0 %v2590
      %2772 = vmatmul.bf16.gmra.mxu0 %v2763
      %v2773 = vpop.f32.mrf.mxu0
      %v2774 = vadd.f32 %v2557, %v2773
      %v2775 = vpop.f32.mrf.mxu0
      %2776 = vdwg.mxu0
      %v2777 = vmax.f32 %v2774, 0.0
      %v2778 = vpack.c.bf16 %v2777, %v2777
      %2779 = vmatpush.bf16.msra.mxu0 %v2677
      %2780 = vmatpush.bf16.msra.mxu0 %v2676
      %2781 = vmatpush.bf16.msra.mxu0 %v2675
      %2782 = vmatpush.bf16.msra.mxu0 %v2674
      %2783 = vmatpush.bf16.msra.mxu0 %v2673
      %2784 = vmatpush.bf16.msra.mxu0 %v2672
      %2785 = vmatpush.bf16.msra.mxu0 %v2671
      %2786 = vmatpush.bf16.msra.mxu0 %v2670
      %2787 = vmatmul.bf16.gmra.mxu0 %v2778
      %v2788 = vpop.f32.mrf.mxu0
      %v2789 = vadd.f32 %v2637, %v2788
      %v2790 = vpop.f32.mrf.mxu0
      %2791 = vdwg.mxu0
      %v2792 = vpack.c.bf16 %v2789, %v2789
      %v2793 = vrot.slane %v2460, 3
      %2795 = vmatpush.bf16.msra.mxu0 %v2517
      %2796 = vmatpush.bf16.msra.mxu0 %v2516
      %2797 = vmatpush.bf16.msra.mxu0 %v2515
      %2798 = vmatpush.bf16.msra.mxu0 %v2514
      %2799 = vmatpush.bf16.msra.mxu0 %v2513
      %2800 = vmatpush.bf16.msra.mxu0 %v2512
      %2801 = vmatpush.bf16.msra.mxu0 %v2511
      %2802 = vmatpush.bf16.msra.mxu0 %v2510
      %2803 = vmatmul.bf16.gmra.mxu0 %v2792
      %v2804 = vpop.f32.mrf.mxu0
      %v2805 = vadd.f32 %v2793, %v2804
      %v2806 = vpop.f32.mrf.mxu0
      %2807 = vdwg.mxu0
      %v2808 = vmax.f32 %v2805, 0.0
      %v2809 = vpack.c.bf16 %v2808, %v2808
      %2810 = vmatpush.bf16.msra.mxu0 %v2597
      %2811 = vmatpush.bf16.msra.mxu0 %v2596
      %2812 = vmatpush.bf16.msra.mxu0 %v2595
      %2813 = vmatpush.bf16.msra.mxu0 %v2594
      %2814 = vmatpush.bf16.msra.mxu0 %v2593
      %2815 = vmatpush.bf16.msra.mxu0 %v2592
      %2816 = vmatpush.bf16.msra.mxu0 %v2591
      %2817 = vmatpush.bf16.msra.mxu0 %v2590
      %2818 = vmatmul.bf16.gmra.mxu0 %v2809
      %v2819 = vpop.f32.mrf.mxu0
      %v2820 = vadd.f32 %v2557, %v2819
      %v2821 = vpop.f32.mrf.mxu0
      %2822 = vdwg.mxu0
      %v2823 = vmax.f32 %v2820, 0.0
      %v2824 = vpack.c.bf16 %v2823, %v2823
      %2825 = vmatpush.bf16.msra.mxu0 %v2677
      %2826 = vmatpush.bf16.msra.mxu0 %v2676
      %2827 = vmatpush.bf16.msra.mxu0 %v2675
      %2828 = vmatpush.bf16.msra.mxu0 %v2674
      %2829 = vmatpush.bf16.msra.mxu0 %v2673
      %2830 = vmatpush.bf16.msra.mxu0 %v2672
      %2831 = vmatpush.bf16.msra.mxu0 %v2671
      %2832 = vmatpush.bf16.msra.mxu0 %v2670
      %2833 = vmatmul.bf16.gmra.mxu0 %v2824
      %v2834 = vpop.f32.mrf.mxu0
      %v2835 = vadd.f32 %v2637, %v2834
      %v2836 = vpop.f32.mrf.mxu0
      %2837 = vdwg.mxu0
      %v2838 = vpack.c.bf16 %v2835, %v2835
      %v2839 = vrot.slane %v2460, 4
      %2841 = vmatpush.bf16.msra.mxu0 %v2517
      %2842 = vmatpush.bf16.msra.mxu0 %v2516
      %2843 = vmatpush.bf16.msra.mxu0 %v2515
      %2844 = vmatpush.bf16.msra.mxu0 %v2514
      %2845 = vmatpush.bf16.msra.mxu0 %v2513
      %2846 = vmatpush.bf16.msra.mxu0 %v2512
      %2847 = vmatpush.bf16.msra.mxu0 %v2511
      %2848 = vmatpush.bf16.msra.mxu0 %v2510
      %2849 = vmatmul.bf16.gmra.mxu0 %v2838
      %v2850 = vpop.f32.mrf.mxu0
      %v2851 = vadd.f32 %v2839, %v2850
      %v2852 = vpop.f32.mrf.mxu0
      %2853 = vdwg.mxu0
      %v2854 = vmax.f32 %v2851, 0.0
      %v2855 = vpack.c.bf16 %v2854, %v2854
      %2856 = vmatpush.bf16.msra.mxu0 %v2597
      %2857 = vmatpush.bf16.msra.mxu0 %v2596
      %2858 = vmatpush.bf16.msra.mxu0 %v2595
      %2859 = vmatpush.bf16.msra.mxu0 %v2594
      %2860 = vmatpush.bf16.msra.mxu0 %v2593
      %2861 = vmatpush.bf16.msra.mxu0 %v2592
      %2862 = vmatpush.bf16.msra.mxu0 %v2591
      %2863 = vmatpush.bf16.msra.mxu0 %v2590
      %2864 = vmatmul.bf16.gmra.mxu0 %v2855
      %v2865 = vpop.f32.mrf.mxu0
      %v2866 = vadd.f32 %v2557, %v2865
      %v2867 = vpop.f32.mrf.mxu0
      %2868 = vdwg.mxu0
      %v2869 = vmax.f32 %v2866, 0.0
      %v2870 = vpack.c.bf16 %v2869, %v2869
      %2871 = vmatpush.bf16.msra.mxu0 %v2677
      %2872 = vmatpush.bf16.msra.mxu0 %v2676
      %2873 = vmatpush.bf16.msra.mxu0 %v2675
      %2874 = vmatpush.bf16.msra.mxu0 %v2674
      %2875 = vmatpush.bf16.msra.mxu0 %v2673
      %2876 = vmatpush.bf16.msra.mxu0 %v2672
      %2877 = vmatpush.bf16.msra.mxu0 %v2671
      %2878 = vmatpush.bf16.msra.mxu0 %v2670
      %2879 = vmatmul.bf16.gmra.mxu0 %v2870
      %v2880 = vpop.f32.mrf.mxu0
      %v2881 = vadd.f32 %v2637, %v2880
      %v2882 = vpop.f32.mrf.mxu0
      %2883 = vdwg.mxu0
      %v2884 = vpack.c.bf16 %v2881, %v2881
      %v2885 = vrot.slane %v2460, 5
      %2887 = vmatpush.bf16.msra.mxu0 %v2517
      %2888 = vmatpush.bf16.msra.mxu0 %v2516
      %2889 = vmatpush.bf16.msra.mxu0 %v2515
      %2890 = vmatpush.bf16.msra.mxu0 %v2514
      %2891 = vmatpush.bf16.msra.mxu0 %v2513
      %2892 = vmatpush.bf16.msra.mxu0 %v2512
      %2893 = vmatpush.bf16.msra.mxu0 %v2511
      %2894 = vmatpush.bf16.msra.mxu0 %v2510
      %2895 = vmatmul.bf16.gmra.mxu0 %v2884
      %v2896 = vpop.f32.mrf.mxu0
      %v2897 = vadd.f32 %v2885, %v2896
      %v2898 = vpop.f32.mrf.mxu0
      %2899 = vdwg.mxu0
      %v2900 = vmax.f32 %v2897, 0.0
      %v2901 = vpack.c.bf16 %v2900, %v2900
      %2902 = vmatpush.bf16.msra.mxu0 %v2597
      %2903 = vmatpush.bf16.msra.mxu0 %v2596
      %2904 = vmatpush.bf16.msra.mxu0 %v2595
      %2905 = vmatpush.bf16.msra.mxu0 %v2594
      %2906 = vmatpush.bf16.msra.mxu0 %v2593
      %2907 = vmatpush.bf16.msra.mxu0 %v2592
      %2908 = vmatpush.bf16.msra.mxu0 %v2591
      %2909 = vmatpush.bf16.msra.mxu0 %v2590
      %2910 = vmatmul.bf16.gmra.mxu0 %v2901
      %v2911 = vpop.f32.mrf.mxu0
      %v2912 = vadd.f32 %v2557, %v2911
      %v2913 = vpop.f32.mrf.mxu0
      %2914 = vdwg.mxu0
      %v2915 = vmax.f32 %v2912, 0.0
      %v2916 = vpack.c.bf16 %v2915, %v2915
      %2917 = vmatpush.bf16.msra.mxu0 %v2677
      %2918 = vmatpush.bf16.msra.mxu0 %v2676
      %2919 = vmatpush.bf16.msra.mxu0 %v2675
      %2920 = vmatpush.bf16.msra.mxu0 %v2674
      %2921 = vmatpush.bf16.msra.mxu0 %v2673
      %2922 = vmatpush.bf16.msra.mxu0 %v2672
      %2923 = vmatpush.bf16.msra.mxu0 %v2671
      %2924 = vmatpush.bf16.msra.mxu0 %v2670
      %2925 = vmatmul.bf16.gmra.mxu0 %v2916
      %v2926 = vpop.f32.mrf.mxu0
      %v2927 = vadd.f32 %v2637, %v2926
      %v2928 = vpop.f32.mrf.mxu0
      %2929 = vdwg.mxu0
      %v2930 = vpack.c.bf16 %v2927, %v2927
      %v2931 = vrot.slane %v2460, 6
      %2933 = vmatpush.bf16.msra.mxu0 %v2517
      %2934 = vmatpush.bf16.msra.mxu0 %v2516
      %2935 = vmatpush.bf16.msra.mxu0 %v2515
      %2936 = vmatpush.bf16.msra.mxu0 %v2514
      %2937 = vmatpush.bf16.msra.mxu0 %v2513
      %2938 = vmatpush.bf16.msra.mxu0 %v2512
      %2939 = vmatpush.bf16.msra.mxu0 %v2511
      %2940 = vmatpush.bf16.msra.mxu0 %v2510
      %2941 = vmatmul.bf16.gmra.mxu0 %v2930
      %v2942 = vpop.f32.mrf.mxu0
      %v2943 = vadd.f32 %v2931, %v2942
      %v2944 = vpop.f32.mrf.mxu0
      %2945 = vdwg.mxu0
      %v2946 = vmax.f32 %v2943, 0.0
      %v2947 = vpack.c.bf16 %v2946, %v2946
      %2948 = vmatpush.bf16.msra.mxu0 %v2597
      %2949 = vmatpush.bf16.msra.mxu0 %v2596
      %2950 = vmatpush.bf16.msra.mxu0 %v2595
      %2951 = vmatpush.bf16.msra.mxu0 %v2594
      %2952 = vmatpush.bf16.msra.mxu0 %v2593
      %2953 = vmatpush.bf16.msra.mxu0 %v2592
      %2954 = vmatpush.bf16.msra.mxu0 %v2591
      %2955 = vmatpush.bf16.msra.mxu0 %v2590
      %2956 = vmatmul.bf16.gmra.mxu0 %v2947
      %v2957 = vpop.f32.mrf.mxu0
      %v2958 = vadd.f32 %v2557, %v2957
      %v2959 = vpop.f32.mrf.mxu0
      %2960 = vdwg.mxu0
      %v2961 = vmax.f32 %v2958, 0.0
      %v2962 = vpack.c.bf16 %v2961, %v2961
      %2963 = vmatpush.bf16.msra.mxu0 %v2677
      %2964 = vmatpush.bf16.msra.mxu0 %v2676
      %2965 = vmatpush.bf16.msra.mxu0 %v2675
      %2966 = vmatpush.bf16.msra.mxu0 %v2674
      %2967 = vmatpush.bf16.msra.mxu0 %v2673
      %2968 = vmatpush.bf16.msra.mxu0 %v2672
      %2969 = vmatpush.bf16.msra.mxu0 %v2671
      %2970 = vmatpush.bf16.msra.mxu0 %v2670
      %2971 = vmatmul.bf16.gmra.mxu0 %v2962
      %v2972 = vpop.f32.mrf.mxu0
      %v2973 = vadd.f32 %v2637, %v2972
      %v2974 = vpop.f32.mrf.mxu0
      %2975 = vdwg.mxu0
      %v2976 = vpack.c.bf16 %v2973, %v2973
      %v2977 = vrot.slane %v2460, 7
      %2979 = vmatpush.bf16.msra.mxu0 %v2517
      %2980 = vmatpush.bf16.msra.mxu0 %v2516
      %2981 = vmatpush.bf16.msra.mxu0 %v2515
      %2982 = vmatpush.bf16.msra.mxu0 %v2514
      %2983 = vmatpush.bf16.msra.mxu0 %v2513
      %2984 = vmatpush.bf16.msra.mxu0 %v2512
      %2985 = vmatpush.bf16.msra.mxu0 %v2511
      %2986 = vmatpush.bf16.msra.mxu0 %v2510
      %2987 = vmatmul.bf16.gmra.mxu0 %v2976
      %v2988 = vpop.f32.mrf.mxu0
      %v2989 = vadd.f32 %v2977, %v2988
      %v2990 = vpop.f32.mrf.mxu0
      %2991 = vdwg.mxu0
      %v2992 = vmax.f32 %v2989, 0.0
      %v2993 = vpack.c.bf16 %v2992, %v2992
      %2994 = vmatpush.bf16.msra.mxu0 %v2597
      %2995 = vmatpush.bf16.msra.mxu0 %v2596
      %2996 = vmatpush.bf16.msra.mxu0 %v2595
      %2997 = vmatpush.bf16.msra.mxu0 %v2594
      %2998 = vmatpush.bf16.msra.mxu0 %v2593
      %2999 = vmatpush.bf16.msra.mxu0 %v2592
      %3000 = vmatpush.bf16.msra.mxu0 %v2591
      %3001 = vmatpush.bf16.msra.mxu0 %v2590
      %3002 = vmatmul.bf16.gmra.mxu0 %v2993
      %v3003 = vpop.f32.mrf.mxu0
      %v3004 = vadd.f32 %v2557, %v3003
      %v3005 = vpop.f32.mrf.mxu0
      %3006 = vdwg.mxu0
      %v3007 = vmax.f32 %v3004, 0.0
      %v3008 = vpack.c.bf16 %v3007, %v3007
      %3009 = vmatpush.bf16.msra.mxu0 %v2677
      %3010 = vmatpush.bf16.msra.mxu0 %v2676
      %3011 = vmatpush.bf16.msra.mxu0 %v2675
      %3012 = vmatpush.bf16.msra.mxu0 %v2674
      %3013 = vmatpush.bf16.msra.mxu0 %v2673
      %3014 = vmatpush.bf16.msra.mxu0 %v2672
      %3015 = vmatpush.bf16.msra.mxu0 %v2671
      %3016 = vmatpush.bf16.msra.mxu0 %v2670
      %3017 = vmatmul.bf16.gmra.mxu0 %v3008
      %v3018 = vpop.f32.mrf.mxu0
      %v3019 = vadd.f32 %v2637, %v3018
      %v3020 = vpop.f32.mrf.mxu0
      %3021 = vdwg.mxu0
      %v3023 = vrot.slane %v2743, 7
      %v3026 = vrot.slane %v2789, 6
      %v3029 = vrot.slane %v2835, 5
      %v3032 = vrot.slane %v2881, 4
      %v3035 = vrot.slane %v2927, 3
      %v3038 = vrot.slane %v2973, 2
      %v3041 = vrot.slane %v3019, 1
      %v3043 = vsel %vm1250, %v2696, %v3023
      %v3044 = vsel %vm1252, %v3043, %v3026
      %v3045 = vsel %vm1254, %v3044, %v3029
      %v3046 = vsel %vm1256, %v3045, %v3032
      %v3047 = vsel %vm1258, %v3046, %v3035
      %v3048 = vsel %vm1260, %v3047, %v3038
      %v3049 = vsel %vm1262, %v3048, %v3041
      %s3050 = scalar_lea.vmem [#allocation2], %s2458
      %3051 = vst [vmem:[%s3050] sm:$0xff] %v3049
    $region154: #{tpu_custom_call.1} parent=1 // loop_footer
      %s1861 = sadd.s32 1, %s1857
    $region155: #{tpu_custom_call.1} parent=1 // loop_footer_branch
      %1856 = sbr.rel target = $region151
    $region156: #{tpu_custom_call.1} parent=1 // loop_exit
      _
    %v3052 = vld [vmem:[#allocation2] sm:$0xff]
    %v3053 = vld [vmem:[#allocation2 + $0x8] sm:$0xff]
    %v3054 = vld [vmem:[#allocation2 + $0x10] sm:$0xff]
    %v3055 = vld [vmem:[#allocation2 + $0x18] sm:$0xff]
    %v3056 = vld [vmem:[#allocation2 + $0x20] sm:$0xff]
    %v3057 = vld [vmem:[#allocation2 + $0x28] sm:$0xff]
    %v3058 = vld [vmem:[#allocation2 + $0x30] sm:$0xff]
    %v3059 = vld [vmem:[#allocation2 + $0x38] sm:$0xff]
    %v3060 = vld [vmem:[#allocation2 + $0x40] sm:$0xff]
    %v3061 = vld [vmem:[#allocation2 + $0x48] sm:$0xff]
    %v3062 = vld [vmem:[#allocation2 + $0x50] sm:$0xff]
    %v3063 = vld [vmem:[#allocation2 + $0x58] sm:$0xff]
    %v3064 = vld [vmem:[%s21] sm:$0x1]
    %v3066 = vperm.slane %v3064, 0
    %v3068 = vmul.f32 %v3052, %v3066
    %v3069 = vmul.f32 %v3053, %v3066
    %v3070 = vmul.f32 %v3054, %v3066
    %v3071 = vmul.f32 %v3055, %v3066
    %v3072 = vmul.f32 %v3056, %v3066
    %v3073 = vmul.f32 %v3057, %v3066
    %v3074 = vmul.f32 %v3058, %v3066
    %v3075 = vmul.f32 %v3059, %v3066
    %v3076 = vmul.f32 %v3060, %v3066
    %v3077 = vmul.f32 %v3061, %v3066
    %v3078 = vmul.f32 %v3062, %v3066
    %v3079 = vmul.f32 %v3063, %v3066
    %v3080 = vld [vmem:[%s23] sm:$0x1]
    %v3082 = vperm.slane %v3080, 0
    %v3084 = vadd.f32 %v3068, %v3082
    %v3085 = vadd.f32 %v3069, %v3082
    %v3086 = vadd.f32 %v3070, %v3082
    %v3087 = vadd.f32 %v3071, %v3082
    %v3088 = vadd.f32 %v3072, %v3082
    %v3089 = vadd.f32 %v3073, %v3082
    %v3090 = vadd.f32 %v3074, %v3082
    %v3091 = vadd.f32 %v3075, %v3082
    %v3092 = vadd.f32 %v3076, %v3082
    %v3093 = vadd.f32 %v3077, %v3082
    %v3094 = vadd.f32 %v3078, %v3082
    %v3095 = vadd.f32 %v3079, %v3082
    %v3096 = vld [vmem:[%s29] sm:$0x1]
    %v3098 = vperm.slane %v3096, 0
    %v3100 = vmul.f32 %v3084, %v3098
    %v3101 = vmul.f32 %v3085, %v3098
    %v3102 = vmul.f32 %v3086, %v3098
    %v3103 = vmul.f32 %v3087, %v3098
    %v3104 = vmul.f32 %v3088, %v3098
    %v3105 = vmul.f32 %v3089, %v3098
    %v3106 = vmul.f32 %v3090, %v3098
    %v3107 = vmul.f32 %v3091, %v3098
    %v3108 = vmul.f32 %v3092, %v3098
    %v3109 = vmul.f32 %v3093, %v3098
    %v3110 = vmul.f32 %v3094, %v3098
    %v3111 = vmul.f32 %v3095, %v3098
    %v3112 = vld [vmem:[#allocation18] sm:$0xff]
    %v3113 = vld [vmem:[#allocation18 + $0x8] sm:$0xff]
    %v3114 = vld [vmem:[#allocation18 + $0x10] sm:$0xff]
    %v3115 = vld [vmem:[#allocation18 + $0x18] sm:$0xff]
    %v3116 = vld [vmem:[#allocation18 + $0x20] sm:$0xff]
    %v3117 = vld [vmem:[#allocation18 + $0x28] sm:$0xff]
    %v3118 = vld [vmem:[#allocation18 + $0x30] sm:$0xff]
    %v3119 = vld [vmem:[#allocation18 + $0x38] sm:$0xff]
    %v3120 = vld [vmem:[#allocation18 + $0x40] sm:$0xff]
    %v3121 = vld [vmem:[#allocation18 + $0x48] sm:$0xff]
    %v3122 = vld [vmem:[#allocation18 + $0x50] sm:$0xff]
    %v3123 = vld [vmem:[#allocation18 + $0x58] sm:$0xff]
    %v3124 = vsub.f32 %v3100, %v3112
    %v3125 = vsub.f32 %v3101, %v3113
    %v3126 = vsub.f32 %v3102, %v3114
    %v3127 = vsub.f32 %v3103, %v3115
    %v3128 = vsub.f32 %v3104, %v3116
    %v3129 = vsub.f32 %v3105, %v3117
    %v3130 = vsub.f32 %v3106, %v3118
    %v3131 = vsub.f32 %v3107, %v3119
    %v3132 = vsub.f32 %v3108, %v3120
    %v3133 = vsub.f32 %v3109, %v3121
    %v3134 = vsub.f32 %v3110, %v3122
    %v3135 = vsub.f32 %v3111, %v3123
    %v3136 = vmax.f32 %v3124, 0.0
    %v3137 = vmax.f32 %v3125, 0.0
    %v3138 = vmax.f32 %v3126, 0.0
    %v3139 = vmax.f32 %v3127, 0.0
    %v3140 = vmax.f32 %v3128, 0.0
    %v3141 = vmax.f32 %v3129, 0.0
    %v3142 = vmax.f32 %v3130, 0.0
    %v3143 = vmax.f32 %v3131, 0.0
    %v3144 = vmax.f32 %v3132, 0.0
    %v3145 = vmax.f32 %v3133, 0.0
    %v3146 = vmax.f32 %v3134, 0.0
    %v3147 = vmax.f32 %v3135, 0.0
    %v3148 = vld [vmem:[%s37] sm:$0x1]
    %v3150 = vperm.slane %v3148, 0
    %v3152 = vmul.f32 %v3136, %v3150
    %v3153 = vmul.f32 %v3137, %v3150
    %v3154 = vmul.f32 %v3138, %v3150
    %v3155 = vmul.f32 %v3139, %v3150
    %v3156 = vmul.f32 %v3140, %v3150
    %v3157 = vmul.f32 %v3141, %v3150
    %v3158 = vmul.f32 %v3142, %v3150
    %v3159 = vmul.f32 %v3143, %v3150
    %v3160 = vmul.f32 %v3144, %v3150
    %v3161 = vmul.f32 %v3145, %v3150
    %v3162 = vmul.f32 %v3146, %v3150
    %v3163 = vmul.f32 %v3147, %v3150
    %3164 = vst [vmem:[#allocation24] sm:$0xff] %v3152
    %3165 = vst [vmem:[#allocation24 + $0x8] sm:$0xff] %v3153
    %3166 = vst [vmem:[#allocation24 + $0x10] sm:$0xff] %v3154
    %3167 = vst [vmem:[#allocation24 + $0x18] sm:$0xff] %v3155
    %3168 = vst [vmem:[#allocation24 + $0x20] sm:$0xff] %v3156
    %3169 = vst [vmem:[#allocation24 + $0x28] sm:$0xff] %v3157
    %3170 = vst [vmem:[#allocation24 + $0x30] sm:$0xff] %v3158
    %3171 = vst [vmem:[#allocation24 + $0x38] sm:$0xff] %v3159
    %3172 = vst [vmem:[#allocation24 + $0x40] sm:$0xff] %v3160
    %3173 = vst [vmem:[#allocation24 + $0x48] sm:$0xff] %v3161
    %3174 = vst [vmem:[#allocation24 + $0x50] sm:$0xff] %v3162
    %3175 = vst [vmem:[#allocation24 + $0x58] sm:$0xff] %v3163
    %v3176 = vld [vmem:[%s31] sm:$0x1]
    %v3178 = vperm.slane %v3176, 0
    %v3180 = vmul.f32 %v3084, %v3178
    %v3181 = vmul.f32 %v3085, %v3178
    %v3182 = vmul.f32 %v3086, %v3178
    %v3183 = vmul.f32 %v3087, %v3178
    %v3184 = vmul.f32 %v3088, %v3178
    %v3185 = vmul.f32 %v3089, %v3178
    %v3186 = vmul.f32 %v3090, %v3178
    %v3187 = vmul.f32 %v3091, %v3178
    %v3188 = vmul.f32 %v3092, %v3178
    %v3189 = vmul.f32 %v3093, %v3178
    %v3190 = vmul.f32 %v3094, %v3178
    %v3191 = vmul.f32 %v3095, %v3178
    %v3192 = vld [vmem:[#allocation19] sm:$0xff]
    %v3193 = vld [vmem:[#allocation19 + $0x8] sm:$0xff]
    %v3194 = vld [vmem:[#allocation19 + $0x10] sm:$0xff]
    %v3195 = vld [vmem:[#allocation19 + $0x18] sm:$0xff]
    %v3196 = vld [vmem:[#allocation19 + $0x20] sm:$0xff]
    %v3197 = vld [vmem:[#allocation19 + $0x28] sm:$0xff]
    %v3198 = vld [vmem:[#allocation19 + $0x30] sm:$0xff]
    %v3199 = vld [vmem:[#allocation19 + $0x38] sm:$0xff]
    %v3200 = vld [vmem:[#allocation19 + $0x40] sm:$0xff]
    %v3201 = vld [vmem:[#allocation19 + $0x48] sm:$0xff]
    %v3202 = vld [vmem:[#allocation19 + $0x50] sm:$0xff]
    %v3203 = vld [vmem:[#allocation19 + $0x58] sm:$0xff]
    %v3204 = vadd.f32 %v3180, %v3192
    %v3205 = vadd.f32 %v3181, %v3193
    %v3206 = vadd.f32 %v3182, %v3194
    %v3207 = vadd.f32 %v3183, %v3195
    %v3208 = vadd.f32 %v3184, %v3196
    %v3209 = vadd.f32 %v3185, %v3197
    %v3210 = vadd.f32 %v3186, %v3198
    %v3211 = vadd.f32 %v3187, %v3199
    %v3212 = vadd.f32 %v3188, %v3200
    %v3213 = vadd.f32 %v3189, %v3201
    %v3214 = vadd.f32 %v3190, %v3202
    %v3215 = vadd.f32 %v3191, %v3203
    %v3216 = vmax.f32 %v3204, 0.0
    %v3217 = vmax.f32 %v3205, 0.0
    %v3218 = vmax.f32 %v3206, 0.0
    %v3219 = vmax.f32 %v3207, 0.0
    %v3220 = vmax.f32 %v3208, 0.0
    %v3221 = vmax.f32 %v3209, 0.0
    %v3222 = vmax.f32 %v3210, 0.0
    %v3223 = vmax.f32 %v3211, 0.0
    %v3224 = vmax.f32 %v3212, 0.0
    %v3225 = vmax.f32 %v3213, 0.0
    %v3226 = vmax.f32 %v3214, 0.0
    %v3227 = vmax.f32 %v3215, 0.0
    %v3228 = vld [vmem:[%s37] sm:$0x1]
    %v3230 = vperm.slane %v3228, 0
    %v3232 = vmul.f32 %v3216, %v3230
    %v3233 = vmul.f32 %v3217, %v3230
    %v3234 = vmul.f32 %v3218, %v3230
    %v3235 = vmul.f32 %v3219, %v3230
    %v3236 = vmul.f32 %v3220, %v3230
    %v3237 = vmul.f32 %v3221, %v3230
    %v3238 = vmul.f32 %v3222, %v3230
    %v3239 = vmul.f32 %v3223, %v3230
    %v3240 = vmul.f32 %v3224, %v3230
    %v3241 = vmul.f32 %v3225, %v3230
    %v3242 = vmul.f32 %v3226, %v3230
    %v3243 = vmul.f32 %v3227, %v3230
    %3244 = vst [vmem:[#allocation25] sm:$0xff] %v3232
    %3245 = vst [vmem:[#allocation25 + $0x8] sm:$0xff] %v3233
    %3246 = vst [vmem:[#allocation25 + $0x10] sm:$0xff] %v3234
    %3247 = vst [vmem:[#allocation25 + $0x18] sm:$0xff] %v3235
    %3248 = vst [vmem:[#allocation25 + $0x20] sm:$0xff] %v3236
    %3249 = vst [vmem:[#allocation25 + $0x28] sm:$0xff] %v3237
    %3250 = vst [vmem:[#allocation25 + $0x30] sm:$0xff] %v3238
    %3251 = vst [vmem:[#allocation25 + $0x38] sm:$0xff] %v3239
    %3252 = vst [vmem:[#allocation25 + $0x40] sm:$0xff] %v3240
    %3253 = vst [vmem:[#allocation25 + $0x48] sm:$0xff] %v3241
    %3254 = vst [vmem:[#allocation25 + $0x50] sm:$0xff] %v3242
    %3255 = vst [vmem:[#allocation25 + $0x58] sm:$0xff] %v3243
    // Predicated region
    $region157: #{tpu_custom_call.1} parent=1 // pred_check
      _
    $region158: #{tpu_custom_call.1} parent=1 // pred_check_branch
      %3257 = sbr.rel (0) target = $region160
    $region159: #{tpu_custom_call.1} parent=1 // pred_region
      %3259 = vsyncadd [#allocation6], 0
      %s3260 = sshll.u32 [#allocation24], 4
      %s3261 = int_to_ptr.vmem [resolvable:$true] %s3260
      %s3262 = sshll.u32 %s51, 4
      %s3263 = int_to_ptr.hbm [resolvable:$true] %s3262
      %3268 = dma.vmem_to_hbm [thread:$0]  %s3261, 1536, %s3263, [#allocation6], 128, 128, 8
    $region160: #{tpu_custom_call.1} parent=1 // pred_fallthru
      _
    // Predicated region
    $region161: #{tpu_custom_call.1} parent=1 // pred_check
      _
    $region162: #{tpu_custom_call.1} parent=1 // pred_check_branch
      %3270 = sbr.rel (0) target = $region164
    $region163: #{tpu_custom_call.1} parent=1 // pred_region
      %3272 = vsyncadd [#allocation26], 0
      %s3273 = sshll.u32 [#allocation25], 4
      %s3274 = int_to_ptr.vmem [resolvable:$true] %s3273
      %s3275 = sshll.u32 %s53, 4
      %s3276 = int_to_ptr.hbm [resolvable:$true] %s3275
      %3281 = dma.vmem_to_hbm [thread:$0]  %s3274, 1536, %s3276, [#allocation26], 128, 128, 8
    $region164: #{tpu_custom_call.1} parent=1 // pred_fallthru
      _
    // Predicated region
    $region165: #{tpu_custom_call.1} parent=1 // pred_check
      _
    $region166: #{tpu_custom_call.1} parent=1 // pred_check_branch
      %3283 = sbr.rel (0) target = $region168
    $region167: #{tpu_custom_call.1} parent=1 // pred_region
      %3285 = vsyncadd [#allocation26], 0
      %s3286 = sshll.u32 [#allocation27], 4
      %s3287 = int_to_ptr.vmem [resolvable:$true] %s3286
      %s3288 = sshll.u32 %s55, 4
      %s3289 = int_to_ptr.hbm [resolvable:$true] %s3288
      %3294 = dma.vmem_to_hbm [thread:$0]  %s3287, 1536, %s3289, [#allocation26], 128, 128, 8
    $region168: #{tpu_custom_call.1} parent=1 // pred_fallthru
      _
    // Predicated region
    $region169: #{tpu_custom_call.1} parent=1 // pred_check
      _
    $region170: #{tpu_custom_call.1} parent=1 // pred_check_branch
      %3296 = sbr.rel (0) target = $region172
    $region171: #{tpu_custom_call.1} parent=1 // pred_region
      %3298 = vsyncadd [#allocation29], 0
      %s3299 = sshll.u32 [#allocation28], 4
      %s3300 = int_to_ptr.vmem [resolvable:$true] %s3299
      %s3301 = sshll.u32 %s57, 4
      %s3302 = int_to_ptr.hbm [resolvable:$true] %s3301
      %3307 = dma.vmem_to_hbm [thread:$0]  %s3300, 1536, %s3302, [#allocation29], 128, 128, 8
    $region172: #{tpu_custom_call.1} parent=1 // pred_fallthru
      _
    // Predicated region
    $region173: #{tpu_custom_call.1} parent=1 // pred_check
      _
    $region174: #{tpu_custom_call.1} parent=1 // pred_check_branch
      %3309 = sbr.rel (0) target = $region176
    $region175: #{tpu_custom_call.1} parent=1 // pred_region
      %3311 = vsyncadd [#allocation29], 0
      %s3312 = sshll.u32 [#allocation30], 4
      %s3313 = int_to_ptr.vmem [resolvable:$true] %s3312
      %s3314 = sshll.u32 %s59, 4
      %s3315 = int_to_ptr.hbm [resolvable:$true] %s3314
      %3320 = dma.vmem_to_hbm [thread:$0]  %s3313, 1536, %s3315, [#allocation29], 128, 128, 8
    $region176: #{tpu_custom_call.1} parent=1 // pred_fallthru
      _
    // Predicated region
    $region177: #{tpu_custom_call.1} parent=1 // pred_check
      _
    $region178: #{tpu_custom_call.1} parent=1 // pred_check_branch
      %3322 = sbr.rel (0) target = $region180
    $region179: #{tpu_custom_call.1} parent=1 // pred_region
      %3324 = dma.done [#allocation6], 1536
    $region180: #{tpu_custom_call.1} parent=1 // pred_fallthru
      _
    // Predicated region
    $region181: #{tpu_custom_call.1} parent=1 // pred_check
      _
    $region182: #{tpu_custom_call.1} parent=1 // pred_check_branch
      %3326 = sbr.rel (0) target = $region184
    $region183: #{tpu_custom_call.1} parent=1 // pred_region
      %3328 = dma.done [#allocation26], 1536
    $region184: #{tpu_custom_call.1} parent=1 // pred_fallthru
      _
    // Predicated region
    $region185: #{tpu_custom_call.1} parent=1 // pred_check
      _
    $region186: #{tpu_custom_call.1} parent=1 // pred_check_branch
      %3330 = sbr.rel (0) target = $region188
    $region187: #{tpu_custom_call.1} parent=1 // pred_region
      %3332 = dma.done [#allocation26], 1536
    $region188: #{tpu_custom_call.1} parent=1 // pred_fallthru
      _
    // Predicated region
    $region189: #{tpu_custom_call.1} parent=1 // pred_check
      _
    $region190: #{tpu_custom_call.1} parent=1 // pred_check_branch
      %3334 = sbr.rel (0) target = $region192
    $region191: #{tpu_custom_call.1} parent=1 // pred_region
      %3336 = dma.done [#allocation29], 1536
    $region192: #{tpu_custom_call.1} parent=1 // pred_fallthru
      _
    // Predicated region
    $region193: #{tpu_custom_call.1} parent=1 // pred_check
      _
    $region194: #{tpu_custom_call.1} parent=1 // pred_check_branch
      %3338 = sbr.rel (0) target = $region196
    $region195: #{tpu_custom_call.1} parent=1 // pred_region
      %3340 = dma.done [#allocation29], 1536
    $region196: #{tpu_custom_call.1} parent=1 // pred_fallthru
      _
    %3341 = vsyncpa [#allocation5], 1
    %3342 = vsyncpa [#allocation8], 1
    %3343 = vsyncpa [#allocation11], 1
    %3344 = vsyncpa [#allocation14], 1
    %3345 = vsyncpa [#allocation17], 1
    %3346 = vsyncpa [#allocation20], 1
    %3347 = vsyncpa [#allocation23], 1
    %3348 = vsyncpa [#allocation6], 1
    %3349 = vsyncpa [#allocation26], 1
    %3350 = vsyncpa [#allocation29], 1

</llo_original>
